<compile_context>
chip_gen: v6e
topology: v6e:2x2x1
jax: 0.10.0
libtpu: 0.0.40
codegen_flags: <defaults>
</compile_context>

<pallas_src>
import jax
import jax.numpy as jnp
from jax.experimental import pallas as pl
from jax.experimental.pallas import tpu as pltpu

LEAKY_SLOPE = 0.2
BN_EPS = 1e-5
LANE = 128
MXU_DTYPE = jnp.bfloat16      # MXU operand + activation storage precision.
STATS_ROWS = 8                # per-tile BN-stats block height ((8,128)-aligned)


def _round_up(x, m):
    return (x + m - 1) // m * m


def _vmem_limit_bytes():
    """Generation-aware scoped-VMEM limit: ~half of physical VMEM
    (-> ~64 MiB on v5e/v6e's 128 MiB, ~32 MiB on v7x's 64 MiB per TC)."""
    try:
        cap = int(pltpu.get_tpu_info().vmem_capacity_bytes)
    except Exception:
        cap = 64 * 1024 * 1024
    return max(16 * 1024 * 1024, min(cap // 2, 100 * 1024 * 1024))


VMEM_LIMIT = _vmem_limit_bytes()


# --------------------------- Pallas kernels --------------------------------

def _conv_gemm_lrelu_kernel(p_ref, w_ref, b_ref, o_ref):
    """Fused im2col-GEMM + bias + LeakyReLU(0.2) for one M-tile.

    p_ref: (TM, Kp) bf16 patches, w_ref: (Kp, Cp) bf16 (resident),
    b_ref: (1, Cp) f32, o_ref: (TM, Cp) bf16.
    """
    y = jnp.dot(p_ref[...], w_ref[...], preferred_element_type=jnp.float32)
    y = y + b_ref[...]
    y = jnp.where(y >= 0, y, LEAKY_SLOPE * y)
    o_ref[...] = y.astype(o_ref.dtype)


def _conv_gemm_lrelu_stats_kernel(p_ref, w_ref, b_ref, o_ref, s_ref, q_ref):
    """Same GEMM + bias + LeakyReLU, plus per-tile partial BatchNorm stats.

    s_ref/q_ref: (STATS_ROWS, Cp) f32 per-tile partial sum / sum-of-squares
    (row 0 holds the partial, rows 1..7 are zero).  Each grid step owns its own
    block, so the grid axis stays "parallel" (megacore-shardable on v7x); the
    tiny (num_tiles*8, Cp) partials are reduced in JAX glue.
    """
    y = jnp.dot(p_ref[...], w_ref[...], preferred_element_type=jnp.float32)
    y = y + b_ref[...]
    y = jnp.where(y >= 0, y, LEAKY_SLOPE * y)
    o_ref[...] = y.astype(o_ref.dtype)

    part_s = jnp.sum(y, axis=0, keepdims=True)          # (1, Cp) f32
    part_q = jnp.sum(y * y, axis=0, keepdims=True)
    row = jax.lax.broadcasted_iota(jnp.int32, s_ref.shape, 0)
    s_ref[...] = jnp.where(row == 0, part_s, 0.0)
    q_ref[...] = jnp.where(row == 0, part_q, 0.0)


# --------------------------- kernel wrapper ---------------------------------

def _choose_tile_m(m, kp, cp):
    """M-tile: multiple of 16 (bf16 sublane granule), targeting >=4 grid steps
    so pipelining / megacore sharding engage, capped so the double-buffered
    (patches + output) footprint plus resident weights/bias/stats fits VMEM."""
    bpe = 2                                               # bf16 bytes
    resident = 2 * kp * cp * bpe + cp * 4 + 2 * 2 * STATS_ROWS * cp * 4
    budget = VMEM_LIMIT - resident - (4 << 20)            # compiler headroom
    per_row = 2 * (kp * bpe + cp * bpe)                   # dbl-buffered in+out
    cap = max(16, (max(budget, 1 << 20) // per_row) // 16 * 16)
    target = _round_up(max(1, -(-m // 4)), 16)            # aim for >=4 steps
    return int(min(cap, target, _round_up(m, 16)))


def _conv_gemm(patches, w_p, b_p, cout, *, with_stats=False):
    """patches: (M, Kp) bf16, w_p: (Kp, Cp) bf16, b_p: (1, Cp) f32.
    Returns (act[:M, :cout] bf16, mean, var) — mean/var only when with_stats."""
    M, Kp = patches.shape
    Cp = w_p.shape[1]
    TM = _choose_tile_m(M, Kp, Cp)
    num_tiles = -(-M // TM)
    Mp = num_tiles * TM
    if Mp != M:
        patches = jnp.pad(patches, ((0, Mp - M), (0, 0)))

    in_specs = [
        pl.BlockSpec((TM, Kp), lambda i: (i, 0)),   # patch rows: streamed
        pl.BlockSpec((Kp, Cp), lambda i: (0, 0)),   # weights:    resident
        pl.BlockSpec((1, Cp), lambda i: (0, 0)),    # bias:       resident
    ]
    cparams = pltpu.CompilerParams(
        dimension_semantics=("parallel",), vmem_limit_bytes=VMEM_LIMIT)

    if not with_stats:
        y = pl.pallas_call(
            _conv_gemm_lrelu_kernel,
            out_shape=jax.ShapeDtypeStruct((Mp, Cp), MXU_DTYPE),
            grid=(num_tiles,),
            in_specs=in_specs,
            out_specs=pl.BlockSpec((TM, Cp), lambda i: (i, 0)),
            compiler_params=cparams,
        )(patches, w_p, b_p)
        return y[:M, :cout], None, None

    y, s, q = pl.pallas_call(
        _conv_gemm_lrelu_stats_kernel,
        out_shape=(jax.ShapeDtypeStruct((Mp, Cp), MXU_DTYPE),
                   jax.ShapeDtypeStruct((num_tiles * STATS_ROWS, Cp), jnp.float32),
                   jax.ShapeDtypeStruct((num_tiles * STATS_ROWS, Cp), jnp.float32)),
        grid=(num_tiles,),
        in_specs=in_specs,
        out_specs=(pl.BlockSpec((TM, Cp), lambda i: (i, 0)),
                   pl.BlockSpec((STATS_ROWS, Cp), lambda i: (i, 0)),
                   pl.BlockSpec((STATS_ROWS, Cp), lambda i: (i, 0))),
        compiler_params=cparams,
    )(patches, w_p, b_p)

    s_tot = jnp.sum(s, axis=0)                            # (Cp,) f32
    q_tot = jnp.sum(q, axis=0)
    n_pad = Mp - M
    if n_pad:
        # Padded (all-zero) patch rows contribute exactly lrelu(bias); remove.
        b_act = jnp.where(b_p[0] >= 0, b_p[0], LEAKY_SLOPE * b_p[0])
        s_tot = s_tot - float(n_pad) * b_act
        q_tot = q_tot - float(n_pad) * b_act * b_act
    mean = s_tot / float(M)
    # TODO(synk): E[x^2]-mean^2 can cancel for large means; switch to a
    # shifted/Welford formulation if tolerances get tight.
    var = jnp.maximum(q_tot / float(M) - mean * mean, 0.0)   # biased (train mode)
    return y[:M, :cout], mean[:cout], var[:cout]


# --------------------------- glue (plain JAX) -------------------------------

def _extract_patches(x_nhwc, kh, kw, sh, sw, ph, pw):
    """im2col: NHWC -> (N*Ho*Wo, kh*kw*Cin); kernel positions major, Cin minor."""
    xp = jnp.pad(x_nhwc, ((0, 0), (ph, ph), (pw, pw), (0, 0)))
    N, Hp, Wp, C = xp.shape
    Ho = (Hp - kh) // sh + 1
    Wo = (Wp - kw) // sw + 1
    cols = []
    for i in range(kh):
        for j in range(kw):
            cols.append(xp[:, i:i + sh * Ho:sh, j:j + sw * Wo:sw, :])
    patches = jnp.stack(cols, axis=3)                    # (N, Ho, Wo, kh*kw, C)
    return patches.reshape(N * Ho * Wo, kh * kw * C), (N, Ho, Wo)


def _extract_patches_upsampled(x_nhwc, kh, kw, ph, pw, scale):
    """im2col of nearest-up(x, scale), stride 1, zero 'same' padding, WITHOUT
    materializing the upsampled tensor: source index = floor(out_coord/scale)."""
    N, H, W, C = x_nhwc.shape
    sy_f, sx_f = scale
    Ho, Wo = H * sy_f, W * sx_f
    oy = jnp.arange(Ho)
    ox = jnp.arange(Wo)
    cols = []
    for i in range(kh):
        uy = oy + i - ph                                  # coord in upsampled space
        vy = (uy >= 0) & (uy < Ho)
        sy = jnp.clip(uy, 0, Ho - 1) // sy_f
        rows = jnp.take(x_nhwc, sy, axis=1)               # (N, Ho, W, C)
        for j in range(kw):
            ux = ox + j - pw
            vx = (ux >= 0) & (ux < Wo)
            sx = jnp.clip(ux, 0, Wo - 1) // sx_f
            g = jnp.take(rows, sx, axis=2)                # (N, Ho, Wo, C)
            m = (vy[:, None] & vx[None, :])[None, :, :, None]
            cols.append(jnp.where(m, g, 0.0))
    patches = jnp.stack(cols, axis=3)                     # (N, Ho, Wo, kh*kw, C)
    return patches.reshape(N * Ho * Wo, kh * kw * C), (N, Ho, Wo)


def _pad_k(patches, kp):
    k = patches.shape[1]
    if k == kp:
        return patches
    return jnp.concatenate(
        [patches, jnp.zeros((patches.shape[0], kp - k), patches.dtype)], axis=1)


def conv_block(x_nhwc, layer, stride, padding, *, batch_norm=False,
               in_upsample=None, in_affine=None):
    """ConvBlock.forward: conv -> LeakyReLU -> [bn stats] (dropout unused).

    `in_upsample` folds the PREVIOUS block's nearest x2 upsample into this
    block's im2col.  `in_affine` applies the previous block's BatchNorm
    scale/shift to this block's input (exact; fused with the patch gather)."""
    kh, kw = layer["kh"], layer["kw"]
    cout = layer["cout"]
    if padding == "same":
        ph, pw = kh // 2, kw // 2
    else:
        ph = pw = padding
    if in_affine is not None:
        scale, shift = in_affine
        x_nhwc = (x_nhwc.astype(jnp.float32) * scale + shift).astype(MXU_DTYPE)
    if in_upsample is not None:
        patches, dims = _extract_patches_upsampled(x_nhwc, kh, kw, ph, pw, in_upsample)
    else:
        patches, dims = _extract_patches(x_nhwc, kh, kw, stride[0], stride[1], ph, pw)
    patches = _pad_k(patches, layer["kp"])
    y, mean, var = _conv_gemm(patches, layer["w"], layer["b"], cout,
                              with_stats=batch_norm)
    N, Ho, Wo = dims
    act = y.reshape(N, Ho, Wo, cout)
    if batch_norm:
        inv = jax.lax.rsqrt(var + BN_EPS)
        scale = layer["gamma"] * inv
        shift = layer["beta"] - mean * scale
        return act, scale, shift
    return act


def mask_module_forward(x_nchw, packed):
    # NCHW at the boundary, NHWC (bf16) internally.
    x = jnp.transpose(x_nchw, (0, 2, 3, 1)).astype(MXU_DTYPE)
    # encoder
    x = conv_block(x, packed["enc0"], (2, 2), 2)
    x, bn_scale, bn_shift = conv_block(x, packed["enc1"], (2, 2), 2, batch_norm=True)
    # decoder: enc1's BN affine is folded into dec0's input; dec0/dec1's x2
    # upsamples are consumed by the NEXT block's im2col (never materialized).
    x = conv_block(x, packed["dec0"], (1, 1), "same", in_affine=(bn_scale, bn_shift))
    x = conv_block(x, packed["dec1"], (1, 1), "same", in_upsample=(2, 2))
    # dec2 keeps LeakyReLU (ConvBlock's default activation applies to the last
    # block of the reference MaskModule as well).
    x = conv_block(x, packed["dec2"], (1, 1), "same", in_upsample=(2, 2))
    return jnp.transpose(x, (0, 3, 1, 2)).astype(jnp.float32)


# --------------------------- parameters -------------------------------------

def init_params(key):
    def conv_params(k, cin, cout, kh=5, kw=5):
        k1, k2 = jax.random.split(k)
        fan_in = cin * kh * kw
        bound = 1.0 / (fan_in ** 0.5)                    # PyTorch Conv2d default init
        w = jax.random.uniform(k1, (kh, kw, cin, cout), jnp.float32, -bound, bound)
        b = jax.random.uniform(k2, (cout,), jnp.float32, -bound, bound)
        return {"w": w, "b": b}

    keys = jax.random.split(key, 5)
    params = {
        "enc0": conv_params(keys[0], 1, 32),
        "enc1": conv_params(keys[1], 32, 48),
        "dec0": conv_params(keys[2], 48, 48),
        "dec1": conv_params(keys[3], 48, 32),
        "dec2": conv_params(keys[4], 32, 1),
    }
    params["enc1"]["gamma"] = jnp.ones((48,), jnp.float32)   # BatchNorm2d(48) default
    params["enc1"]["beta"] = jnp.zeros((48,), jnp.float32)
    return params


def prepare_params(params):
    """One-time weight packing (outside the jitted forward): reshape to GEMM
    layout, cast to bf16, pad K to 16-granule and Cout to 128 (lane-dense)."""
    packed = {}
    for name, p in params.items():
        w = p["w"]                                      # (KH, KW, Cin, Cout) f32
        kh, kw, cin, cout = w.shape
        k = kh * kw * cin
        kp = _round_up(k, 16)
        cp = _round_up(cout, LANE)
        w_mat = w.reshape(k, cout).astype(MXU_DTYPE)
        entry = {
            "w": jnp.pad(w_mat, ((0, kp - k), (0, cp - cout))),
            "b": jnp.pad(p["b"].astype(jnp.float32), (0, cp - cout)).reshape(1, cp),
            "kh": kh, "kw": kw, "cin": cin, "cout": cout, "kp": kp,
        }
        if "gamma" in p:
            entry["gamma"] = p["gamma"].astype(jnp.float32)
            entry["beta"] = p["beta"].astype(jnp.float32)
        packed[name] = entry
    return packed


if __name__ == "__main__":
    key = jax.random.PRNGKey(0)
    pkey, xkey = jax.random.split(key)
    packed = prepare_params(init_params(pkey))          # weight pack: once, eager
    # MaskModule expects 1-channel images: (N=2, C=1, H=16, W=16)
    x = jax.random.normal(xkey, (2, 1, 16, 16), jnp.float32)
    fwd = jax.jit(lambda inp: mask_module_forward(inp, packed))
    out = jax.block_until_ready(fwd(x))
    assert out.shape == (2, 1, 16, 16), out.shape
    assert bool(jnp.all(jnp.isfinite(out)))
    print("KERNEL_OK")
</pallas_src>

<mosaic_0001>
module attributes {stable_mosaic.version = 11 : i64} {
  func.func @_conv_gemm_lrelu_kernel(%arg0: i32, %arg1: memref<32x32xbf16, #tpu.memory_space<vmem>>, %arg2: memref<32x128xbf16, #tpu.memory_space<vmem>>, %arg3: memref<1x128xf32, #tpu.memory_space<vmem>>, %arg4: memref<32x128xbf16, #tpu.memory_space<vmem>>) attributes {dimension_semantics = [#tpu.dimension_semantics<parallel>], iteration_bounds = array<i64: 4>, scalar_prefetch = 0 : i64, scratch_operands = 0 : i64, tpu.core_type = #tpu.core_type<tc>, window_params = [{transform_indices = @transform_0, window_bounds = array<i64: 32, 32>}, {pipeline_mode = #tpu.pipeline_mode<synchronous>, transform_indices = @transform_1, window_bounds = array<i64: 32, 128>}, {pipeline_mode = #tpu.pipeline_mode<synchronous>, transform_indices = @transform_2, window_bounds = array<i64: 1, 128>}, {transform_indices = @transform_3, window_bounds = array<i64: 32, 128>}]} {
    %c0 = arith.constant 0 : index
    %c0_0 = arith.constant 0 : index
    %0 = vector.load %arg1[%c0, %c0_0] : memref<32x32xbf16, #tpu.memory_space<vmem>>, vector<32x32xbf16>
    %c0_1 = arith.constant 0 : index
    %c0_2 = arith.constant 0 : index
    %1 = vector.load %arg2[%c0_1, %c0_2] : memref<32x128xbf16, #tpu.memory_space<vmem>>, vector<32x128xbf16>
    %cst = arith.constant dense<0.000000e+00> : vector<32x128xf32>
    %2 = tpu.matmul %0, %1, %cst {dimension_numbers = #tpu.dot_dimension_numbers<[1], [0], [0], [1], [0, 0, 1, 1], [], []>} : vector<32x32xbf16>, vector<32x128xbf16>, vector<32x128xf32> -> vector<32x128xf32>
    %c0_3 = arith.constant 0 : index
    %c0_4 = arith.constant 0 : index
    %3 = vector.load %arg3[%c0_3, %c0_4] : memref<1x128xf32, #tpu.memory_space<vmem>>, vector<1x128xf32>
    %4 = vector.broadcast %3 : vector<1x128xf32> to vector<32x128xf32>
    %5 = arith.addf %2, %4 : vector<32x128xf32>
    %cst_5 = arith.constant 0.000000e+00 : f32
    %6 = vector.broadcast %cst_5 : f32 to vector<32x128xf32>
    %7 = arith.cmpf oge, %5, %6 : vector<32x128xf32>
    %cst_6 = arith.constant 2.000000e-01 : f32
    %8 = vector.broadcast %cst_6 : f32 to vector<32x128xf32>
    %9 = arith.mulf %8, %5 : vector<32x128xf32>
    %10 = arith.select %7, %5, %9 : vector<32x128xi1>, vector<32x128xf32>
    %11 = arith.truncf %10 : vector<32x128xf32> to vector<32x128xbf16>
    %c0_7 = arith.constant 0 : index
    %c0_8 = arith.constant 0 : index
    %12 = vector.load %arg4[%c0_7, %c0_8] : memref<32x128xbf16, #tpu.memory_space<vmem>>, vector<32x128xbf16>
    tpu.vector_store %arg4[%c0_7, %c0_8], %11 {strides = array<i32>} : memref<32x128xbf16, #tpu.memory_space<vmem>>, vector<32x128xbf16>,
    return
  }
  func.func @transform_0(%arg0: i32) -> (i32, i32) {
    %c0_i32 = arith.constant 0 : i32
    %c0_i32_0 = arith.constant 0 : i32
    return %arg0, %c0_i32 : i32, i32
  }
  func.func @transform_1(%arg0: i32) -> (i32, i32) {
    %c0_i32 = arith.constant 0 : i32
    %c0_i32_0 = arith.constant 0 : i32
    %c0_i32_1 = arith.constant 0 : i32
    return %c0_i32, %c0_i32_0 : i32, i32
  }
  func.func @transform_2(%arg0: i32) -> (i32, i32) {
    %c0_i32 = arith.constant 0 : i32
    %c0_i32_0 = arith.constant 0 : i32
    %c0_i32_1 = arith.constant 0 : i32
    return %c0_i32, %c0_i32_0 : i32, i32
  }
  func.func @transform_3(%arg0: i32) -> (i32, i32) {
    %c0_i32 = arith.constant 0 : i32
    %c0_i32_0 = arith.constant 0 : i32
    return %arg0, %c0_i32 : i32, i32
  }
}

module attributes {stable_mosaic.version = 11 : i64} {
  func.func @_conv_gemm_lrelu_stats_kernel(%arg0: i32, %arg1: memref<16x800xbf16, #tpu.memory_space<vmem>>, %arg2: memref<800x128xbf16, #tpu.memory_space<vmem>>, %arg3: memref<1x128xf32, #tpu.memory_space<vmem>>, %arg4: memref<16x128xbf16, #tpu.memory_space<vmem>>, %arg5: memref<8x128xf32, #tpu.memory_space<vmem>>, %arg6: memref<8x128xf32, #tpu.memory_space<vmem>>) attributes {dimension_semantics = [#tpu.dimension_semantics<parallel>], iteration_bounds = array<i64: 2>, scalar_prefetch = 0 : i64, scratch_operands = 0 : i64, tpu.core_type = #tpu.core_type<tc>, window_params = [{transform_indices = @transform_0, window_bounds = array<i64: 16, 800>}, {pipeline_mode = #tpu.pipeline_mode<synchronous>, transform_indices = @transform_1, window_bounds = array<i64: 800, 128>}, {pipeline_mode = #tpu.pipeline_mode<synchronous>, transform_indices = @transform_2, window_bounds = array<i64: 1, 128>}, {transform_indices = @transform_3, window_bounds = array<i64: 16, 128>}, {transform_indices = @transform_4, window_bounds = array<i64: 8, 128>}, {transform_indices = @transform_5, window_bounds = array<i64: 8, 128>}]} {
    %c0 = arith.constant 0 : index
    %c0_0 = arith.constant 0 : index
    %0 = vector.load %arg1[%c0, %c0_0] : memref<16x800xbf16, #tpu.memory_space<vmem>>, vector<16x800xbf16>
    %c0_1 = arith.constant 0 : index
    %c0_2 = arith.constant 0 : index
    %1 = vector.load %arg2[%c0_1, %c0_2] : memref<800x128xbf16, #tpu.memory_space<vmem>>, vector<800x128xbf16>
    %cst = arith.constant dense<0.000000e+00> : vector<16x128xf32>
    %2 = tpu.matmul %0, %1, %cst {dimension_numbers = #tpu.dot_dimension_numbers<[1], [0], [0], [1], [0, 0, 1, 1], [], []>} : vector<16x800xbf16>, vector<800x128xbf16>, vector<16x128xf32> -> vector<16x128xf32>
    %c0_3 = arith.constant 0 : index
    %c0_4 = arith.constant 0 : index
    %3 = vector.load %arg3[%c0_3, %c0_4] : memref<1x128xf32, #tpu.memory_space<vmem>>, vector<1x128xf32>
    %4 = vector.broadcast %3 : vector<1x128xf32> to vector<16x128xf32>
    %5 = arith.addf %2, %4 : vector<16x128xf32>
    %cst_5 = arith.constant 0.000000e+00 : f32
    %6 = vector.broadcast %cst_5 : f32 to vector<16x128xf32>
    %7 = arith.cmpf oge, %5, %6 : vector<16x128xf32>
    %cst_6 = arith.constant 2.000000e-01 : f32
    %8 = vector.broadcast %cst_6 : f32 to vector<16x128xf32>
    %9 = arith.mulf %8, %5 : vector<16x128xf32>
    %10 = arith.select %7, %5, %9 : vector<16x128xi1>, vector<16x128xf32>
    %11 = arith.truncf %10 : vector<16x128xf32> to vector<16x128xbf16>
    %c0_7 = arith.constant 0 : index
    %c0_8 = arith.constant 0 : index
    %12 = vector.load %arg4[%c0_7, %c0_8] : memref<16x128xbf16, #tpu.memory_space<vmem>>, vector<16x128xbf16>
    tpu.vector_store %arg4[%c0_7, %c0_8], %11 {strides = array<i32>} : memref<16x128xbf16, #tpu.memory_space<vmem>>, vector<16x128xbf16>,
    %cst_9 = arith.constant dense<0.000000e+00> : vector<128xf32>
    %13 = vector.multi_reduction <add>, %10, %cst_9 [0] : vector<16x128xf32> to vector<128xf32>
    %14 = vector.shape_cast %13 : vector<128xf32> to vector<1x128xf32>
    %15 = arith.mulf %10, %10 : vector<16x128xf32>
    %cst_10 = arith.constant dense<0.000000e+00> : vector<128xf32>
    %16 = vector.multi_reduction <add>, %15, %cst_10 [0] : vector<16x128xf32> to vector<128xf32>
    %17 = vector.shape_cast %16 : vector<128xf32> to vector<1x128xf32>
    %18 = tpu.iota {dimensions = array<i32: 0>} : vector<8x128xi32>
    %c0_i32 = arith.constant 0 : i32
    %19 = vector.broadcast %c0_i32 : i32 to vector<8x128xi32>
    %20 = arith.cmpi eq, %18, %19 : vector<8x128xi32>
    %cst_11 = arith.constant 0.000000e+00 : f32
    %21 = vector.shape_cast %14 : vector<1x128xf32> to vector<1x128xf32>
    %22 = vector.broadcast %21 : vector<1x128xf32> to vector<8x128xf32>
    %23 = vector.broadcast %cst_11 : f32 to vector<8x128xf32>
    %24 = arith.select %20, %22, %23 : vector<8x128xi1>, vector<8x128xf32>
    %c0_12 = arith.constant 0 : index
    %c0_13 = arith.constant 0 : index
    %25 = vector.load %arg5[%c0_12, %c0_13] : memref<8x128xf32, #tpu.memory_space<vmem>>, vector<8x128xf32>
    tpu.vector_store %arg5[%c0_12, %c0_13], %24 {strides = array<i32>} : memref<8x128xf32, #tpu.memory_space<vmem>>, vector<8x128xf32>,
    %c0_i32_14 = arith.constant 0 : i32
    %26 = vector.broadcast %c0_i32_14 : i32 to vector<8x128xi32>
    %27 = arith.cmpi eq, %18, %26 : vector<8x128xi32>
    %cst_15 = arith.constant 0.000000e+00 : f32
    %28 = vector.shape_cast %17 : vector<1x128xf32> to vector<1x128xf32>
    %29 = vector.broadcast %28 : vector<1x128xf32> to vector<8x128xf32>
    %30 = vector.broadcast %cst_15 : f32 to vector<8x128xf32>
    %31 = arith.select %27, %29, %30 : vector<8x128xi1>, vector<8x128xf32>
    %c0_16 = arith.constant 0 : index
    %c0_17 = arith.constant 0 : index
    %32 = vector.load %arg6[%c0_16, %c0_17] : memref<8x128xf32, #tpu.memory_space<vmem>>, vector<8x128xf32>
    tpu.vector_store %arg6[%c0_16, %c0_17], %31 {strides = array<i32>} : memref<8x128xf32, #tpu.memory_space<vmem>>, vector<8x128xf32>,
    return
  }
  func.func @transform_0(%arg0: i32) -> (i32, i32) {
    %c0_i32 = arith.constant 0 : i32
    %c0_i32_0 = arith.constant 0 : i32
    return %arg0, %c0_i32 : i32, i32
  }
  func.func @transform_1(%arg0: i32) -> (i32, i32) {
    %c0_i32 = arith.constant 0 : i32
    %c0_i32_0 = arith.constant 0 : i32
    %c0_i32_1 = arith.constant 0 : i32
    return %c0_i32, %c0_i32_0 : i32, i32
  }
  func.func @transform_2(%arg0: i32) -> (i32, i32) {
    %c0_i32 = arith.constant 0 : i32
    %c0_i32_0 = arith.constant 0 : i32
    %c0_i32_1 = arith.constant 0 : i32
    return %c0_i32, %c0_i32_0 : i32, i32
  }
  func.func @transform_3(%arg0: i32) -> (i32, i32) {
    %c0_i32 = arith.constant 0 : i32
    %c0_i32_0 = arith.constant 0 : i32
    return %arg0, %c0_i32 : i32, i32
  }
  func.func @transform_4(%arg0: i32) -> (i32, i32) {
    %c0_i32 = arith.constant 0 : i32
    %c0_i32_0 = arith.constant 0 : i32
    return %arg0, %c0_i32 : i32, i32
  }
  func.func @transform_5(%arg0: i32) -> (i32, i32) {
    %c0_i32 = arith.constant 0 : i32
    %c0_i32_0 = arith.constant 0 : i32
    return %arg0, %c0_i32 : i32, i32
  }
}

module attributes {stable_mosaic.version = 11 : i64} {
  func.func @_conv_gemm_lrelu_kernel(%arg0: i32, %arg1: memref<16x1200xbf16, #tpu.memory_space<vmem>>, %arg2: memref<1200x128xbf16, #tpu.memory_space<vmem>>, %arg3: memref<1x128xf32, #tpu.memory_space<vmem>>, %arg4: memref<16x128xbf16, #tpu.memory_space<vmem>>) attributes {dimension_semantics = [#tpu.dimension_semantics<parallel>], iteration_bounds = array<i64: 2>, scalar_prefetch = 0 : i64, scratch_operands = 0 : i64, tpu.core_type = #tpu.core_type<tc>, window_params = [{transform_indices = @transform_0, window_bounds = array<i64: 16, 1200>}, {pipeline_mode = #tpu.pipeline_mode<synchronous>, transform_indices = @transform_1, window_bounds = array<i64: 1200, 128>}, {pipeline_mode = #tpu.pipeline_mode<synchronous>, transform_indices = @transform_2, window_bounds = array<i64: 1, 128>}, {transform_indices = @transform_3, window_bounds = array<i64: 16, 128>}]} {
    %c0 = arith.constant 0 : index
    %c0_0 = arith.constant 0 : index
    %0 = vector.load %arg1[%c0, %c0_0] : memref<16x1200xbf16, #tpu.memory_space<vmem>>, vector<16x1200xbf16>
    %c0_1 = arith.constant 0 : index
    %c0_2 = arith.constant 0 : index
    %1 = vector.load %arg2[%c0_1, %c0_2] : memref<1200x128xbf16, #tpu.memory_space<vmem>>, vector<1200x128xbf16>
    %cst = arith.constant dense<0.000000e+00> : vector<16x128xf32>
    %2 = tpu.matmul %0, %1, %cst {dimension_numbers = #tpu.dot_dimension_numbers<[1], [0], [0], [1], [0, 0, 1, 1], [], []>} : vector<16x1200xbf16>, vector<1200x128xbf16>, vector<16x128xf32> -> vector<16x128xf32>
    %c0_3 = arith.constant 0 : index
    %c0_4 = arith.constant 0 : index
    %3 = vector.load %arg3[%c0_3, %c0_4] : memref<1x128xf32, #tpu.memory_space<vmem>>, vector<1x128xf32>
    %4 = vector.broadcast %3 : vector<1x128xf32> to vector<16x128xf32>
    %5 = arith.addf %2, %4 : vector<16x128xf32>
    %cst_5 = arith.constant 0.000000e+00 : f32
    %6 = vector.broadcast %cst_5 : f32 to vector<16x128xf32>
    %7 = arith.cmpf oge, %5, %6 : vector<16x128xf32>
    %cst_6 = arith.constant 2.000000e-01 : f32
    %8 = vector.broadcast %cst_6 : f32 to vector<16x128xf32>
    %9 = arith.mulf %8, %5 : vector<16x128xf32>
    %10 = arith.select %7, %5, %9 : vector<16x128xi1>, vector<16x128xf32>
    %11 = arith.truncf %10 : vector<16x128xf32> to vector<16x128xbf16>
    %c0_7 = arith.constant 0 : index
    %c0_8 = arith.constant 0 : index
    %12 = vector.load %arg4[%c0_7, %c0_8] : memref<16x128xbf16, #tpu.memory_space<vmem>>, vector<16x128xbf16>
    tpu.vector_store %arg4[%c0_7, %c0_8], %11 {strides = array<i32>} : memref<16x128xbf16, #tpu.memory_space<vmem>>, vector<16x128xbf16>,
    return
  }
  func.func @transform_0(%arg0: i32) -> (i32, i32) {
    %c0_i32 = arith.constant 0 : i32
    %c0_i32_0 = arith.constant 0 : i32
    return %arg0, %c0_i32 : i32, i32
  }
  func.func @transform_1(%arg0: i32) -> (i32, i32) {
    %c0_i32 = arith.constant 0 : i32
    %c0_i32_0 = arith.constant 0 : i32
    %c0_i32_1 = arith.constant 0 : i32
    return %c0_i32, %c0_i32_0 : i32, i32
  }
  func.func @transform_2(%arg0: i32) -> (i32, i32) {
    %c0_i32 = arith.constant 0 : i32
    %c0_i32_0 = arith.constant 0 : i32
    %c0_i32_1 = arith.constant 0 : i32
    return %c0_i32, %c0_i32_0 : i32, i32
  }
  func.func @transform_3(%arg0: i32) -> (i32, i32) {
    %c0_i32 = arith.constant 0 : i32
    %c0_i32_0 = arith.constant 0 : i32
    return %arg0, %c0_i32 : i32, i32
  }
}

module attributes {stable_mosaic.version = 11 : i64} {
  func.func @_conv_gemm_lrelu_kernel(%arg0: i32, %arg1: memref<32x1200xbf16, #tpu.memory_space<vmem>>, %arg2: memref<1200x128xbf16, #tpu.memory_space<vmem>>, %arg3: memref<1x128xf32, #tpu.memory_space<vmem>>, %arg4: memref<32x128xbf16, #tpu.memory_space<vmem>>) attributes {dimension_semantics = [#tpu.dimension_semantics<parallel>], iteration_bounds = array<i64: 4>, scalar_prefetch = 0 : i64, scratch_operands = 0 : i64, tpu.core_type = #tpu.core_type<tc>, window_params = [{transform_indices = @transform_0, window_bounds = array<i64: 32, 1200>}, {pipeline_mode = #tpu.pipeline_mode<synchronous>, transform_indices = @transform_1, window_bounds = array<i64: 1200, 128>}, {pipeline_mode = #tpu.pipeline_mode<synchronous>, transform_indices = @transform_2, window_bounds = array<i64: 1, 128>}, {transform_indices = @transform_3, window_bounds = array<i64: 32, 128>}]} {
    %c0 = arith.constant 0 : index
    %c0_0 = arith.constant 0 : index
    %0 = vector.load %arg1[%c0, %c0_0] : memref<32x1200xbf16, #tpu.memory_space<vmem>>, vector<32x1200xbf16>
    %c0_1 = arith.constant 0 : index
    %c0_2 = arith.constant 0 : index
    %1 = vector.load %arg2[%c0_1, %c0_2] : memref<1200x128xbf16, #tpu.memory_space<vmem>>, vector<1200x128xbf16>
    %cst = arith.constant dense<0.000000e+00> : vector<32x128xf32>
    %2 = tpu.matmul %0, %1, %cst {dimension_numbers = #tpu.dot_dimension_numbers<[1], [0], [0], [1], [0, 0, 1, 1], [], []>} : vector<32x1200xbf16>, vector<1200x128xbf16>, vector<32x128xf32> -> vector<32x128xf32>
    %c0_3 = arith.constant 0 : index
    %c0_4 = arith.constant 0 : index
    %3 = vector.load %arg3[%c0_3, %c0_4] : memref<1x128xf32, #tpu.memory_space<vmem>>, vector<1x128xf32>
    %4 = vector.broadcast %3 : vector<1x128xf32> to vector<32x128xf32>
    %5 = arith.addf %2, %4 : vector<32x128xf32>
    %cst_5 = arith.constant 0.000000e+00 : f32
    %6 = vector.broadcast %cst_5 : f32 to vector<32x128xf32>
    %7 = arith.cmpf oge, %5, %6 : vector<32x128xf32>
    %cst_6 = arith.constant 2.000000e-01 : f32
    %8 = vector.broadcast %cst_6 : f32 to vector<32x128xf32>
    %9 = arith.mulf %8, %5 : vector<32x128xf32>
    %10 = arith.select %7, %5, %9 : vector<32x128xi1>, vector<32x128xf32>
    %11 = arith.truncf %10 : vector<32x128xf32> to vector<32x128xbf16>
    %c0_7 = arith.constant 0 : index
    %c0_8 = arith.constant 0 : index
    %12 = vector.load %arg4[%c0_7, %c0_8] : memref<32x128xbf16, #tpu.memory_space<vmem>>, vector<32x128xbf16>
    tpu.vector_store %arg4[%c0_7, %c0_8], %11 {strides = array<i32>} : memref<32x128xbf16, #tpu.memory_space<vmem>>, vector<32x128xbf16>,
    return
  }
  func.func @transform_0(%arg0: i32) -> (i32, i32) {
    %c0_i32 = arith.constant 0 : i32
    %c0_i32_0 = arith.constant 0 : i32
    return %arg0, %c0_i32 : i32, i32
  }
  func.func @transform_1(%arg0: i32) -> (i32, i32) {
    %c0_i32 = arith.constant 0 : i32
    %c0_i32_0 = arith.constant 0 : i32
    %c0_i32_1 = arith.constant 0 : i32
    return %c0_i32, %c0_i32_0 : i32, i32
  }
  func.func @transform_2(%arg0: i32) -> (i32, i32) {
    %c0_i32 = arith.constant 0 : i32
    %c0_i32_0 = arith.constant 0 : i32
    %c0_i32_1 = arith.constant 0 : i32
    return %c0_i32, %c0_i32_0 : i32, i32
  }
  func.func @transform_3(%arg0: i32) -> (i32, i32) {
    %c0_i32 = arith.constant 0 : i32
    %c0_i32_0 = arith.constant 0 : i32
    return %arg0, %c0_i32 : i32, i32
  }
}

module attributes {stable_mosaic.version = 11 : i64} {
  func.func @_conv_gemm_lrelu_kernel(%arg0: i32, %arg1: memref<128x800xbf16, #tpu.memory_space<vmem>>, %arg2: memref<800x128xbf16, #tpu.memory_space<vmem>>, %arg3: memref<1x128xf32, #tpu.memory_space<vmem>>, %arg4: memref<128x128xbf16, #tpu.memory_space<vmem>>) attributes {dimension_semantics = [#tpu.dimension_semantics<parallel>], iteration_bounds = array<i64: 4>, scalar_prefetch = 0 : i64, scratch_operands = 0 : i64, tpu.core_type = #tpu.core_type<tc>, window_params = [{transform_indices = @transform_0, window_bounds = array<i64: 128, 800>}, {pipeline_mode = #tpu.pipeline_mode<synchronous>, transform_indices = @transform_1, window_bounds = array<i64: 800, 128>}, {pipeline_mode = #tpu.pipeline_mode<synchronous>, transform_indices = @transform_2, window_bounds = array<i64: 1, 128>}, {transform_indices = @transform_3, window_bounds = array<i64: 128, 128>}]} {
    %c0 = arith.constant 0 : index
    %c0_0 = arith.constant 0 : index
    %0 = vector.load %arg1[%c0, %c0_0] : memref<128x800xbf16, #tpu.memory_space<vmem>>, vector<128x800xbf16>
    %c0_1 = arith.constant 0 : index
    %c0_2 = arith.constant 0 : index
    %1 = vector.load %arg2[%c0_1, %c0_2] : memref<800x128xbf16, #tpu.memory_space<vmem>>, vector<800x128xbf16>
    %cst = arith.constant dense<0.000000e+00> : vector<128x128xf32>
    %2 = tpu.matmul %0, %1, %cst {dimension_numbers = #tpu.dot_dimension_numbers<[1], [0], [0], [1], [0, 0, 1, 1], [], []>} : vector<128x800xbf16>, vector<800x128xbf16>, vector<128x128xf32> -> vector<128x128xf32>
    %c0_3 = arith.constant 0 : index
    %c0_4 = arith.constant 0 : index
    %3 = vector.load %arg3[%c0_3, %c0_4] : memref<1x128xf32, #tpu.memory_space<vmem>>, vector<1x128xf32>
    %4 = vector.broadcast %3 : vector<1x128xf32> to vector<128x128xf32>
    %5 = arith.addf %2, %4 : vector<128x128xf32>
    %cst_5 = arith.constant 0.000000e+00 : f32
    %6 = vector.broadcast %cst_5 : f32 to vector<128x128xf32>
    %7 = arith.cmpf oge, %5, %6 : vector<128x128xf32>
    %cst_6 = arith.constant 2.000000e-01 : f32
    %8 = vector.broadcast %cst_6 : f32 to vector<128x128xf32>
    %9 = arith.mulf %8, %5 : vector<128x128xf32>
    %10 = arith.select %7, %5, %9 : vector<128x128xi1>, vector<128x128xf32>
    %11 = arith.truncf %10 : vector<128x128xf32> to vector<128x128xbf16>
    %c0_7 = arith.constant 0 : index
    %c0_8 = arith.constant 0 : index
    %12 = vector.load %arg4[%c0_7, %c0_8] : memref<128x128xbf16, #tpu.memory_space<vmem>>, vector<128x128xbf16>
    tpu.vector_store %arg4[%c0_7, %c0_8], %11 {strides = array<i32>} : memref<128x128xbf16, #tpu.memory_space<vmem>>, vector<128x128xbf16>,
    return
  }
  func.func @transform_0(%arg0: i32) -> (i32, i32) {
    %c0_i32 = arith.constant 0 : i32
    %c0_i32_0 = arith.constant 0 : i32
    return %arg0, %c0_i32 : i32, i32
  }
  func.func @transform_1(%arg0: i32) -> (i32, i32) {
    %c0_i32 = arith.constant 0 : i32
    %c0_i32_0 = arith.constant 0 : i32
    %c0_i32_1 = arith.constant 0 : i32
    return %c0_i32, %c0_i32_0 : i32, i32
  }
  func.func @transform_2(%arg0: i32) -> (i32, i32) {
    %c0_i32 = arith.constant 0 : i32
    %c0_i32_0 = arith.constant 0 : i32
    %c0_i32_1 = arith.constant 0 : i32
    return %c0_i32, %c0_i32_0 : i32, i32
  }
  func.func @transform_3(%arg0: i32) -> (i32, i32) {
    %c0_i32 = arith.constant 0 : i32
    %c0_i32_0 = arith.constant 0 : i32
    return %arg0, %c0_i32 : i32, i32
  }
}

</mosaic_0001>

<llo_original>
// kernel: _lambda_.5
$region0: #{_lambda_.5}
  #allocation0 [shape = 'u32[]', space=smem, size = 0x4, offset = 0x4, fixed_abs, tag = 'smem constant byte address 0x4 - core index']
  #allocation1 [shape = 'u32[144,128]{1,0:T(1,128)}', space=vmem, size = 0x12000, scoped, tag = 'internal scratch']
  %s0 = inlined_call_operand.vmem [shape: bf16[128,32], index: 0, kind: input, shape index: {}]
  %s1 = inlined_call_operand.hbm [shape: bf16[32,128], index: 1, kind: input, shape index: {}]
  %s2 = inlined_call_operand.hbm [shape: f32[1,128], index: 2, kind: input, shape index: {}]
  %s3 = inlined_call_operand.vmem [shape: bf16[128,128], index: 3, kind: output, shape index: {}]
  %s4 = sld [smem:[#allocation0]]
  $region53: #{_lambda_.5} parent=0
    _
  %s6 = ssub.s32 1, %s4
  %s7 = scalar_select 0, %s6, %s4
  $region1: #{_lambda_.5} parent=0
    #allocation2 [shape = 'u8[8192]{0}', space=vmem, size = 0x2000, scoped, tag = 'input window, operand 1, single buffered']
    #allocation3 [shape = 's32[2]{0}', space=sflag, size = 0x8, scoped, tag = 'scoped memory for _lambda_.5']
    #allocation4 [shape = 'u8[512]{0}', space=vmem, size = 0x400, scoped, tag = 'input window, operand 2, single buffered']
    #allocation5 [shape = 's32[1]{0}', space=sflag, size = 0x4, scoped, tag = 'scoped memory for _lambda_.5']
    %8 = vsyncpa [#allocation3], 0
    %9 = vsyncpa [#allocation5], 0
    loop: start=0, step=1, limit=6
    $region2: #{_lambda_.5} parent=1 // loop_pre_header
      _
    $region3: #{_lambda_.5} parent=1 // loop_header
      %s11 = sphi 0, %s15
      %p12 = scmp.ge.s32.totalorder %s11, 6
      %s21 = sphi 0, %s23
      %s24 = sphi 0, %s21
      %s25 = sphi 0, %s24
      %s41 = sphi 0, %s25
      %s45 = sphi 0, %s45
      %s47 = sphi 0, %s45
      %s48 = sphi 0, %s47
      %s62 = sphi 0, %s48
      %s66 = sphi 0, %s66
      %s68 = sphi 0, %s66
      %s69 = sphi 0, %s68
      %s83 = sphi 0, %s69
      %s89 = sphi 0, %s91
      %s92 = sphi 0, %s89
      %s93 = sphi 0, %s92
      %s109 = sphi 0, %s93
    $region4: #{_lambda_.5} parent=1 // loop_header_branch
      %14 = sbr.rel (%p12) target = $region8
    $region5: #{_lambda_.5} parent=1 // loop_body
      %s16 = ssub.s32 %s11, 1
      %s17 = ssub.s32 %s11, 2
      %s18 = sadd.s32 %s11, 1
      %s19 = ssub.s32 %s11, %s18
      %p20 = scmp.eq.s32.totalorder %s19, 0
      %s22 = sadd.s32 %s21, 1
      %s23 = scalar_select %p20, %s21, %s22
      %p26 = pneg %p20
      %p27 = scmp.eq.s32.totalorder %s11, 3
      %p28 = por %p26, %p27
      %p29 = scmp.ne.s32.totalorder %s21, %s24
      %p30 = scmp.eq.s32.totalorder %s11, 0
      %p31 = por %p29, %p30
      %p32 = scmp.ne.s32.totalorder %s21, %s24
      %p33 = scmp.eq.s32.totalorder %s16, 3
      %p34 = por %p32, %p33
      %p35 = scmp.ne.s32.totalorder %s24, %s25
      %p36 = scmp.eq.s32.totalorder %s16, 0
      %p37 = por %p35, %p36
      %p38 = scmp.ne.s32.totalorder %s24, %s25
      %p39 = scmp.eq.s32.totalorder %s17, 3
      %p40 = por %p38, %p39
      %p42 = scmp.ne.s32.totalorder %s25, %s41
      %p43 = scmp.eq.s32.totalorder %s17, 0
      %p44 = por %p42, %p43
      %s46 = sadd.s32 %s45, 1
      %p49 = scmp.eq.s32.totalorder %s11, 3
      %p50 = scmp.ne.s32.totalorder %s45, %s47
      %p51 = scmp.eq.s32.totalorder %s11, 0
      %p52 = por %p50, %p51
      %p53 = scmp.ne.s32.totalorder %s45, %s47
      %p54 = scmp.eq.s32.totalorder %s16, 3
      %p55 = por %p53, %p54
      %p56 = scmp.ne.s32.totalorder %s47, %s48
      %p57 = scmp.eq.s32.totalorder %s16, 0
      %p58 = por %p56, %p57
      %p59 = scmp.ne.s32.totalorder %s47, %s48
      %p60 = scmp.eq.s32.totalorder %s17, 3
      %p61 = por %p59, %p60
      %p63 = scmp.ne.s32.totalorder %s48, %s62
      %p64 = scmp.eq.s32.totalorder %s17, 0
      %p65 = por %p63, %p64
      %s67 = sadd.s32 %s66, 1
      %p70 = scmp.eq.s32.totalorder %s11, 3
      %p71 = scmp.ne.s32.totalorder %s66, %s68
      %p72 = scmp.eq.s32.totalorder %s11, 0
      %p73 = por %p71, %p72
      %p74 = scmp.ne.s32.totalorder %s66, %s68
      %p75 = scmp.eq.s32.totalorder %s16, 3
      %p76 = por %p74, %p75
      %p77 = scmp.ne.s32.totalorder %s68, %s69
      %p78 = scmp.eq.s32.totalorder %s16, 0
      %p79 = por %p77, %p78
      %p80 = scmp.ne.s32.totalorder %s68, %s69
      %p81 = scmp.eq.s32.totalorder %s17, 3
      %p82 = por %p80, %p81
      %p84 = scmp.ne.s32.totalorder %s69, %s83
      %p85 = scmp.eq.s32.totalorder %s17, 0
      %p86 = por %p84, %p85
      %s87 = ssub.s32 %s11, %s18
      %p88 = scmp.eq.s32.totalorder %s87, 0
      %s90 = sadd.s32 %s89, 1
      %s91 = scalar_select %p88, %s89, %s90
      %p94 = pneg %p88
      %p95 = scmp.eq.s32.totalorder %s11, 3
      %p96 = por %p94, %p95
      %p97 = scmp.ne.s32.totalorder %s89, %s92
      %p98 = scmp.eq.s32.totalorder %s11, 0
      %p99 = por %p97, %p98
      %p100 = scmp.ne.s32.totalorder %s89, %s92
      %p101 = scmp.eq.s32.totalorder %s16, 3
      %p102 = por %p100, %p101
      %p103 = scmp.ne.s32.totalorder %s92, %s93
      %p104 = scmp.eq.s32.totalorder %s16, 0
      %p105 = por %p103, %p104
      %p106 = scmp.ne.s32.totalorder %s92, %s93
      %p107 = scmp.eq.s32.totalorder %s17, 3
      %p108 = por %p106, %p107
      %p110 = scmp.ne.s32.totalorder %s93, %s109
      %p111 = scmp.eq.s32.totalorder %s17, 0
      %p112 = por %p110, %p111
      %p113 = scmp.le.s32.totalorder 1, %s11
      %p114 = scmp.lt.s32.totalorder %s11, 5
      %p115 = pnand %p113, %p114
      %p116 = pneg %p115
      // Predicated region
      $region9: #{_lambda_.5} parent=5 // pred_check
        _
      $region10: #{_lambda_.5} parent=5 // pred_check_branch
        %118 = sbr.rel (%p115) target = $region12
      $region11: #{_lambda_.5} parent=5 // pred_region
        %s119 = ssub.s32 %s11, 1
        // Predicated region
        $region13: #{_lambda_.5} parent=11 // pred_check
          %p120 = pneg %p58
        $region14: #{_lambda_.5} parent=11 // pred_check_branch
          %122 = sbr.rel (%p120) target = $region16
        $region15: #{_lambda_.5} parent=11 // pred_region
          %s124 = ssub.s32 256, 256
          %125 = vsyncadd [#allocation3], %s124
          %s126 = sshll.u32 [#allocation2], 4
          %s127 = int_to_ptr.vmem [resolvable:$true] %s126
          %132 = dma.hbm_to_vmem [thread:$0]  %s1, 256, %s127, [#allocation3], 64, 64, 4
        $region16: #{_lambda_.5} parent=11 // pred_fallthru
          _
        // Predicated region
        $region17: #{_lambda_.5} parent=11 // pred_check
          %p133 = pneg %p79
        $region18: #{_lambda_.5} parent=11 // pred_check_branch
          %135 = sbr.rel (%p133) target = $region20
        $region19: #{_lambda_.5} parent=11 // pred_region
          %s137 = ssub.s32 16, 16
          %138 = vsyncadd [#allocation5], %s137
          %s140 = sshll.u32 [#allocation4], 4
          %s141 = int_to_ptr.vmem [resolvable:$true] %s140
          %143 = dma.hbm_to_vmem [thread:$0]  %s2, 16, %s141, [#allocation5]
        $region20: #{_lambda_.5} parent=11 // pred_fallthru
          _
      $region12: #{_lambda_.5} parent=5 // pred_fallthru
        _
      %p144 = scmp.lt.s32.totalorder %s11, 4
      // Predicated region
      $region21: #{_lambda_.5} parent=5 // pred_check
        %p145 = pneg %p144
      $region22: #{_lambda_.5} parent=5 // pred_check_branch
        %147 = sbr.rel (%p145) target = $region24
      $region23: #{_lambda_.5} parent=5 // pred_region
        // Predicated region
        $region25: #{_lambda_.5} parent=23 // pred_check
          %p148 = pneg %p31
        $region26: #{_lambda_.5} parent=23 // pred_check_branch
          %150 = sbr.rel (%p148) target = $region28
        $region27: #{_lambda_.5} parent=23 // pred_region
          %s151 = smul.u32 4, %s11
          %p152 = scmp.lt.s32.totalorder %s151, 15
          %s153 = scalar_select %p152, %s151, 15
          %s154 = smul.addr %s153, 4
          %s155 = scalar_lea.vmem %s0, %s154
          %s156 = smul.u32 4, %s11
        $region28: #{_lambda_.5} parent=23 // pred_fallthru
          _
      $region24: #{_lambda_.5} parent=5 // pred_fallthru
        _
      %p157 = scmp.le.s32.totalorder 1, %s11
      %p158 = scmp.lt.s32.totalorder %s11, 5
      %p159 = pnand %p157, %p158
      %p160 = pneg %p159
      // Predicated region
      $region29: #{_lambda_.5} parent=5 // pred_check
        _
      $region30: #{_lambda_.5} parent=5 // pred_check_branch
        %162 = sbr.rel (%p159) target = $region32
      $region31: #{_lambda_.5} parent=5 // pred_region
        %s163 = ssub.s32 %s11, 1
        // Predicated region
        $region33: #{_lambda_.5} parent=31 // pred_check
          %p164 = pneg %p58
        $region34: #{_lambda_.5} parent=31 // pred_check_branch
          %166 = sbr.rel (%p164) target = $region36
        $region35: #{_lambda_.5} parent=31 // pred_region
          %167 = dma.done [#allocation3], 256
        $region36: #{_lambda_.5} parent=31 // pred_fallthru
          _
        // Predicated region
        $region37: #{_lambda_.5} parent=31 // pred_check
          %p168 = pneg %p79
        $region38: #{_lambda_.5} parent=31 // pred_check_branch
          %170 = sbr.rel (%p168) target = $region40
        $region39: #{_lambda_.5} parent=31 // pred_region
          %171 = dma.done [#allocation5], 16
        $region40: #{_lambda_.5} parent=31 // pred_fallthru
          _
        %s172 = smul.u32 4, %s16
        %p173 = scmp.lt.s32.totalorder %s172, 15
        %s174 = scalar_select %p173, %s172, 15
        %s175 = smul.addr %s174, 4
        %s176 = scalar_lea.vmem %s0, %s175
        %p177 = pneg %p37
        %p178 = pneg %p34
        %p179 = pneg %p58
        %p180 = pneg %p55
        %p181 = pneg %p79
        %p182 = pneg %p76
        %p183 = pneg %p105
        %p184 = pneg %p102
        %s185 = smul.u32 4, %s16
        %p186 = scmp.lt.s32.totalorder %s185, 15
        %s187 = scalar_select %p186, %s185, 15
        %s188 = smul.addr %s187, 4
        %s189 = scalar_lea.vmem %s3, %s188
        %s190 = smul.u32 4, %s16
        %p191 = scmp.lt.s32.totalorder %s190, 15
        %s192 = scalar_select %p191, %s190, 15
        %s193 = smul.addr %s192, 4
        %s194 = scalar_lea.vmem %s0, %s193
        %s195 = smul.u32 4, %s16
        %s196 = smul.u32 4, %s16
        %p197 = scmp.lt.s32.totalorder %s196, 15
        %s198 = scalar_select %p197, %s196, 15
        %s199 = smul.addr %s198, 4
        %s200 = scalar_lea.vmem %s3, %s199
        %s201 = smul.u32 4, %s16
        %v203 = vld [vmem:[%s194] sm:$0xf]
        %v204 = vld [vmem:[%s194 + $0x4] sm:$0xf]
        %v205 = vld [vmem:[%s194 + $0x8] sm:$0xf]
        %v206 = vld [vmem:[%s194 + $0xc] sm:$0xf]
        %v207 = vld [vmem:[#allocation2] sm:$0xf]
        %v208 = vld [vmem:[#allocation2 + $0x4] sm:$0xf]
        %v209 = vld [vmem:[#allocation2 + $0x8] sm:$0xf]
        %v210 = vld [vmem:[#allocation2 + $0xc] sm:$0xf]
        %v211 = vld [vmem:[#allocation4] sm:$0x1]
        %v213 = vlaneseq
        %v214 = vshrl.u32 %v213, 7
        %v215 = vsub.s32 0, %v214
        %v216 = vrot.slane %v211, %v215
        %v222 = vunpack.c.l.b16 %v203
        %v223 = vunpack.c.l.b16 %v204
        %v224 = vunpack.c.l.b16 %v205
        %v225 = vunpack.c.l.b16 %v206
        %v226 = vpack.c.b16 %v223, %v222
        %v227 = vpack.c.b16 %v225, %v224
        %v232 = vunpack.c.l.b16 %v207
        %v233 = vunpack.c.l.b16 %v208
        %v234 = vunpack.c.l.b16 %v209
        %v235 = vunpack.c.l.b16 %v210
        %v236 = vpack.c.b16 %v233, %v232
        %v237 = vpack.c.b16 %v235, %v234
        %vm240 = vcmask 261120
        %v242 = vsel %vm240, %v226, 0
        %v245 = vsel %vm240, %v227, 0
        %247 = vmatprep.subr.bf16.mxu0 0
        %248 = vmatpush1.bf16.msra.mxu0 0
        %249 = vmatprep.subr.bf16.mxu0 0
        %250 = vmatpush1.bf16.msra.mxu0 0
        %251 = vmatprep.subr.bf16.mxu0 0
        %252 = vmatpush1.bf16.msra.mxu0 0
        %253 = vmatprep.subr.bf16.mxu0 0
        %254 = vmatpush1.bf16.msra.mxu0 0
        %255 = vmatprep.subr.bf16.mxu0 0
        %256 = vmatpush1.bf16.msra.mxu0 0
        %257 = vmatprep.subr.bf16.mxu0 0
        %258 = vmatpush1.bf16.msra.mxu0 0
        %259 = vmatprep.subr.bf16.mxu0 0
        %260 = vmatpush1.bf16.msra.mxu0 %v237
        %261 = vmatprep.subr.bf16.mxu0 0
        %262 = vmatpush1.bf16.msra.mxu0 %v236
        %263 = vmatprep.subr.bf16.mxu0 0
        %264 = vmatpush2.bf16.msra.mxu0 0
        %265 = vmatprep.subr.bf16.mxu0 0
        %266 = vmatpush2.bf16.msra.mxu0 0
        %267 = vmatprep.subr.bf16.mxu0 0
        %268 = vmatpush2.bf16.msra.mxu0 0
        %269 = vmatprep.subr.bf16.mxu0 0
        %270 = vmatpush2.bf16.msra.mxu0 0
        %271 = vmatprep.subr.bf16.mxu0 0
        %272 = vmatpush2.bf16.msra.mxu0 0
        %273 = vmatprep.subr.bf16.mxu0 0
        %274 = vmatpush2.bf16.msra.mxu0 0
        %275 = vmatprep.subr.bf16.mxu0 0
        %276 = vmatpush2.bf16.msra.mxu0 0
        %277 = vmatprep.subr.bf16.mxu0 0
        %278 = vmatpush2.bf16.msra.mxu0 0
        %279 = vmatprep.mubr.bf16.mxu0 0
        %280 = vmatmul.mubr.bf16.gmra.mxu0 %v242
        %v281 = vpop.f32.mrf.mxu0
        %v282 = vadd.f32 %v216, %v281
        %v283 = vpop.f32.mrf.mxu0
        %v284 = vpop.f32.mrf.mxu0
        %v285 = vadd.f32 %v216, %v284
        %v286 = vpop.f32.mrf.mxu0
        %287 = vmatprep.mubr.bf16.mxu0 0
        %288 = vmatmul.mubr.bf16.gmra.mxu0 %v245
        %v289 = vpop.f32.mrf.mxu0
        %v290 = vadd.f32 %v216, %v289
        %v291 = vpop.f32.mrf.mxu0
        %v292 = vpop.f32.mrf.mxu0
        %v293 = vadd.f32 %v216, %v292
        %v294 = vpop.f32.mrf.mxu0
        %295 = vdwg.mxu0
        %vm296 = vcmp.ge.f32.partialorder %v282, 0.0
        %vm297 = vcmp.ge.f32.partialorder %v285, 0.0
        %vm298 = vcmp.ge.f32.partialorder %v290, 0.0
        %vm299 = vcmp.ge.f32.partialorder %v293, 0.0
        %v300 = vmul.f32 %v282, 0.2
        %v301 = vmul.f32 %v285, 0.2
        %v302 = vmul.f32 %v290, 0.2
        %v303 = vmul.f32 %v293, 0.2
        %v304 = vsel %vm296, %v282, %v300
        %v305 = vsel %vm297, %v285, %v301
        %v306 = vsel %vm298, %v290, %v302
        %v307 = vsel %vm299, %v293, %v303
        %v308 = vpack.c.bf16 %v305, %v304
        %v309 = vpack.c.bf16 %v307, %v306
        %v312 = vunpack.c.l.b16 %v308
        %v313 = vunpack.c.h.b16 %v308
        %v314 = vunpack.c.l.b16 %v309
        %v315 = vunpack.c.h.b16 %v309
        %v316 = vpack.c.b16 %v312, %v312
        %v317 = vpack.c.b16 %v313, %v313
        %v318 = vpack.c.b16 %v314, %v314
        %v319 = vpack.c.b16 %v315, %v315
        %324 = vst [vmem:[%s200] sm:$0xf] %v316
        %325 = vst [vmem:[%s200 + $0x4] sm:$0xf] %v317
        %326 = vst [vmem:[%s200 + $0x8] sm:$0xf] %v318
        %327 = vst [vmem:[%s200 + $0xc] sm:$0xf] %v319
        %s328 = smul.u32 4, %s16
        %p329 = scmp.lt.s32.totalorder %s328, 15
        %s330 = scalar_select %p329, %s328, 15
        %s331 = smul.addr %s330, 4
        %s332 = scalar_lea.vmem %s3, %s331
        // Predicated region
        $region41: #{_lambda_.5} parent=31 // pred_check
          %p333 = pneg %p102
        $region42: #{_lambda_.5} parent=31 // pred_check_branch
          %335 = sbr.rel (%p333) target = $region44
        $region43: #{_lambda_.5} parent=31 // pred_region
          %s336 = smul.u32 4, %s16
        $region44: #{_lambda_.5} parent=31 // pred_fallthru
          _
      $region32: #{_lambda_.5} parent=5 // pred_fallthru
        _
      %p337 = scmp.le.s32.totalorder 2, %s11
      // Predicated region
      $region45: #{_lambda_.5} parent=5 // pred_check
        %p338 = pneg %p337
      $region46: #{_lambda_.5} parent=5 // pred_check_branch
        %340 = sbr.rel (%p338) target = $region48
      $region47: #{_lambda_.5} parent=5 // pred_region
        %s341 = ssub.s32 %s11, 2
        // Predicated region
        $region49: #{_lambda_.5} parent=47 // pred_check
          %p342 = pneg %p108
        $region50: #{_lambda_.5} parent=47 // pred_check_branch
          %344 = sbr.rel (%p342) target = $region52
        $region51: #{_lambda_.5} parent=47 // pred_region
          %s345 = smul.u32 4, %s17
          %p346 = scmp.lt.s32.totalorder %s345, 15
          %s347 = scalar_select %p346, %s345, 15
          %s348 = smul.addr %s347, 4
          %s349 = scalar_lea.vmem %s3, %s348
        $region52: #{_lambda_.5} parent=47 // pred_fallthru
          _
      $region48: #{_lambda_.5} parent=5 // pred_fallthru
        _
    $region6: #{_lambda_.5} parent=1 // loop_footer
      %s15 = sadd.s32 1, %s11
    $region7: #{_lambda_.5} parent=1 // loop_footer_branch
      %10 = sbr.rel target = $region3
    $region8: #{_lambda_.5} parent=1 // loop_exit
      _
    %350 = vsyncpa [#allocation3], 1
    %s351 = scalar_lea.sflag [#allocation3], 1
    %352 = vsyncpa %s351, 1
    %353 = vsyncpa [#allocation5], 1

// kernel: _lambda_.6
$region0: #{_lambda_.6}
  #allocation0 [shape = 'u32[]', space=smem, size = 0x4, offset = 0x4, fixed_abs, tag = 'smem constant byte address 0x4 - core index']
  #allocation1 [shape = 'u32[144,128]{1,0:T(1,128)}', space=vmem, size = 0x12000, scoped, tag = 'internal scratch']
  %s0 = inlined_call_operand.vmem [shape: bf16[32,800], index: 0, kind: input, shape index: {}]
  %s1 = inlined_call_operand.hbm [shape: bf16[800,128], index: 1, kind: input, shape index: {}]
  %s2 = inlined_call_operand.hbm [shape: f32[1,128], index: 2, kind: input, shape index: {}]
  %s3 = inlined_call_operand.vmem [shape: bf16[32,128], index: 3, kind: output, shape index: {0}]
  %s4 = inlined_call_operand.vmem [shape: f32[16,128], index: 4, kind: output, shape index: {1}]
  %s5 = inlined_call_operand.vmem [shape: f32[16,128], index: 5, kind: output, shape index: {2}]
  %6 = xla_tuple %s3, %s4, %s5
  %s7 = sld [smem:[#allocation0]]
  $region69: #{_lambda_.6} parent=0
    _
  %s9 = ssub.s32 1, %s7
  %s10 = scalar_select 0, %s9, %s7
  $region1: #{_lambda_.6} parent=0
    #allocation2 [shape = 'u8[204800]{0}', space=vmem, size = 0x32000, scoped, tag = 'input window, operand 1, single buffered']
    #allocation3 [shape = 's32[2]{0}', space=sflag, size = 0x8, scoped, tag = 'scoped memory for _lambda_.6']
    #allocation4 [shape = 'u8[512]{0}', space=vmem, size = 0x400, scoped, tag = 'input window, operand 2, single buffered']
    #allocation5 [shape = 's32[1]{0}', space=sflag, size = 0x4, scoped, tag = 'scoped memory for _lambda_.6']
    %11 = vsyncpa [#allocation3], 0
    %12 = vsyncpa [#allocation5], 0
    loop: start=0, step=1, limit=4
    $region2: #{_lambda_.6} parent=1 // loop_pre_header
      _
    $region3: #{_lambda_.6} parent=1 // loop_header
      %s14 = sphi 0, %s18
      %p15 = scmp.ge.s32.totalorder %s14, 4
      %s24 = sphi 0, %s26
      %s27 = sphi 0, %s24
      %s28 = sphi 0, %s27
      %s44 = sphi 0, %s28
      %s48 = sphi 0, %s48
      %s50 = sphi 0, %s48
      %s51 = sphi 0, %s50
      %s65 = sphi 0, %s51
      %s69 = sphi 0, %s69
      %s71 = sphi 0, %s69
      %s72 = sphi 0, %s71
      %s86 = sphi 0, %s72
      %s92 = sphi 0, %s94
      %s95 = sphi 0, %s92
      %s96 = sphi 0, %s95
      %s112 = sphi 0, %s96
      %s118 = sphi 0, %s120
      %s121 = sphi 0, %s118
      %s122 = sphi 0, %s121
      %s138 = sphi 0, %s122
      %s144 = sphi 0, %s146
      %s147 = sphi 0, %s144
      %s148 = sphi 0, %s147
      %s164 = sphi 0, %s148
    $region4: #{_lambda_.6} parent=1 // loop_header_branch
      %17 = sbr.rel (%p15) target = $region8
    $region5: #{_lambda_.6} parent=1 // loop_body
      %s19 = ssub.s32 %s14, 1
      %s20 = ssub.s32 %s14, 2
      %s21 = sadd.s32 %s14, 1
      %s22 = ssub.s32 %s14, %s21
      %p23 = scmp.eq.s32.totalorder %s22, 0
      %s25 = sadd.s32 %s24, 1
      %s26 = scalar_select %p23, %s24, %s25
      %p29 = pneg %p23
      %p30 = scmp.eq.s32.totalorder %s14, 1
      %p31 = por %p29, %p30
      %p32 = scmp.ne.s32.totalorder %s24, %s27
      %p33 = scmp.eq.s32.totalorder %s14, 0
      %p34 = por %p32, %p33
      %p35 = scmp.ne.s32.totalorder %s24, %s27
      %p36 = scmp.eq.s32.totalorder %s19, 1
      %p37 = por %p35, %p36
      %p38 = scmp.ne.s32.totalorder %s27, %s28
      %p39 = scmp.eq.s32.totalorder %s19, 0
      %p40 = por %p38, %p39
      %p41 = scmp.ne.s32.totalorder %s27, %s28
      %p42 = scmp.eq.s32.totalorder %s20, 1
      %p43 = por %p41, %p42
      %p45 = scmp.ne.s32.totalorder %s28, %s44
      %p46 = scmp.eq.s32.totalorder %s20, 0
      %p47 = por %p45, %p46
      %s49 = sadd.s32 %s48, 1
      %p52 = scmp.eq.s32.totalorder %s14, 1
      %p53 = scmp.ne.s32.totalorder %s48, %s50
      %p54 = scmp.eq.s32.totalorder %s14, 0
      %p55 = por %p53, %p54
      %p56 = scmp.ne.s32.totalorder %s48, %s50
      %p57 = scmp.eq.s32.totalorder %s19, 1
      %p58 = por %p56, %p57
      %p59 = scmp.ne.s32.totalorder %s50, %s51
      %p60 = scmp.eq.s32.totalorder %s19, 0
      %p61 = por %p59, %p60
      %p62 = scmp.ne.s32.totalorder %s50, %s51
      %p63 = scmp.eq.s32.totalorder %s20, 1
      %p64 = por %p62, %p63
      %p66 = scmp.ne.s32.totalorder %s51, %s65
      %p67 = scmp.eq.s32.totalorder %s20, 0
      %p68 = por %p66, %p67
      %s70 = sadd.s32 %s69, 1
      %p73 = scmp.eq.s32.totalorder %s14, 1
      %p74 = scmp.ne.s32.totalorder %s69, %s71
      %p75 = scmp.eq.s32.totalorder %s14, 0
      %p76 = por %p74, %p75
      %p77 = scmp.ne.s32.totalorder %s69, %s71
      %p78 = scmp.eq.s32.totalorder %s19, 1
      %p79 = por %p77, %p78
      %p80 = scmp.ne.s32.totalorder %s71, %s72
      %p81 = scmp.eq.s32.totalorder %s19, 0
      %p82 = por %p80, %p81
      %p83 = scmp.ne.s32.totalorder %s71, %s72
      %p84 = scmp.eq.s32.totalorder %s20, 1
      %p85 = por %p83, %p84
      %p87 = scmp.ne.s32.totalorder %s72, %s86
      %p88 = scmp.eq.s32.totalorder %s20, 0
      %p89 = por %p87, %p88
      %s90 = ssub.s32 %s14, %s21
      %p91 = scmp.eq.s32.totalorder %s90, 0
      %s93 = sadd.s32 %s92, 1
      %s94 = scalar_select %p91, %s92, %s93
      %p97 = pneg %p91
      %p98 = scmp.eq.s32.totalorder %s14, 1
      %p99 = por %p97, %p98
      %p100 = scmp.ne.s32.totalorder %s92, %s95
      %p101 = scmp.eq.s32.totalorder %s14, 0
      %p102 = por %p100, %p101
      %p103 = scmp.ne.s32.totalorder %s92, %s95
      %p104 = scmp.eq.s32.totalorder %s19, 1
      %p105 = por %p103, %p104
      %p106 = scmp.ne.s32.totalorder %s95, %s96
      %p107 = scmp.eq.s32.totalorder %s19, 0
      %p108 = por %p106, %p107
      %p109 = scmp.ne.s32.totalorder %s95, %s96
      %p110 = scmp.eq.s32.totalorder %s20, 1
      %p111 = por %p109, %p110
      %p113 = scmp.ne.s32.totalorder %s96, %s112
      %p114 = scmp.eq.s32.totalorder %s20, 0
      %p115 = por %p113, %p114
      %s116 = ssub.s32 %s14, %s21
      %p117 = scmp.eq.s32.totalorder %s116, 0
      %s119 = sadd.s32 %s118, 1
      %s120 = scalar_select %p117, %s118, %s119
      %p123 = pneg %p117
      %p124 = scmp.eq.s32.totalorder %s14, 1
      %p125 = por %p123, %p124
      %p126 = scmp.ne.s32.totalorder %s118, %s121
      %p127 = scmp.eq.s32.totalorder %s14, 0
      %p128 = por %p126, %p127
      %p129 = scmp.ne.s32.totalorder %s118, %s121
      %p130 = scmp.eq.s32.totalorder %s19, 1
      %p131 = por %p129, %p130
      %p132 = scmp.ne.s32.totalorder %s121, %s122
      %p133 = scmp.eq.s32.totalorder %s19, 0
      %p134 = por %p132, %p133
      %p135 = scmp.ne.s32.totalorder %s121, %s122
      %p136 = scmp.eq.s32.totalorder %s20, 1
      %p137 = por %p135, %p136
      %p139 = scmp.ne.s32.totalorder %s122, %s138
      %p140 = scmp.eq.s32.totalorder %s20, 0
      %p141 = por %p139, %p140
      %s142 = ssub.s32 %s14, %s21
      %p143 = scmp.eq.s32.totalorder %s142, 0
      %s145 = sadd.s32 %s144, 1
      %s146 = scalar_select %p143, %s144, %s145
      %p149 = pneg %p143
      %p150 = scmp.eq.s32.totalorder %s14, 1
      %p151 = por %p149, %p150
      %p152 = scmp.ne.s32.totalorder %s144, %s147
      %p153 = scmp.eq.s32.totalorder %s14, 0
      %p154 = por %p152, %p153
      %p155 = scmp.ne.s32.totalorder %s144, %s147
      %p156 = scmp.eq.s32.totalorder %s19, 1
      %p157 = por %p155, %p156
      %p158 = scmp.ne.s32.totalorder %s147, %s148
      %p159 = scmp.eq.s32.totalorder %s19, 0
      %p160 = por %p158, %p159
      %p161 = scmp.ne.s32.totalorder %s147, %s148
      %p162 = scmp.eq.s32.totalorder %s20, 1
      %p163 = por %p161, %p162
      %p165 = scmp.ne.s32.totalorder %s148, %s164
      %p166 = scmp.eq.s32.totalorder %s20, 0
      %p167 = por %p165, %p166
      %p168 = scmp.le.s32.totalorder 1, %s14
      %p169 = scmp.lt.s32.totalorder %s14, 3
      %p170 = pnand %p168, %p169
      %p171 = pneg %p170
      // Predicated region
      $region9: #{_lambda_.6} parent=5 // pred_check
        _
      $region10: #{_lambda_.6} parent=5 // pred_check_branch
        %173 = sbr.rel (%p170) target = $region12
      $region11: #{_lambda_.6} parent=5 // pred_region
        %s174 = ssub.s32 %s14, 1
        // Predicated region
        $region13: #{_lambda_.6} parent=11 // pred_check
          %p175 = pneg %p61
        $region14: #{_lambda_.6} parent=11 // pred_check_branch
          %177 = sbr.rel (%p175) target = $region16
        $region15: #{_lambda_.6} parent=11 // pred_region
          %s179 = ssub.s32 6400, 6400
          %180 = vsyncadd [#allocation3], %s179
          %s181 = sshll.u32 [#allocation2], 4
          %s182 = int_to_ptr.vmem [resolvable:$true] %s181
          %187 = dma.hbm_to_vmem [thread:$0]  %s1, 6400, %s182, [#allocation3], 64, 64, 4
        $region16: #{_lambda_.6} parent=11 // pred_fallthru
          _
        // Predicated region
        $region17: #{_lambda_.6} parent=11 // pred_check
          %p188 = pneg %p82
        $region18: #{_lambda_.6} parent=11 // pred_check_branch
          %190 = sbr.rel (%p188) target = $region20
        $region19: #{_lambda_.6} parent=11 // pred_region
          %s192 = ssub.s32 16, 16
          %193 = vsyncadd [#allocation5], %s192
          %s195 = sshll.u32 [#allocation4], 4
          %s196 = int_to_ptr.vmem [resolvable:$true] %s195
          %198 = dma.hbm_to_vmem [thread:$0]  %s2, 16, %s196, [#allocation5]
        $region20: #{_lambda_.6} parent=11 // pred_fallthru
          _
      $region12: #{_lambda_.6} parent=5 // pred_fallthru
        _
      %p199 = scmp.lt.s32.totalorder %s14, 2
      // Predicated region
      $region21: #{_lambda_.6} parent=5 // pred_check
        %p200 = pneg %p199
      $region22: #{_lambda_.6} parent=5 // pred_check_branch
        %202 = sbr.rel (%p200) target = $region24
      $region23: #{_lambda_.6} parent=5 // pred_region
        // Predicated region
        $region25: #{_lambda_.6} parent=23 // pred_check
          %p203 = pneg %p34
        $region26: #{_lambda_.6} parent=23 // pred_check_branch
          %205 = sbr.rel (%p203) target = $region28
        $region27: #{_lambda_.6} parent=23 // pred_region
          %s206 = smul.u32 2, %s14
          %p207 = scmp.lt.s32.totalorder %s206, 3
          %s208 = scalar_select %p207, %s206, 3
          %s209 = smul.addr %s208, 7
          %s210 = smul.addr %s209, 4
          %s211 = scalar_lea.vmem %s0, %s210
          %s212 = smul.u32 2, %s14
        $region28: #{_lambda_.6} parent=23 // pred_fallthru
          _
      $region24: #{_lambda_.6} parent=5 // pred_fallthru
        _
      %p213 = scmp.le.s32.totalorder 1, %s14
      %p214 = scmp.lt.s32.totalorder %s14, 3
      %p215 = pnand %p213, %p214
      %p216 = pneg %p215
      // Predicated region
      $region29: #{_lambda_.6} parent=5 // pred_check
        _
      $region30: #{_lambda_.6} parent=5 // pred_check_branch
        %218 = sbr.rel (%p215) target = $region32
      $region31: #{_lambda_.6} parent=5 // pred_region
        %s219 = ssub.s32 %s14, 1
        // Predicated region
        $region33: #{_lambda_.6} parent=31 // pred_check
          %p220 = pneg %p61
        $region34: #{_lambda_.6} parent=31 // pred_check_branch
          %222 = sbr.rel (%p220) target = $region36
        $region35: #{_lambda_.6} parent=31 // pred_region
          %223 = dma.done [#allocation3], 6400
        $region36: #{_lambda_.6} parent=31 // pred_fallthru
          _
        // Predicated region
        $region37: #{_lambda_.6} parent=31 // pred_check
          %p224 = pneg %p82
        $region38: #{_lambda_.6} parent=31 // pred_check_branch
          %226 = sbr.rel (%p224) target = $region40
        $region39: #{_lambda_.6} parent=31 // pred_region
          %227 = dma.done [#allocation5], 16
        $region40: #{_lambda_.6} parent=31 // pred_fallthru
          _
        %s228 = smul.u32 2, %s19
        %p229 = scmp.lt.s32.totalorder %s228, 3
        %s230 = scalar_select %p229, %s228, 3
        %s231 = smul.addr %s230, 7
        %s232 = smul.addr %s231, 4
        %s233 = scalar_lea.vmem %s0, %s232
        %p234 = pneg %p40
        %p235 = pneg %p37
        %p236 = pneg %p61
        %p237 = pneg %p58
        %p238 = pneg %p82
        %p239 = pneg %p79
        %p240 = pneg %p108
        %p241 = pneg %p105
        %s242 = smul.u32 2, %s19
        %p243 = scmp.lt.s32.totalorder %s242, 3
        %s244 = scalar_select %p243, %s242, 3
        %s245 = smul.addr %s244, 4
        %s246 = scalar_lea.vmem %s3, %s245
        %p247 = pneg %p134
        %p248 = pneg %p131
        %p249 = scmp.lt.s32.totalorder %s19, 1
        %s250 = scalar_select %p249, %s19, 1
        %s251 = smul.addr %s250, 8
        %s252 = scalar_lea.vmem %s4, %s251
        %p253 = pneg %p160
        %p254 = pneg %p157
        %p255 = scmp.lt.s32.totalorder %s19, 1
        %s256 = scalar_select %p255, %s19, 1
        %s257 = smul.addr %s256, 8
        %s258 = scalar_lea.vmem %s5, %s257
        %s259 = smul.u32 2, %s19
        %p260 = scmp.lt.s32.totalorder %s259, 3
        %s261 = scalar_select %p260, %s259, 3
        %s262 = smul.addr %s261, 7
        %s263 = smul.addr %s262, 4
        %s264 = scalar_lea.vmem %s0, %s263
        %s265 = smul.u32 2, %s19
        %s266 = smul.u32 2, %s19
        %p267 = scmp.lt.s32.totalorder %s266, 3
        %s268 = scalar_select %p267, %s266, 3
        %s269 = smul.addr %s268, 4
        %s270 = scalar_lea.vmem %s3, %s269
        %s271 = smul.u32 2, %s19
        %p272 = scmp.lt.s32.totalorder %s19, 1
        %s273 = scalar_select %p272, %s19, 1
        %s274 = smul.addr %s273, 8
        %s275 = scalar_lea.vmem %s4, %s274
        %p276 = scmp.lt.s32.totalorder %s19, 1
        %s277 = scalar_select %p276, %s19, 1
        %s278 = smul.addr %s277, 8
        %s279 = scalar_lea.vmem %s5, %s278
        %v281 = vld [vmem:[%s264] sm:$0xff]
        %v282 = vld [vmem:[%s264 + $0x8] sm:$0xff]
        %v283 = vld [vmem:[%s264 + $0x10] sm:$0xff]
        %v284 = vld [vmem:[%s264 + $0x18] sm:$0xf]
        %v285 = vld [vmem:[%s264 + $0x1c] sm:$0xff]
        %v286 = vld [vmem:[%s264 + $0x24] sm:$0xff]
        %v287 = vld [vmem:[%s264 + $0x2c] sm:$0xff]
        %v288 = vld [vmem:[%s264 + $0x34] sm:$0xf]
        %v289 = vld [vmem:[#allocation2] sm:$0xf]
        %v290 = vld [vmem:[#allocation2 + $0x4] sm:$0xf]
        %v291 = vld [vmem:[#allocation2 + $0x8] sm:$0xf]
        %v292 = vld [vmem:[#allocation2 + $0xc] sm:$0xf]
        %v293 = vld [vmem:[#allocation2 + $0x10] sm:$0xf]
        %v294 = vld [vmem:[#allocation2 + $0x14] sm:$0xf]
        %v295 = vld [vmem:[#allocation2 + $0x18] sm:$0xf]
        %v296 = vld [vmem:[#allocation2 + $0x1c] sm:$0xf]
        %v297 = vld [vmem:[#allocation2 + $0x20] sm:$0xf]
        %v298 = vld [vmem:[#allocation2 + $0x24] sm:$0xf]
        %v299 = vld [vmem:[#allocation2 + $0x28] sm:$0xf]
        %v300 = vld [vmem:[#allocation2 + $0x2c] sm:$0xf]
        %v301 = vld [vmem:[#allocation2 + $0x30] sm:$0xf]
        %v302 = vld [vmem:[#allocation2 + $0x34] sm:$0xf]
        %v303 = vld [vmem:[#allocation2 + $0x38] sm:$0xf]
        %v304 = vld [vmem:[#allocation2 + $0x3c] sm:$0xf]
        %v305 = vld [vmem:[#allocation2 + $0x40] sm:$0xf]
        %v306 = vld [vmem:[#allocation2 + $0x44] sm:$0xf]
        %v307 = vld [vmem:[#allocation2 + $0x48] sm:$0xf]
        %v308 = vld [vmem:[#allocation2 + $0x4c] sm:$0xf]
        %v309 = vld [vmem:[#allocation2 + $0x50] sm:$0xf]
        %v310 = vld [vmem:[#allocation2 + $0x54] sm:$0xf]
        %v311 = vld [vmem:[#allocation2 + $0x58] sm:$0xf]
        %v312 = vld [vmem:[#allocation2 + $0x5c] sm:$0xf]
        %v313 = vld [vmem:[#allocation2 + $0x60] sm:$0xf]
        %v314 = vld [vmem:[#allocation2 + $0x64] sm:$0xf]
        %v315 = vld [vmem:[#allocation2 + $0x68] sm:$0xf]
        %v316 = vld [vmem:[#allocation2 + $0x6c] sm:$0xf]
        %v317 = vld [vmem:[#allocation2 + $0x70] sm:$0xf]
        %v318 = vld [vmem:[#allocation2 + $0x74] sm:$0xf]
        %v319 = vld [vmem:[#allocation2 + $0x78] sm:$0xf]
        %v320 = vld [vmem:[#allocation2 + $0x7c] sm:$0xf]
        %v321 = vld [vmem:[#allocation2 + $0x80] sm:$0xf]
        %v322 = vld [vmem:[#allocation2 + $0x84] sm:$0xf]
        %v323 = vld [vmem:[#allocation2 + $0x88] sm:$0xf]
        %v324 = vld [vmem:[#allocation2 + $0x8c] sm:$0xf]
        %v325 = vld [vmem:[#allocation2 + $0x90] sm:$0xf]
        %v326 = vld [vmem:[#allocation2 + $0x94] sm:$0xf]
        %v327 = vld [vmem:[#allocation2 + $0x98] sm:$0xf]
        %v328 = vld [vmem:[#allocation2 + $0x9c] sm:$0xf]
        %v329 = vld [vmem:[#allocation2 + $0xa0] sm:$0xf]
        %v330 = vld [vmem:[#allocation2 + $0xa4] sm:$0xf]
        %v331 = vld [vmem:[#allocation2 + $0xa8] sm:$0xf]
        %v332 = vld [vmem:[#allocation2 + $0xac] sm:$0xf]
        %v333 = vld [vmem:[#allocation2 + $0xb0] sm:$0xf]
        %v334 = vld [vmem:[#allocation2 + $0xb4] sm:$0xf]
        %v335 = vld [vmem:[#allocation2 + $0xb8] sm:$0xf]
        %v336 = vld [vmem:[#allocation2 + $0xbc] sm:$0xf]
        %v337 = vld [vmem:[#allocation2 + $0xc0] sm:$0xf]
        %v338 = vld [vmem:[#allocation2 + $0xc4] sm:$0xf]
        %v339 = vld [vmem:[#allocation2 + $0xc8] sm:$0xf]
        %v340 = vld [vmem:[#allocation2 + $0xcc] sm:$0xf]
        %v341 = vld [vmem:[#allocation2 + $0xd0] sm:$0xf]
        %v342 = vld [vmem:[#allocation2 + $0xd4] sm:$0xf]
        %v343 = vld [vmem:[#allocation2 + $0xd8] sm:$0xf]
        %v344 = vld [vmem:[#allocation2 + $0xdc] sm:$0xf]
        %v345 = vld [vmem:[#allocation2 + $0xe0] sm:$0xf]
        %v346 = vld [vmem:[#allocation2 + $0xe4] sm:$0xf]
        %v347 = vld [vmem:[#allocation2 + $0xe8] sm:$0xf]
        %v348 = vld [vmem:[#allocation2 + $0xec] sm:$0xf]
        %v349 = vld [vmem:[#allocation2 + $0xf0] sm:$0xf]
        %v350 = vld [vmem:[#allocation2 + $0xf4] sm:$0xf]
        %v351 = vld [vmem:[#allocation2 + $0xf8] sm:$0xf]
        %v352 = vld [vmem:[#allocation2 + $0xfc] sm:$0xf]
        %v353 = vld [vmem:[#allocation2 + $0x100] sm:$0xf]
        %v354 = vld [vmem:[#allocation2 + $0x104] sm:$0xf]
        %v355 = vld [vmem:[#allocation2 + $0x108] sm:$0xf]
        %v356 = vld [vmem:[#allocation2 + $0x10c] sm:$0xf]
        %v357 = vld [vmem:[#allocation2 + $0x110] sm:$0xf]
        %v358 = vld [vmem:[#allocation2 + $0x114] sm:$0xf]
        %v359 = vld [vmem:[#allocation2 + $0x118] sm:$0xf]
        %v360 = vld [vmem:[#allocation2 + $0x11c] sm:$0xf]
        %v361 = vld [vmem:[#allocation2 + $0x120] sm:$0xf]
        %v362 = vld [vmem:[#allocation2 + $0x124] sm:$0xf]
        %v363 = vld [vmem:[#allocation2 + $0x128] sm:$0xf]
        %v364 = vld [vmem:[#allocation2 + $0x12c] sm:$0xf]
        %v365 = vld [vmem:[#allocation2 + $0x130] sm:$0xf]
        %v366 = vld [vmem:[#allocation2 + $0x134] sm:$0xf]
        %v367 = vld [vmem:[#allocation2 + $0x138] sm:$0xf]
        %v368 = vld [vmem:[#allocation2 + $0x13c] sm:$0xf]
        %v369 = vld [vmem:[#allocation2 + $0x140] sm:$0xf]
        %v370 = vld [vmem:[#allocation2 + $0x144] sm:$0xf]
        %v371 = vld [vmem:[#allocation2 + $0x148] sm:$0xf]
        %v372 = vld [vmem:[#allocation2 + $0x14c] sm:$0xf]
        %v373 = vld [vmem:[#allocation2 + $0x150] sm:$0xf]
        %v374 = vld [vmem:[#allocation2 + $0x154] sm:$0xf]
        %v375 = vld [vmem:[#allocation2 + $0x158] sm:$0xf]
        %v376 = vld [vmem:[#allocation2 + $0x15c] sm:$0xf]
        %v377 = vld [vmem:[#allocation2 + $0x160] sm:$0xf]
        %v378 = vld [vmem:[#allocation2 + $0x164] sm:$0xf]
        %v379 = vld [vmem:[#allocation2 + $0x168] sm:$0xf]
        %v380 = vld [vmem:[#allocation2 + $0x16c] sm:$0xf]
        %v381 = vld [vmem:[#allocation2 + $0x170] sm:$0xf]
        %v382 = vld [vmem:[#allocation2 + $0x174] sm:$0xf]
        %v383 = vld [vmem:[#allocation2 + $0x178] sm:$0xf]
        %v384 = vld [vmem:[#allocation2 + $0x17c] sm:$0xf]
        %v385 = vld [vmem:[#allocation2 + $0x180] sm:$0xf]
        %v386 = vld [vmem:[#allocation2 + $0x184] sm:$0xf]
        %v387 = vld [vmem:[#allocation2 + $0x188] sm:$0xf]
        %v388 = vld [vmem:[#allocation2 + $0x18c] sm:$0xf]
        %v389 = vld [vmem:[#allocation4] sm:$0x1]
        %v391 = vlaneseq
        %v392 = vshrl.u32 %v391, 7
        %v393 = vsub.s32 0, %v392
        %v394 = vrot.slane %v389, %v393
        %v404 = vunpack.c.l.b16 %v281
        %v405 = vunpack.c.h.b16 %v281
        %v406 = vunpack.c.l.b16 %v282
        %v407 = vunpack.c.h.b16 %v282
        %v408 = vunpack.c.l.b16 %v283
        %v409 = vunpack.c.h.b16 %v283
        %v410 = vunpack.c.l.b16 %v284
        %v411 = vunpack.c.l.b16 %v285
        %v412 = vunpack.c.h.b16 %v285
        %v413 = vunpack.c.l.b16 %v286
        %v414 = vunpack.c.h.b16 %v286
        %v415 = vunpack.c.l.b16 %v287
        %v416 = vunpack.c.h.b16 %v287
        %v417 = vunpack.c.l.b16 %v288
        %v418 = vpack.c.b16 %v411, %v404
        %v419 = vpack.c.b16 %v412, %v405
        %v420 = vpack.c.b16 %v413, %v406
        %v421 = vpack.c.b16 %v414, %v407
        %v422 = vpack.c.b16 %v415, %v408
        %v423 = vpack.c.b16 %v416, %v409
        %v424 = vpack.c.b16 %v417, %v410
        %v531 = vunpack.c.l.b16 %v289
        %v532 = vunpack.c.l.b16 %v290
        %v533 = vunpack.c.l.b16 %v291
        %v534 = vunpack.c.l.b16 %v292
        %v535 = vunpack.c.l.b16 %v293
        %v536 = vunpack.c.l.b16 %v294
        %v537 = vunpack.c.l.b16 %v295
        %v538 = vunpack.c.l.b16 %v296
        %v539 = vunpack.c.l.b16 %v297
        %v540 = vunpack.c.l.b16 %v298
        %v541 = vunpack.c.l.b16 %v299
        %v542 = vunpack.c.l.b16 %v300
        %v543 = vunpack.c.l.b16 %v301
        %v544 = vunpack.c.l.b16 %v302
        %v545 = vunpack.c.l.b16 %v303
        %v546 = vunpack.c.l.b16 %v304
        %v547 = vunpack.c.l.b16 %v305
        %v548 = vunpack.c.l.b16 %v306
        %v549 = vunpack.c.l.b16 %v307
        %v550 = vunpack.c.l.b16 %v308
        %v551 = vunpack.c.l.b16 %v309
        %v552 = vunpack.c.l.b16 %v310
        %v553 = vunpack.c.l.b16 %v311
        %v554 = vunpack.c.l.b16 %v312
        %v555 = vunpack.c.l.b16 %v313
        %v556 = vunpack.c.l.b16 %v314
        %v557 = vunpack.c.l.b16 %v315
        %v558 = vunpack.c.l.b16 %v316
        %v559 = vunpack.c.l.b16 %v317
        %v560 = vunpack.c.l.b16 %v318
        %v561 = vunpack.c.l.b16 %v319
        %v562 = vunpack.c.l.b16 %v320
        %v563 = vunpack.c.l.b16 %v321
        %v564 = vunpack.c.l.b16 %v322
        %v565 = vunpack.c.l.b16 %v323
        %v566 = vunpack.c.l.b16 %v324
        %v567 = vunpack.c.l.b16 %v325
        %v568 = vunpack.c.l.b16 %v326
        %v569 = vunpack.c.l.b16 %v327
        %v570 = vunpack.c.l.b16 %v328
        %v571 = vunpack.c.l.b16 %v329
        %v572 = vunpack.c.l.b16 %v330
        %v573 = vunpack.c.l.b16 %v331
        %v574 = vunpack.c.l.b16 %v332
        %v575 = vunpack.c.l.b16 %v333
        %v576 = vunpack.c.l.b16 %v334
        %v577 = vunpack.c.l.b16 %v335
        %v578 = vunpack.c.l.b16 %v336
        %v579 = vunpack.c.l.b16 %v337
        %v580 = vunpack.c.l.b16 %v338
        %v581 = vunpack.c.l.b16 %v339
        %v582 = vunpack.c.l.b16 %v340
        %v583 = vunpack.c.l.b16 %v341
        %v584 = vunpack.c.l.b16 %v342
        %v585 = vunpack.c.l.b16 %v343
        %v586 = vunpack.c.l.b16 %v344
        %v587 = vunpack.c.l.b16 %v345
        %v588 = vunpack.c.l.b16 %v346
        %v589 = vunpack.c.l.b16 %v347
        %v590 = vunpack.c.l.b16 %v348
        %v591 = vunpack.c.l.b16 %v349
        %v592 = vunpack.c.l.b16 %v350
        %v593 = vunpack.c.l.b16 %v351
        %v594 = vunpack.c.l.b16 %v352
        %v595 = vunpack.c.l.b16 %v353
        %v596 = vunpack.c.l.b16 %v354
        %v597 = vunpack.c.l.b16 %v355
        %v598 = vunpack.c.l.b16 %v356
        %v599 = vunpack.c.l.b16 %v357
        %v600 = vunpack.c.l.b16 %v358
        %v601 = vunpack.c.l.b16 %v359
        %v602 = vunpack.c.l.b16 %v360
        %v603 = vunpack.c.l.b16 %v361
        %v604 = vunpack.c.l.b16 %v362
        %v605 = vunpack.c.l.b16 %v363
        %v606 = vunpack.c.l.b16 %v364
        %v607 = vunpack.c.l.b16 %v365
        %v608 = vunpack.c.l.b16 %v366
        %v609 = vunpack.c.l.b16 %v367
        %v610 = vunpack.c.l.b16 %v368
        %v611 = vunpack.c.l.b16 %v369
        %v612 = vunpack.c.l.b16 %v370
        %v613 = vunpack.c.l.b16 %v371
        %v614 = vunpack.c.l.b16 %v372
        %v615 = vunpack.c.l.b16 %v373
        %v616 = vunpack.c.l.b16 %v374
        %v617 = vunpack.c.l.b16 %v375
        %v618 = vunpack.c.l.b16 %v376
        %v619 = vunpack.c.l.b16 %v377
        %v620 = vunpack.c.l.b16 %v378
        %v621 = vunpack.c.l.b16 %v379
        %v622 = vunpack.c.l.b16 %v380
        %v623 = vunpack.c.l.b16 %v381
        %v624 = vunpack.c.l.b16 %v382
        %v625 = vunpack.c.l.b16 %v383
        %v626 = vunpack.c.l.b16 %v384
        %v627 = vunpack.c.l.b16 %v385
        %v628 = vunpack.c.l.b16 %v386
        %v629 = vunpack.c.l.b16 %v387
        %v630 = vunpack.c.l.b16 %v388
        %v631 = vpack.c.b16 %v532, %v531
        %v632 = vpack.c.b16 %v534, %v533
        %v633 = vpack.c.b16 %v536, %v535
        %v634 = vpack.c.b16 %v538, %v537
        %v635 = vpack.c.b16 %v540, %v539
        %v636 = vpack.c.b16 %v542, %v541
        %v637 = vpack.c.b16 %v544, %v543
        %v638 = vpack.c.b16 %v546, %v545
        %v639 = vpack.c.b16 %v548, %v547
        %v640 = vpack.c.b16 %v550, %v549
        %v641 = vpack.c.b16 %v552, %v551
        %v642 = vpack.c.b16 %v554, %v553
        %v643 = vpack.c.b16 %v556, %v555
        %v644 = vpack.c.b16 %v558, %v557
        %v645 = vpack.c.b16 %v560, %v559
        %v646 = vpack.c.b16 %v562, %v561
        %v647 = vpack.c.b16 %v564, %v563
        %v648 = vpack.c.b16 %v566, %v565
        %v649 = vpack.c.b16 %v568, %v567
        %v650 = vpack.c.b16 %v570, %v569
        %v651 = vpack.c.b16 %v572, %v571
        %v652 = vpack.c.b16 %v574, %v573
        %v653 = vpack.c.b16 %v576, %v575
        %v654 = vpack.c.b16 %v578, %v577
        %v655 = vpack.c.b16 %v580, %v579
        %v656 = vpack.c.b16 %v582, %v581
        %v657 = vpack.c.b16 %v584, %v583
        %v658 = vpack.c.b16 %v586, %v585
        %v659 = vpack.c.b16 %v588, %v587
        %v660 = vpack.c.b16 %v590, %v589
        %v661 = vpack.c.b16 %v592, %v591
        %v662 = vpack.c.b16 %v594, %v593
        %v663 = vpack.c.b16 %v596, %v595
        %v664 = vpack.c.b16 %v598, %v597
        %v665 = vpack.c.b16 %v600, %v599
        %v666 = vpack.c.b16 %v602, %v601
        %v667 = vpack.c.b16 %v604, %v603
        %v668 = vpack.c.b16 %v606, %v605
        %v669 = vpack.c.b16 %v608, %v607
        %v670 = vpack.c.b16 %v610, %v609
        %v671 = vpack.c.b16 %v612, %v611
        %v672 = vpack.c.b16 %v614, %v613
        %v673 = vpack.c.b16 %v616, %v615
        %v674 = vpack.c.b16 %v618, %v617
        %v675 = vpack.c.b16 %v620, %v619
        %v676 = vpack.c.b16 %v622, %v621
        %v677 = vpack.c.b16 %v624, %v623
        %v678 = vpack.c.b16 %v626, %v625
        %v679 = vpack.c.b16 %v628, %v627
        %v680 = vpack.c.b16 %v630, %v629
        %vm731 = vcmask 261120
        %v733 = vsel %vm731, %v424, 0
        %735 = vmatprep.subr.bf16.mxu0 0
        %736 = vmatpush1.bf16.msra.mxu0 %v638
        %737 = vmatprep.subr.bf16.mxu0 0
        %738 = vmatpush1.bf16.msra.mxu0 %v637
        %739 = vmatprep.subr.bf16.mxu0 0
        %740 = vmatpush1.bf16.msra.mxu0 %v636
        %741 = vmatprep.subr.bf16.mxu0 0
        %742 = vmatpush1.bf16.msra.mxu0 %v635
        %743 = vmatprep.subr.bf16.mxu0 0
        %744 = vmatpush1.bf16.msra.mxu0 %v634
        %745 = vmatprep.subr.bf16.mxu0 0
        %746 = vmatpush1.bf16.msra.mxu0 %v633
        %747 = vmatprep.subr.bf16.mxu0 0
        %748 = vmatpush1.bf16.msra.mxu0 %v632
        %749 = vmatprep.subr.bf16.mxu0 0
        %750 = vmatpush1.bf16.msra.mxu0 %v631
        %751 = vmatprep.subr.bf16.mxu0 0
        %752 = vmatpush2.bf16.msra.mxu0 %v646
        %753 = vmatprep.subr.bf16.mxu0 0
        %754 = vmatpush2.bf16.msra.mxu0 %v645
        %755 = vmatprep.subr.bf16.mxu0 0
        %756 = vmatpush2.bf16.msra.mxu0 %v644
        %757 = vmatprep.subr.bf16.mxu0 0
        %758 = vmatpush2.bf16.msra.mxu0 %v643
        %759 = vmatprep.subr.bf16.mxu0 0
        %760 = vmatpush2.bf16.msra.mxu0 %v642
        %761 = vmatprep.subr.bf16.mxu0 0
        %762 = vmatpush2.bf16.msra.mxu0 %v641
        %763 = vmatprep.subr.bf16.mxu0 0
        %764 = vmatpush2.bf16.msra.mxu0 %v640
        %765 = vmatprep.subr.bf16.mxu0 0
        %766 = vmatpush2.bf16.msra.mxu0 %v639
        %767 = vmatprep.mubr.bf16.mxu0 %v419
        %768 = vmatmul.mubr.bf16.gmra.mxu0 %v418
        %v769 = vpop.f32.mrf.mxu0
        %v770 = vadd.f32 %v394, %v769
        %v771 = vpop.f32.mrf.mxu0
        %v772 = vpop.f32.mrf.mxu0
        %v773 = vadd.f32 %v394, %v772
        %v774 = vpop.f32.mrf.mxu0
        %775 = vdwg.mxu0
        %776 = vmatprep.subr.bf16.mxu0 0
        %777 = vmatpush1.bf16.msra.mxu0 %v654
        %778 = vmatprep.subr.bf16.mxu0 0
        %779 = vmatpush1.bf16.msra.mxu0 %v653
        %780 = vmatprep.subr.bf16.mxu0 0
        %781 = vmatpush1.bf16.msra.mxu0 %v652
        %782 = vmatprep.subr.bf16.mxu0 0
        %783 = vmatpush1.bf16.msra.mxu0 %v651
        %784 = vmatprep.subr.bf16.mxu0 0
        %785 = vmatpush1.bf16.msra.mxu0 %v650
        %786 = vmatprep.subr.bf16.mxu0 0
        %787 = vmatpush1.bf16.msra.mxu0 %v649
        %788 = vmatprep.subr.bf16.mxu0 0
        %789 = vmatpush1.bf16.msra.mxu0 %v648
        %790 = vmatprep.subr.bf16.mxu0 0
        %791 = vmatpush1.bf16.msra.mxu0 %v647
        %792 = vmatprep.subr.bf16.mxu0 0
        %793 = vmatpush2.bf16.msra.mxu0 %v662
        %794 = vmatprep.subr.bf16.mxu0 0
        %795 = vmatpush2.bf16.msra.mxu0 %v661
        %796 = vmatprep.subr.bf16.mxu0 0
        %797 = vmatpush2.bf16.msra.mxu0 %v660
        %798 = vmatprep.subr.bf16.mxu0 0
        %799 = vmatpush2.bf16.msra.mxu0 %v659
        %800 = vmatprep.subr.bf16.mxu0 0
        %801 = vmatpush2.bf16.msra.mxu0 %v658
        %802 = vmatprep.subr.bf16.mxu0 0
        %803 = vmatpush2.bf16.msra.mxu0 %v657
        %804 = vmatprep.subr.bf16.mxu0 0
        %805 = vmatpush2.bf16.msra.mxu0 %v656
        %806 = vmatprep.subr.bf16.mxu0 0
        %807 = vmatpush2.bf16.msra.mxu0 %v655
        %808 = vmatprep.mubr.bf16.mxu0 %v421
        %809 = vmatmul.mubr.bf16.gmra.mxu0 %v420
        %v810 = vpop.f32.mrf.mxu0
        %v811 = vadd.f32 %v770, %v810
        %v812 = vpop.f32.mrf.mxu0
        %v813 = vpop.f32.mrf.mxu0
        %v814 = vadd.f32 %v773, %v813
        %v815 = vpop.f32.mrf.mxu0
        %816 = vdwg.mxu0
        %817 = vmatprep.subr.bf16.mxu0 0
        %818 = vmatpush1.bf16.msra.mxu0 %v670
        %819 = vmatprep.subr.bf16.mxu0 0
        %820 = vmatpush1.bf16.msra.mxu0 %v669
        %821 = vmatprep.subr.bf16.mxu0 0
        %822 = vmatpush1.bf16.msra.mxu0 %v668
        %823 = vmatprep.subr.bf16.mxu0 0
        %824 = vmatpush1.bf16.msra.mxu0 %v667
        %825 = vmatprep.subr.bf16.mxu0 0
        %826 = vmatpush1.bf16.msra.mxu0 %v666
        %827 = vmatprep.subr.bf16.mxu0 0
        %828 = vmatpush1.bf16.msra.mxu0 %v665
        %829 = vmatprep.subr.bf16.mxu0 0
        %830 = vmatpush1.bf16.msra.mxu0 %v664
        %831 = vmatprep.subr.bf16.mxu0 0
        %832 = vmatpush1.bf16.msra.mxu0 %v663
        %833 = vmatprep.subr.bf16.mxu0 0
        %834 = vmatpush2.bf16.msra.mxu0 %v678
        %835 = vmatprep.subr.bf16.mxu0 0
        %836 = vmatpush2.bf16.msra.mxu0 %v677
        %837 = vmatprep.subr.bf16.mxu0 0
        %838 = vmatpush2.bf16.msra.mxu0 %v676
        %839 = vmatprep.subr.bf16.mxu0 0
        %840 = vmatpush2.bf16.msra.mxu0 %v675
        %841 = vmatprep.subr.bf16.mxu0 0
        %842 = vmatpush2.bf16.msra.mxu0 %v674
        %843 = vmatprep.subr.bf16.mxu0 0
        %844 = vmatpush2.bf16.msra.mxu0 %v673
        %845 = vmatprep.subr.bf16.mxu0 0
        %846 = vmatpush2.bf16.msra.mxu0 %v672
        %847 = vmatprep.subr.bf16.mxu0 0
        %848 = vmatpush2.bf16.msra.mxu0 %v671
        %849 = vmatprep.mubr.bf16.mxu0 %v423
        %850 = vmatmul.mubr.bf16.gmra.mxu0 %v422
        %v851 = vpop.f32.mrf.mxu0
        %v852 = vadd.f32 %v811, %v851
        %v853 = vpop.f32.mrf.mxu0
        %v854 = vpop.f32.mrf.mxu0
        %v855 = vadd.f32 %v814, %v854
        %v856 = vpop.f32.mrf.mxu0
        %857 = vdwg.mxu0
        %858 = vmatprep.subr.bf16.mxu0 0
        %859 = vmatpush1.bf16.msra.mxu0 0
        %860 = vmatprep.subr.bf16.mxu0 0
        %861 = vmatpush1.bf16.msra.mxu0 0
        %862 = vmatprep.subr.bf16.mxu0 0
        %863 = vmatpush1.bf16.msra.mxu0 0
        %864 = vmatprep.subr.bf16.mxu0 0
        %865 = vmatpush1.bf16.msra.mxu0 0
        %866 = vmatprep.subr.bf16.mxu0 0
        %867 = vmatpush1.bf16.msra.mxu0 0
        %868 = vmatprep.subr.bf16.mxu0 0
        %869 = vmatpush1.bf16.msra.mxu0 0
        %870 = vmatprep.subr.bf16.mxu0 0
        %871 = vmatpush1.bf16.msra.mxu0 %v680
        %872 = vmatprep.subr.bf16.mxu0 0
        %873 = vmatpush1.bf16.msra.mxu0 %v679
        %874 = vmatprep.subr.bf16.mxu0 0
        %875 = vmatpush2.bf16.msra.mxu0 0
        %876 = vmatprep.subr.bf16.mxu0 0
        %877 = vmatpush2.bf16.msra.mxu0 0
        %878 = vmatprep.subr.bf16.mxu0 0
        %879 = vmatpush2.bf16.msra.mxu0 0
        %880 = vmatprep.subr.bf16.mxu0 0
        %881 = vmatpush2.bf16.msra.mxu0 0
        %882 = vmatprep.subr.bf16.mxu0 0
        %883 = vmatpush2.bf16.msra.mxu0 0
        %884 = vmatprep.subr.bf16.mxu0 0
        %885 = vmatpush2.bf16.msra.mxu0 0
        %886 = vmatprep.subr.bf16.mxu0 0
        %887 = vmatpush2.bf16.msra.mxu0 0
        %888 = vmatprep.subr.bf16.mxu0 0
        %889 = vmatpush2.bf16.msra.mxu0 0
        %890 = vmatprep.mubr.bf16.mxu0 0
        %891 = vmatmul.mubr.bf16.gmra.mxu0 %v733
        %v892 = vpop.f32.mrf.mxu0
        %v893 = vadd.f32 %v852, %v892
        %v894 = vpop.f32.mrf.mxu0
        %v895 = vpop.f32.mrf.mxu0
        %v896 = vadd.f32 %v855, %v895
        %v897 = vpop.f32.mrf.mxu0
        %898 = vdwg.mxu0
        %vm899 = vcmp.ge.f32.partialorder %v893, 0.0
        %vm900 = vcmp.ge.f32.partialorder %v896, 0.0
        %v901 = vmul.f32 %v893, 0.2
        %v902 = vmul.f32 %v896, 0.2
        %v903 = vsel %vm899, %v893, %v901
        %v904 = vsel %vm900, %v896, %v902
        %v905 = vpack.c.bf16 %v904, %v903
        %v907 = vunpack.c.l.b16 %v905
        %v908 = vunpack.c.h.b16 %v905
        %v909 = vpack.c.b16 %v907, %v907
        %v910 = vpack.c.b16 %v908, %v908
        %913 = vst [vmem:[%s270] sm:$0xf] %v909
        %914 = vst [vmem:[%s270 + $0x4] sm:$0xf] %v910
        %v915 = vadd.f32 %v903, %v904
        %v916 = vrot.slane %v915, 4
        %v917 = vadd.f32 %v915, %v916
        %v918 = vrot.slane %v917, 2
        %v919 = vadd.f32 %v917, %v918
        %v920 = vrot.slane %v919, 1
        %v921 = vadd.f32 %v919, %v920
        %v922 = vmul.f32 %v903, %v903
        %v923 = vmul.f32 %v904, %v904
        %v924 = vadd.f32 %v922, %v923
        %v925 = vrot.slane %v924, 4
        %v926 = vadd.f32 %v924, %v925
        %v927 = vrot.slane %v926, 2
        %v928 = vadd.f32 %v926, %v927
        %v929 = vrot.slane %v928, 1
        %v930 = vadd.f32 %v928, %v929
        %v931 = vlaneseq
        %v932 = vshrl.u32 %v931, 7
        %vm933 = vcmp.eq.s32.totalorder %v932, 0
        %v934 = vsel %vm933, %v921, 0.0
        %935 = vst [vmem:[%s275] sm:$0xff] %v934
        %v936 = vsel %vm933, %v930, 0.0
        %937 = vst [vmem:[%s279] sm:$0xff] %v936
        %s938 = smul.u32 2, %s19
        %p939 = scmp.lt.s32.totalorder %s938, 3
        %s940 = scalar_select %p939, %s938, 3
        %s941 = smul.addr %s940, 4
        %s942 = scalar_lea.vmem %s3, %s941
        %p943 = scmp.lt.s32.totalorder %s19, 1
        %s944 = scalar_select %p943, %s19, 1
        %s945 = smul.addr %s944, 8
        %s946 = scalar_lea.vmem %s4, %s945
        %p947 = scmp.lt.s32.totalorder %s19, 1
        %s948 = scalar_select %p947, %s19, 1
        %s949 = smul.addr %s948, 8
        %s950 = scalar_lea.vmem %s5, %s949
        // Predicated region
        $region41: #{_lambda_.6} parent=31 // pred_check
          %p951 = pneg %p105
        $region42: #{_lambda_.6} parent=31 // pred_check_branch
          %953 = sbr.rel (%p951) target = $region44
        $region43: #{_lambda_.6} parent=31 // pred_region
          %s954 = smul.u32 2, %s19
        $region44: #{_lambda_.6} parent=31 // pred_fallthru
          _
        // Predicated region
        $region45: #{_lambda_.6} parent=31 // pred_check
          %p955 = pneg %p131
        $region46: #{_lambda_.6} parent=31 // pred_check_branch
          %957 = sbr.rel (%p955) target = $region48
        $region47: #{_lambda_.6} parent=31 // pred_region
          _
        $region48: #{_lambda_.6} parent=31 // pred_fallthru
          _
        // Predicated region
        $region49: #{_lambda_.6} parent=31 // pred_check
          %p958 = pneg %p157
        $region50: #{_lambda_.6} parent=31 // pred_check_branch
          %960 = sbr.rel (%p958) target = $region52
        $region51: #{_lambda_.6} parent=31 // pred_region
          _
        $region52: #{_lambda_.6} parent=31 // pred_fallthru
          _
      $region32: #{_lambda_.6} parent=5 // pred_fallthru
        _
      %p961 = scmp.le.s32.totalorder 2, %s14
      // Predicated region
      $region53: #{_lambda_.6} parent=5 // pred_check
        %p962 = pneg %p961
      $region54: #{_lambda_.6} parent=5 // pred_check_branch
        %964 = sbr.rel (%p962) target = $region56
      $region55: #{_lambda_.6} parent=5 // pred_region
        %s965 = ssub.s32 %s14, 2
        // Predicated region
        $region57: #{_lambda_.6} parent=55 // pred_check
          %p966 = pneg %p111
        $region58: #{_lambda_.6} parent=55 // pred_check_branch
          %968 = sbr.rel (%p966) target = $region60
        $region59: #{_lambda_.6} parent=55 // pred_region
          %s969 = smul.u32 2, %s20
          %p970 = scmp.lt.s32.totalorder %s969, 3
          %s971 = scalar_select %p970, %s969, 3
          %s972 = smul.addr %s971, 4
          %s973 = scalar_lea.vmem %s3, %s972
        $region60: #{_lambda_.6} parent=55 // pred_fallthru
          _
        // Predicated region
        $region61: #{_lambda_.6} parent=55 // pred_check
          %p974 = pneg %p137
        $region62: #{_lambda_.6} parent=55 // pred_check_branch
          %976 = sbr.rel (%p974) target = $region64
        $region63: #{_lambda_.6} parent=55 // pred_region
          %p977 = scmp.lt.s32.totalorder %s20, 1
          %s978 = scalar_select %p977, %s20, 1
          %s979 = smul.addr %s978, 8
          %s980 = scalar_lea.vmem %s4, %s979
        $region64: #{_lambda_.6} parent=55 // pred_fallthru
          _
        // Predicated region
        $region65: #{_lambda_.6} parent=55 // pred_check
          %p981 = pneg %p163
        $region66: #{_lambda_.6} parent=55 // pred_check_branch
          %983 = sbr.rel (%p981) target = $region68
        $region67: #{_lambda_.6} parent=55 // pred_region
          %p984 = scmp.lt.s32.totalorder %s20, 1
          %s985 = scalar_select %p984, %s20, 1
          %s986 = smul.addr %s985, 8
          %s987 = scalar_lea.vmem %s5, %s986
        $region68: #{_lambda_.6} parent=55 // pred_fallthru
          _
      $region56: #{_lambda_.6} parent=5 // pred_fallthru
        _
    $region6: #{_lambda_.6} parent=1 // loop_footer
      %s18 = sadd.s32 1, %s14
    $region7: #{_lambda_.6} parent=1 // loop_footer_branch
      %13 = sbr.rel target = $region3
    $region8: #{_lambda_.6} parent=1 // loop_exit
      _
    %988 = vsyncpa [#allocation3], 1
    %s989 = scalar_lea.sflag [#allocation3], 1
    %990 = vsyncpa %s989, 1
    %991 = vsyncpa [#allocation5], 1

// kernel: _lambda_.7
$region0: #{_lambda_.7}
  #allocation0 [shape = 'u32[]', space=smem, size = 0x4, offset = 0x4, fixed_abs, tag = 'smem constant byte address 0x4 - core index']
  #allocation1 [shape = 'u32[144,128]{1,0:T(1,128)}', space=vmem, size = 0x12000, scoped, tag = 'internal scratch']
  %s0 = inlined_call_operand.vmem [shape: bf16[32,1200], index: 0, kind: input, shape index: {}]
  %s1 = inlined_call_operand.vmem [shape: bf16[1200,128], index: 1, kind: input, shape index: {}]
  %s2 = inlined_call_operand.vmem [shape: f32[1,128], index: 2, kind: input, shape index: {}]
  %s3 = inlined_call_operand.vmem [shape: bf16[32,128], index: 3, kind: output, shape index: {}]
  %s4 = sld [smem:[#allocation0]]
  $region45: #{_lambda_.7} parent=0
    _
  %s6 = ssub.s32 1, %s4
  %s7 = scalar_select 0, %s6, %s4
  loop: start=0, step=1, limit=4
  $region2: #{_lambda_.7} parent=0 // loop_pre_header
    _
  $region3: #{_lambda_.7} parent=0 // loop_header
    %s9 = sphi 0, %s13
    %p10 = scmp.ge.s32.totalorder %s9, 4
    %s19 = sphi 0, %s21
    %s22 = sphi 0, %s19
    %s23 = sphi 0, %s22
    %s39 = sphi 0, %s23
    %s43 = sphi 0, %s43
    %s45 = sphi 0, %s43
    %s46 = sphi 0, %s45
    %s60 = sphi 0, %s46
    %s64 = sphi 0, %s64
    %s66 = sphi 0, %s64
    %s67 = sphi 0, %s66
    %s81 = sphi 0, %s67
    %s87 = sphi 0, %s89
    %s90 = sphi 0, %s87
    %s91 = sphi 0, %s90
    %s107 = sphi 0, %s91
  $region4: #{_lambda_.7} parent=0 // loop_header_branch
    %12 = sbr.rel (%p10) target = $region8
  $region5: #{_lambda_.7} parent=0 // loop_body
    %s14 = ssub.s32 %s9, 1
    %s15 = ssub.s32 %s9, 2
    %s16 = sadd.s32 %s9, 1
    %s17 = ssub.s32 %s9, %s16
    %p18 = scmp.eq.s32.totalorder %s17, 0
    %s20 = sadd.s32 %s19, 1
    %s21 = scalar_select %p18, %s19, %s20
    %p24 = pneg %p18
    %p25 = scmp.eq.s32.totalorder %s9, 1
    %p26 = por %p24, %p25
    %p27 = scmp.ne.s32.totalorder %s19, %s22
    %p28 = scmp.eq.s32.totalorder %s9, 0
    %p29 = por %p27, %p28
    %p30 = scmp.ne.s32.totalorder %s19, %s22
    %p31 = scmp.eq.s32.totalorder %s14, 1
    %p32 = por %p30, %p31
    %p33 = scmp.ne.s32.totalorder %s22, %s23
    %p34 = scmp.eq.s32.totalorder %s14, 0
    %p35 = por %p33, %p34
    %p36 = scmp.ne.s32.totalorder %s22, %s23
    %p37 = scmp.eq.s32.totalorder %s15, 1
    %p38 = por %p36, %p37
    %p40 = scmp.ne.s32.totalorder %s23, %s39
    %p41 = scmp.eq.s32.totalorder %s15, 0
    %p42 = por %p40, %p41
    %s44 = sadd.s32 %s43, 1
    %p47 = scmp.eq.s32.totalorder %s9, 1
    %p48 = scmp.ne.s32.totalorder %s43, %s45
    %p49 = scmp.eq.s32.totalorder %s9, 0
    %p50 = por %p48, %p49
    %p51 = scmp.ne.s32.totalorder %s43, %s45
    %p52 = scmp.eq.s32.totalorder %s14, 1
    %p53 = por %p51, %p52
    %p54 = scmp.ne.s32.totalorder %s45, %s46
    %p55 = scmp.eq.s32.totalorder %s14, 0
    %p56 = por %p54, %p55
    %p57 = scmp.ne.s32.totalorder %s45, %s46
    %p58 = scmp.eq.s32.totalorder %s15, 1
    %p59 = por %p57, %p58
    %p61 = scmp.ne.s32.totalorder %s46, %s60
    %p62 = scmp.eq.s32.totalorder %s15, 0
    %p63 = por %p61, %p62
    %s65 = sadd.s32 %s64, 1
    %p68 = scmp.eq.s32.totalorder %s9, 1
    %p69 = scmp.ne.s32.totalorder %s64, %s66
    %p70 = scmp.eq.s32.totalorder %s9, 0
    %p71 = por %p69, %p70
    %p72 = scmp.ne.s32.totalorder %s64, %s66
    %p73 = scmp.eq.s32.totalorder %s14, 1
    %p74 = por %p72, %p73
    %p75 = scmp.ne.s32.totalorder %s66, %s67
    %p76 = scmp.eq.s32.totalorder %s14, 0
    %p77 = por %p75, %p76
    %p78 = scmp.ne.s32.totalorder %s66, %s67
    %p79 = scmp.eq.s32.totalorder %s15, 1
    %p80 = por %p78, %p79
    %p82 = scmp.ne.s32.totalorder %s67, %s81
    %p83 = scmp.eq.s32.totalorder %s15, 0
    %p84 = por %p82, %p83
    %s85 = ssub.s32 %s9, %s16
    %p86 = scmp.eq.s32.totalorder %s85, 0
    %s88 = sadd.s32 %s87, 1
    %s89 = scalar_select %p86, %s87, %s88
    %p92 = pneg %p86
    %p93 = scmp.eq.s32.totalorder %s9, 1
    %p94 = por %p92, %p93
    %p95 = scmp.ne.s32.totalorder %s87, %s90
    %p96 = scmp.eq.s32.totalorder %s9, 0
    %p97 = por %p95, %p96
    %p98 = scmp.ne.s32.totalorder %s87, %s90
    %p99 = scmp.eq.s32.totalorder %s14, 1
    %p100 = por %p98, %p99
    %p101 = scmp.ne.s32.totalorder %s90, %s91
    %p102 = scmp.eq.s32.totalorder %s14, 0
    %p103 = por %p101, %p102
    %p104 = scmp.ne.s32.totalorder %s90, %s91
    %p105 = scmp.eq.s32.totalorder %s15, 1
    %p106 = por %p104, %p105
    %p108 = scmp.ne.s32.totalorder %s91, %s107
    %p109 = scmp.eq.s32.totalorder %s15, 0
    %p110 = por %p108, %p109
    %p111 = scmp.le.s32.totalorder 1, %s9
    %p112 = scmp.lt.s32.totalorder %s9, 3
    %p113 = pnand %p111, %p112
    %p114 = pneg %p113
    // Predicated region
    $region9: #{_lambda_.7} parent=5 // pred_check
      _
    $region10: #{_lambda_.7} parent=5 // pred_check_branch
      %116 = sbr.rel (%p113) target = $region12
    $region11: #{_lambda_.7} parent=5 // pred_region
      %s117 = ssub.s32 %s9, 1
      // Predicated region
      $region13: #{_lambda_.7} parent=11 // pred_check
        %p118 = pneg %p56
      $region14: #{_lambda_.7} parent=11 // pred_check_branch
        %120 = sbr.rel (%p118) target = $region16
      $region15: #{_lambda_.7} parent=11 // pred_region
        _
      $region16: #{_lambda_.7} parent=11 // pred_fallthru
        _
      // Predicated region
      $region17: #{_lambda_.7} parent=11 // pred_check
        %p121 = pneg %p77
      $region18: #{_lambda_.7} parent=11 // pred_check_branch
        %123 = sbr.rel (%p121) target = $region20
      $region19: #{_lambda_.7} parent=11 // pred_region
        _
      $region20: #{_lambda_.7} parent=11 // pred_fallthru
        _
    $region12: #{_lambda_.7} parent=5 // pred_fallthru
      _
    %p124 = scmp.lt.s32.totalorder %s9, 2
    // Predicated region
    $region21: #{_lambda_.7} parent=5 // pred_check
      %p125 = pneg %p124
    $region22: #{_lambda_.7} parent=5 // pred_check_branch
      %127 = sbr.rel (%p125) target = $region24
    $region23: #{_lambda_.7} parent=5 // pred_region
      // Predicated region
      $region25: #{_lambda_.7} parent=23 // pred_check
        %p128 = pneg %p29
      $region26: #{_lambda_.7} parent=23 // pred_check_branch
        %130 = sbr.rel (%p128) target = $region28
      $region27: #{_lambda_.7} parent=23 // pred_region
        %s131 = smul.u32 2, %s9
        %p132 = scmp.lt.s32.totalorder %s131, 3
        %s133 = scalar_select %p132, %s131, 3
        %s134 = smul.addr %s133, 10
        %s135 = smul.addr %s134, 4
        %s136 = scalar_lea.vmem %s0, %s135
        %s137 = smul.u32 2, %s9
      $region28: #{_lambda_.7} parent=23 // pred_fallthru
        _
    $region24: #{_lambda_.7} parent=5 // pred_fallthru
      _
    %p138 = scmp.le.s32.totalorder 1, %s9
    %p139 = scmp.lt.s32.totalorder %s9, 3
    %p140 = pnand %p138, %p139
    %p141 = pneg %p140
    // Predicated region
    $region29: #{_lambda_.7} parent=5 // pred_check
      _
    $region30: #{_lambda_.7} parent=5 // pred_check_branch
      %143 = sbr.rel (%p140) target = $region32
    $region31: #{_lambda_.7} parent=5 // pred_region
      %s144 = ssub.s32 %s9, 1
      %s145 = smul.u32 2, %s14
      %p146 = scmp.lt.s32.totalorder %s145, 3
      %s147 = scalar_select %p146, %s145, 3
      %s148 = smul.addr %s147, 10
      %s149 = smul.addr %s148, 4
      %s150 = scalar_lea.vmem %s0, %s149
      %p151 = pneg %p35
      %p152 = pneg %p32
      %p153 = pneg %p56
      %p154 = pneg %p53
      %p155 = pneg %p77
      %p156 = pneg %p74
      %p157 = pneg %p103
      %p158 = pneg %p100
      %s159 = smul.u32 2, %s14
      %p160 = scmp.lt.s32.totalorder %s159, 3
      %s161 = scalar_select %p160, %s159, 3
      %s162 = smul.addr %s161, 4
      %s163 = scalar_lea.vmem %s3, %s162
      %s164 = smul.u32 2, %s14
      %p165 = scmp.lt.s32.totalorder %s164, 3
      %s166 = scalar_select %p165, %s164, 3
      %s167 = smul.addr %s166, 10
      %s168 = smul.addr %s167, 4
      %s169 = scalar_lea.vmem %s0, %s168
      %s170 = smul.u32 2, %s14
      %s171 = smul.u32 2, %s14
      %p172 = scmp.lt.s32.totalorder %s171, 3
      %s173 = scalar_select %p172, %s171, 3
      %s174 = smul.addr %s173, 4
      %s175 = scalar_lea.vmem %s3, %s174
      %s176 = smul.u32 2, %s14
      %v178 = vld [vmem:[%s169] sm:$0xff]
      %v179 = vld [vmem:[%s169 + $0x8] sm:$0xff]
      %v180 = vld [vmem:[%s169 + $0x10] sm:$0xff]
      %v181 = vld [vmem:[%s169 + $0x18] sm:$0xff]
      %v182 = vld [vmem:[%s169 + $0x20] sm:$0xff]
      %v183 = vld [vmem:[%s169 + $0x28] sm:$0xff]
      %v184 = vld [vmem:[%s169 + $0x30] sm:$0xff]
      %v185 = vld [vmem:[%s169 + $0x38] sm:$0xff]
      %v186 = vld [vmem:[%s169 + $0x40] sm:$0xff]
      %v187 = vld [vmem:[%s169 + $0x48] sm:$0xff]
      %v188 = vld [vmem:[%s1] sm:$0xf]
      %v189 = vld [vmem:[%s1 + $0x4] sm:$0xf]
      %v190 = vld [vmem:[%s1 + $0x8] sm:$0xf]
      %v191 = vld [vmem:[%s1 + $0xc] sm:$0xf]
      %v192 = vld [vmem:[%s1 + $0x10] sm:$0xf]
      %v193 = vld [vmem:[%s1 + $0x14] sm:$0xf]
      %v194 = vld [vmem:[%s1 + $0x18] sm:$0xf]
      %v195 = vld [vmem:[%s1 + $0x1c] sm:$0xf]
      %v196 = vld [vmem:[%s1 + $0x20] sm:$0xf]
      %v197 = vld [vmem:[%s1 + $0x24] sm:$0xf]
      %v198 = vld [vmem:[%s1 + $0x28] sm:$0xf]
      %v199 = vld [vmem:[%s1 + $0x2c] sm:$0xf]
      %v200 = vld [vmem:[%s1 + $0x30] sm:$0xf]
      %v201 = vld [vmem:[%s1 + $0x34] sm:$0xf]
      %v202 = vld [vmem:[%s1 + $0x38] sm:$0xf]
      %v203 = vld [vmem:[%s1 + $0x3c] sm:$0xf]
      %v204 = vld [vmem:[%s1 + $0x40] sm:$0xf]
      %v205 = vld [vmem:[%s1 + $0x44] sm:$0xf]
      %v206 = vld [vmem:[%s1 + $0x48] sm:$0xf]
      %v207 = vld [vmem:[%s1 + $0x4c] sm:$0xf]
      %v208 = vld [vmem:[%s1 + $0x50] sm:$0xf]
      %v209 = vld [vmem:[%s1 + $0x54] sm:$0xf]
      %v210 = vld [vmem:[%s1 + $0x58] sm:$0xf]
      %v211 = vld [vmem:[%s1 + $0x5c] sm:$0xf]
      %v212 = vld [vmem:[%s1 + $0x60] sm:$0xf]
      %v213 = vld [vmem:[%s1 + $0x64] sm:$0xf]
      %v214 = vld [vmem:[%s1 + $0x68] sm:$0xf]
      %v215 = vld [vmem:[%s1 + $0x6c] sm:$0xf]
      %v216 = vld [vmem:[%s1 + $0x70] sm:$0xf]
      %v217 = vld [vmem:[%s1 + $0x74] sm:$0xf]
      %v218 = vld [vmem:[%s1 + $0x78] sm:$0xf]
      %v219 = vld [vmem:[%s1 + $0x7c] sm:$0xf]
      %v220 = vld [vmem:[%s1 + $0x80] sm:$0xf]
      %v221 = vld [vmem:[%s1 + $0x84] sm:$0xf]
      %v222 = vld [vmem:[%s1 + $0x88] sm:$0xf]
      %v223 = vld [vmem:[%s1 + $0x8c] sm:$0xf]
      %v224 = vld [vmem:[%s1 + $0x90] sm:$0xf]
      %v225 = vld [vmem:[%s1 + $0x94] sm:$0xf]
      %v226 = vld [vmem:[%s1 + $0x98] sm:$0xf]
      %v227 = vld [vmem:[%s1 + $0x9c] sm:$0xf]
      %v228 = vld [vmem:[%s1 + $0xa0] sm:$0xf]
      %v229 = vld [vmem:[%s1 + $0xa4] sm:$0xf]
      %v230 = vld [vmem:[%s1 + $0xa8] sm:$0xf]
      %v231 = vld [vmem:[%s1 + $0xac] sm:$0xf]
      %v232 = vld [vmem:[%s1 + $0xb0] sm:$0xf]
      %v233 = vld [vmem:[%s1 + $0xb4] sm:$0xf]
      %v234 = vld [vmem:[%s1 + $0xb8] sm:$0xf]
      %v235 = vld [vmem:[%s1 + $0xbc] sm:$0xf]
      %v236 = vld [vmem:[%s1 + $0xc0] sm:$0xf]
      %v237 = vld [vmem:[%s1 + $0xc4] sm:$0xf]
      %v238 = vld [vmem:[%s1 + $0xc8] sm:$0xf]
      %v239 = vld [vmem:[%s1 + $0xcc] sm:$0xf]
      %v240 = vld [vmem:[%s1 + $0xd0] sm:$0xf]
      %v241 = vld [vmem:[%s1 + $0xd4] sm:$0xf]
      %v242 = vld [vmem:[%s1 + $0xd8] sm:$0xf]
      %v243 = vld [vmem:[%s1 + $0xdc] sm:$0xf]
      %v244 = vld [vmem:[%s1 + $0xe0] sm:$0xf]
      %v245 = vld [vmem:[%s1 + $0xe4] sm:$0xf]
      %v246 = vld [vmem:[%s1 + $0xe8] sm:$0xf]
      %v247 = vld [vmem:[%s1 + $0xec] sm:$0xf]
      %v248 = vld [vmem:[%s1 + $0xf0] sm:$0xf]
      %v249 = vld [vmem:[%s1 + $0xf4] sm:$0xf]
      %v250 = vld [vmem:[%s1 + $0xf8] sm:$0xf]
      %v251 = vld [vmem:[%s1 + $0xfc] sm:$0xf]
      %v252 = vld [vmem:[%s1 + $0x100] sm:$0xf]
      %v253 = vld [vmem:[%s1 + $0x104] sm:$0xf]
      %v254 = vld [vmem:[%s1 + $0x108] sm:$0xf]
      %v255 = vld [vmem:[%s1 + $0x10c] sm:$0xf]
      %v256 = vld [vmem:[%s1 + $0x110] sm:$0xf]
      %v257 = vld [vmem:[%s1 + $0x114] sm:$0xf]
      %v258 = vld [vmem:[%s1 + $0x118] sm:$0xf]
      %v259 = vld [vmem:[%s1 + $0x11c] sm:$0xf]
      %v260 = vld [vmem:[%s1 + $0x120] sm:$0xf]
      %v261 = vld [vmem:[%s1 + $0x124] sm:$0xf]
      %v262 = vld [vmem:[%s1 + $0x128] sm:$0xf]
      %v263 = vld [vmem:[%s1 + $0x12c] sm:$0xf]
      %v264 = vld [vmem:[%s1 + $0x130] sm:$0xf]
      %v265 = vld [vmem:[%s1 + $0x134] sm:$0xf]
      %v266 = vld [vmem:[%s1 + $0x138] sm:$0xf]
      %v267 = vld [vmem:[%s1 + $0x13c] sm:$0xf]
      %v268 = vld [vmem:[%s1 + $0x140] sm:$0xf]
      %v269 = vld [vmem:[%s1 + $0x144] sm:$0xf]
      %v270 = vld [vmem:[%s1 + $0x148] sm:$0xf]
      %v271 = vld [vmem:[%s1 + $0x14c] sm:$0xf]
      %v272 = vld [vmem:[%s1 + $0x150] sm:$0xf]
      %v273 = vld [vmem:[%s1 + $0x154] sm:$0xf]
      %v274 = vld [vmem:[%s1 + $0x158] sm:$0xf]
      %v275 = vld [vmem:[%s1 + $0x15c] sm:$0xf]
      %v276 = vld [vmem:[%s1 + $0x160] sm:$0xf]
      %v277 = vld [vmem:[%s1 + $0x164] sm:$0xf]
      %v278 = vld [vmem:[%s1 + $0x168] sm:$0xf]
      %v279 = vld [vmem:[%s1 + $0x16c] sm:$0xf]
      %v280 = vld [vmem:[%s1 + $0x170] sm:$0xf]
      %v281 = vld [vmem:[%s1 + $0x174] sm:$0xf]
      %v282 = vld [vmem:[%s1 + $0x178] sm:$0xf]
      %v283 = vld [vmem:[%s1 + $0x17c] sm:$0xf]
      %v284 = vld [vmem:[%s1 + $0x180] sm:$0xf]
      %v285 = vld [vmem:[%s1 + $0x184] sm:$0xf]
      %v286 = vld [vmem:[%s1 + $0x188] sm:$0xf]
      %v287 = vld [vmem:[%s1 + $0x18c] sm:$0xf]
      %v288 = vld [vmem:[%s1 + $0x190] sm:$0xf]
      %v289 = vld [vmem:[%s1 + $0x194] sm:$0xf]
      %v290 = vld [vmem:[%s1 + $0x198] sm:$0xf]
      %v291 = vld [vmem:[%s1 + $0x19c] sm:$0xf]
      %v292 = vld [vmem:[%s1 + $0x1a0] sm:$0xf]
      %v293 = vld [vmem:[%s1 + $0x1a4] sm:$0xf]
      %v294 = vld [vmem:[%s1 + $0x1a8] sm:$0xf]
      %v295 = vld [vmem:[%s1 + $0x1ac] sm:$0xf]
      %v296 = vld [vmem:[%s1 + $0x1b0] sm:$0xf]
      %v297 = vld [vmem:[%s1 + $0x1b4] sm:$0xf]
      %v298 = vld [vmem:[%s1 + $0x1b8] sm:$0xf]
      %v299 = vld [vmem:[%s1 + $0x1bc] sm:$0xf]
      %v300 = vld [vmem:[%s1 + $0x1c0] sm:$0xf]
      %v301 = vld [vmem:[%s1 + $0x1c4] sm:$0xf]
      %v302 = vld [vmem:[%s1 + $0x1c8] sm:$0xf]
      %v303 = vld [vmem:[%s1 + $0x1cc] sm:$0xf]
      %v304 = vld [vmem:[%s1 + $0x1d0] sm:$0xf]
      %v305 = vld [vmem:[%s1 + $0x1d4] sm:$0xf]
      %v306 = vld [vmem:[%s1 + $0x1d8] sm:$0xf]
      %v307 = vld [vmem:[%s1 + $0x1dc] sm:$0xf]
      %v308 = vld [vmem:[%s1 + $0x1e0] sm:$0xf]
      %v309 = vld [vmem:[%s1 + $0x1e4] sm:$0xf]
      %v310 = vld [vmem:[%s1 + $0x1e8] sm:$0xf]
      %v311 = vld [vmem:[%s1 + $0x1ec] sm:$0xf]
      %v312 = vld [vmem:[%s1 + $0x1f0] sm:$0xf]
      %v313 = vld [vmem:[%s1 + $0x1f4] sm:$0xf]
      %v314 = vld [vmem:[%s1 + $0x1f8] sm:$0xf]
      %v315 = vld [vmem:[%s1 + $0x1fc] sm:$0xf]
      %v316 = vld [vmem:[%s1 + $0x200] sm:$0xf]
      %v317 = vld [vmem:[%s1 + $0x204] sm:$0xf]
      %v318 = vld [vmem:[%s1 + $0x208] sm:$0xf]
      %v319 = vld [vmem:[%s1 + $0x20c] sm:$0xf]
      %v320 = vld [vmem:[%s1 + $0x210] sm:$0xf]
      %v321 = vld [vmem:[%s1 + $0x214] sm:$0xf]
      %v322 = vld [vmem:[%s1 + $0x218] sm:$0xf]
      %v323 = vld [vmem:[%s1 + $0x21c] sm:$0xf]
      %v324 = vld [vmem:[%s1 + $0x220] sm:$0xf]
      %v325 = vld [vmem:[%s1 + $0x224] sm:$0xf]
      %v326 = vld [vmem:[%s1 + $0x228] sm:$0xf]
      %v327 = vld [vmem:[%s1 + $0x22c] sm:$0xf]
      %v328 = vld [vmem:[%s1 + $0x230] sm:$0xf]
      %v329 = vld [vmem:[%s1 + $0x234] sm:$0xf]
      %v330 = vld [vmem:[%s1 + $0x238] sm:$0xf]
      %v331 = vld [vmem:[%s1 + $0x23c] sm:$0xf]
      %v332 = vld [vmem:[%s1 + $0x240] sm:$0xf]
      %v333 = vld [vmem:[%s1 + $0x244] sm:$0xf]
      %v334 = vld [vmem:[%s1 + $0x248] sm:$0xf]
      %v335 = vld [vmem:[%s1 + $0x24c] sm:$0xf]
      %v336 = vld [vmem:[%s1 + $0x250] sm:$0xf]
      %v337 = vld [vmem:[%s1 + $0x254] sm:$0xf]
      %v338 = vld [vmem:[%s2] sm:$0x1]
      %v340 = vlaneseq
      %v341 = vshrl.u32 %v340, 7
      %v342 = vsub.s32 0, %v341
      %v343 = vrot.slane %v338, %v342
      %v355 = vunpack.c.l.b16 %v178
      %v356 = vunpack.c.h.b16 %v178
      %v357 = vunpack.c.l.b16 %v179
      %v358 = vunpack.c.h.b16 %v179
      %v359 = vunpack.c.l.b16 %v180
      %v360 = vunpack.c.h.b16 %v180
      %v361 = vunpack.c.l.b16 %v181
      %v362 = vunpack.c.h.b16 %v181
      %v363 = vunpack.c.l.b16 %v182
      %v364 = vunpack.c.h.b16 %v182
      %v365 = vunpack.c.l.b16 %v183
      %v366 = vunpack.c.h.b16 %v183
      %v367 = vunpack.c.l.b16 %v184
      %v368 = vunpack.c.h.b16 %v184
      %v369 = vunpack.c.l.b16 %v185
      %v370 = vunpack.c.h.b16 %v185
      %v371 = vunpack.c.l.b16 %v186
      %v372 = vunpack.c.h.b16 %v186
      %v373 = vunpack.c.l.b16 %v187
      %v374 = vunpack.c.h.b16 %v187
      %v375 = vpack.c.b16 %v365, %v355
      %v376 = vpack.c.b16 %v366, %v356
      %v377 = vpack.c.b16 %v367, %v357
      %v378 = vpack.c.b16 %v368, %v358
      %v379 = vpack.c.b16 %v369, %v359
      %v380 = vpack.c.b16 %v370, %v360
      %v381 = vpack.c.b16 %v371, %v361
      %v382 = vpack.c.b16 %v372, %v362
      %v383 = vpack.c.b16 %v373, %v363
      %v384 = vpack.c.b16 %v374, %v364
      %v544 = vunpack.c.l.b16 %v188
      %v545 = vunpack.c.l.b16 %v189
      %v546 = vunpack.c.l.b16 %v190
      %v547 = vunpack.c.l.b16 %v191
      %v548 = vunpack.c.l.b16 %v192
      %v549 = vunpack.c.l.b16 %v193
      %v550 = vunpack.c.l.b16 %v194
      %v551 = vunpack.c.l.b16 %v195
      %v552 = vunpack.c.l.b16 %v196
      %v553 = vunpack.c.l.b16 %v197
      %v554 = vunpack.c.l.b16 %v198
      %v555 = vunpack.c.l.b16 %v199
      %v556 = vunpack.c.l.b16 %v200
      %v557 = vunpack.c.l.b16 %v201
      %v558 = vunpack.c.l.b16 %v202
      %v559 = vunpack.c.l.b16 %v203
      %v560 = vunpack.c.l.b16 %v204
      %v561 = vunpack.c.l.b16 %v205
      %v562 = vunpack.c.l.b16 %v206
      %v563 = vunpack.c.l.b16 %v207
      %v564 = vunpack.c.l.b16 %v208
      %v565 = vunpack.c.l.b16 %v209
      %v566 = vunpack.c.l.b16 %v210
      %v567 = vunpack.c.l.b16 %v211
      %v568 = vunpack.c.l.b16 %v212
      %v569 = vunpack.c.l.b16 %v213
      %v570 = vunpack.c.l.b16 %v214
      %v571 = vunpack.c.l.b16 %v215
      %v572 = vunpack.c.l.b16 %v216
      %v573 = vunpack.c.l.b16 %v217
      %v574 = vunpack.c.l.b16 %v218
      %v575 = vunpack.c.l.b16 %v219
      %v576 = vunpack.c.l.b16 %v220
      %v577 = vunpack.c.l.b16 %v221
      %v578 = vunpack.c.l.b16 %v222
      %v579 = vunpack.c.l.b16 %v223
      %v580 = vunpack.c.l.b16 %v224
      %v581 = vunpack.c.l.b16 %v225
      %v582 = vunpack.c.l.b16 %v226
      %v583 = vunpack.c.l.b16 %v227
      %v584 = vunpack.c.l.b16 %v228
      %v585 = vunpack.c.l.b16 %v229
      %v586 = vunpack.c.l.b16 %v230
      %v587 = vunpack.c.l.b16 %v231
      %v588 = vunpack.c.l.b16 %v232
      %v589 = vunpack.c.l.b16 %v233
      %v590 = vunpack.c.l.b16 %v234
      %v591 = vunpack.c.l.b16 %v235
      %v592 = vunpack.c.l.b16 %v236
      %v593 = vunpack.c.l.b16 %v237
      %v594 = vunpack.c.l.b16 %v238
      %v595 = vunpack.c.l.b16 %v239
      %v596 = vunpack.c.l.b16 %v240
      %v597 = vunpack.c.l.b16 %v241
      %v598 = vunpack.c.l.b16 %v242
      %v599 = vunpack.c.l.b16 %v243
      %v600 = vunpack.c.l.b16 %v244
      %v601 = vunpack.c.l.b16 %v245
      %v602 = vunpack.c.l.b16 %v246
      %v603 = vunpack.c.l.b16 %v247
      %v604 = vunpack.c.l.b16 %v248
      %v605 = vunpack.c.l.b16 %v249
      %v606 = vunpack.c.l.b16 %v250
      %v607 = vunpack.c.l.b16 %v251
      %v608 = vunpack.c.l.b16 %v252
      %v609 = vunpack.c.l.b16 %v253
      %v610 = vunpack.c.l.b16 %v254
      %v611 = vunpack.c.l.b16 %v255
      %v612 = vunpack.c.l.b16 %v256
      %v613 = vunpack.c.l.b16 %v257
      %v614 = vunpack.c.l.b16 %v258
      %v615 = vunpack.c.l.b16 %v259
      %v616 = vunpack.c.l.b16 %v260
      %v617 = vunpack.c.l.b16 %v261
      %v618 = vunpack.c.l.b16 %v262
      %v619 = vunpack.c.l.b16 %v263
      %v620 = vunpack.c.l.b16 %v264
      %v621 = vunpack.c.l.b16 %v265
      %v622 = vunpack.c.l.b16 %v266
      %v623 = vunpack.c.l.b16 %v267
      %v624 = vunpack.c.l.b16 %v268
      %v625 = vunpack.c.l.b16 %v269
      %v626 = vunpack.c.l.b16 %v270
      %v627 = vunpack.c.l.b16 %v271
      %v628 = vunpack.c.l.b16 %v272
      %v629 = vunpack.c.l.b16 %v273
      %v630 = vunpack.c.l.b16 %v274
      %v631 = vunpack.c.l.b16 %v275
      %v632 = vunpack.c.l.b16 %v276
      %v633 = vunpack.c.l.b16 %v277
      %v634 = vunpack.c.l.b16 %v278
      %v635 = vunpack.c.l.b16 %v279
      %v636 = vunpack.c.l.b16 %v280
      %v637 = vunpack.c.l.b16 %v281
      %v638 = vunpack.c.l.b16 %v282
      %v639 = vunpack.c.l.b16 %v283
      %v640 = vunpack.c.l.b16 %v284
      %v641 = vunpack.c.l.b16 %v285
      %v642 = vunpack.c.l.b16 %v286
      %v643 = vunpack.c.l.b16 %v287
      %v644 = vunpack.c.l.b16 %v288
      %v645 = vunpack.c.l.b16 %v289
      %v646 = vunpack.c.l.b16 %v290
      %v647 = vunpack.c.l.b16 %v291
      %v648 = vunpack.c.l.b16 %v292
      %v649 = vunpack.c.l.b16 %v293
      %v650 = vunpack.c.l.b16 %v294
      %v651 = vunpack.c.l.b16 %v295
      %v652 = vunpack.c.l.b16 %v296
      %v653 = vunpack.c.l.b16 %v297
      %v654 = vunpack.c.l.b16 %v298
      %v655 = vunpack.c.l.b16 %v299
      %v656 = vunpack.c.l.b16 %v300
      %v657 = vunpack.c.l.b16 %v301
      %v658 = vunpack.c.l.b16 %v302
      %v659 = vunpack.c.l.b16 %v303
      %v660 = vunpack.c.l.b16 %v304
      %v661 = vunpack.c.l.b16 %v305
      %v662 = vunpack.c.l.b16 %v306
      %v663 = vunpack.c.l.b16 %v307
      %v664 = vunpack.c.l.b16 %v308
      %v665 = vunpack.c.l.b16 %v309
      %v666 = vunpack.c.l.b16 %v310
      %v667 = vunpack.c.l.b16 %v311
      %v668 = vunpack.c.l.b16 %v312
      %v669 = vunpack.c.l.b16 %v313
      %v670 = vunpack.c.l.b16 %v314
      %v671 = vunpack.c.l.b16 %v315
      %v672 = vunpack.c.l.b16 %v316
      %v673 = vunpack.c.l.b16 %v317
      %v674 = vunpack.c.l.b16 %v318
      %v675 = vunpack.c.l.b16 %v319
      %v676 = vunpack.c.l.b16 %v320
      %v677 = vunpack.c.l.b16 %v321
      %v678 = vunpack.c.l.b16 %v322
      %v679 = vunpack.c.l.b16 %v323
      %v680 = vunpack.c.l.b16 %v324
      %v681 = vunpack.c.l.b16 %v325
      %v682 = vunpack.c.l.b16 %v326
      %v683 = vunpack.c.l.b16 %v327
      %v684 = vunpack.c.l.b16 %v328
      %v685 = vunpack.c.l.b16 %v329
      %v686 = vunpack.c.l.b16 %v330
      %v687 = vunpack.c.l.b16 %v331
      %v688 = vunpack.c.l.b16 %v332
      %v689 = vunpack.c.l.b16 %v333
      %v690 = vunpack.c.l.b16 %v334
      %v691 = vunpack.c.l.b16 %v335
      %v692 = vunpack.c.l.b16 %v336
      %v693 = vunpack.c.l.b16 %v337
      %v694 = vpack.c.b16 %v545, %v544
      %v695 = vpack.c.b16 %v547, %v546
      %v696 = vpack.c.b16 %v549, %v548
      %v697 = vpack.c.b16 %v551, %v550
      %v698 = vpack.c.b16 %v553, %v552
      %v699 = vpack.c.b16 %v555, %v554
      %v700 = vpack.c.b16 %v557, %v556
      %v701 = vpack.c.b16 %v559, %v558
      %v702 = vpack.c.b16 %v561, %v560
      %v703 = vpack.c.b16 %v563, %v562
      %v704 = vpack.c.b16 %v565, %v564
      %v705 = vpack.c.b16 %v567, %v566
      %v706 = vpack.c.b16 %v569, %v568
      %v707 = vpack.c.b16 %v571, %v570
      %v708 = vpack.c.b16 %v573, %v572
      %v709 = vpack.c.b16 %v575, %v574
      %v710 = vpack.c.b16 %v577, %v576
      %v711 = vpack.c.b16 %v579, %v578
      %v712 = vpack.c.b16 %v581, %v580
      %v713 = vpack.c.b16 %v583, %v582
      %v714 = vpack.c.b16 %v585, %v584
      %v715 = vpack.c.b16 %v587, %v586
      %v716 = vpack.c.b16 %v589, %v588
      %v717 = vpack.c.b16 %v591, %v590
      %v718 = vpack.c.b16 %v593, %v592
      %v719 = vpack.c.b16 %v595, %v594
      %v720 = vpack.c.b16 %v597, %v596
      %v721 = vpack.c.b16 %v599, %v598
      %v722 = vpack.c.b16 %v601, %v600
      %v723 = vpack.c.b16 %v603, %v602
      %v724 = vpack.c.b16 %v605, %v604
      %v725 = vpack.c.b16 %v607, %v606
      %v726 = vpack.c.b16 %v609, %v608
      %v727 = vpack.c.b16 %v611, %v610
      %v728 = vpack.c.b16 %v613, %v612
      %v729 = vpack.c.b16 %v615, %v614
      %v730 = vpack.c.b16 %v617, %v616
      %v731 = vpack.c.b16 %v619, %v618
      %v732 = vpack.c.b16 %v621, %v620
      %v733 = vpack.c.b16 %v623, %v622
      %v734 = vpack.c.b16 %v625, %v624
      %v735 = vpack.c.b16 %v627, %v626
      %v736 = vpack.c.b16 %v629, %v628
      %v737 = vpack.c.b16 %v631, %v630
      %v738 = vpack.c.b16 %v633, %v632
      %v739 = vpack.c.b16 %v635, %v634
      %v740 = vpack.c.b16 %v637, %v636
      %v741 = vpack.c.b16 %v639, %v638
      %v742 = vpack.c.b16 %v641, %v640
      %v743 = vpack.c.b16 %v643, %v642
      %v744 = vpack.c.b16 %v645, %v644
      %v745 = vpack.c.b16 %v647, %v646
      %v746 = vpack.c.b16 %v649, %v648
      %v747 = vpack.c.b16 %v651, %v650
      %v748 = vpack.c.b16 %v653, %v652
      %v749 = vpack.c.b16 %v655, %v654
      %v750 = vpack.c.b16 %v657, %v656
      %v751 = vpack.c.b16 %v659, %v658
      %v752 = vpack.c.b16 %v661, %v660
      %v753 = vpack.c.b16 %v663, %v662
      %v754 = vpack.c.b16 %v665, %v664
      %v755 = vpack.c.b16 %v667, %v666
      %v756 = vpack.c.b16 %v669, %v668
      %v757 = vpack.c.b16 %v671, %v670
      %v758 = vpack.c.b16 %v673, %v672
      %v759 = vpack.c.b16 %v675, %v674
      %v760 = vpack.c.b16 %v677, %v676
      %v761 = vpack.c.b16 %v679, %v678
      %v762 = vpack.c.b16 %v681, %v680
      %v763 = vpack.c.b16 %v683, %v682
      %v764 = vpack.c.b16 %v685, %v684
      %v765 = vpack.c.b16 %v687, %v686
      %v766 = vpack.c.b16 %v689, %v688
      %v767 = vpack.c.b16 %v691, %v690
      %v768 = vpack.c.b16 %v693, %v692
      %vm844 = vcmask 392192
      %v846 = vsel %vm844, %v384, 0
      %848 = vmatprep.subr.bf16.mxu0 0
      %849 = vmatpush1.bf16.msra.mxu0 %v701
      %850 = vmatprep.subr.bf16.mxu0 0
      %851 = vmatpush1.bf16.msra.mxu0 %v700
      %852 = vmatprep.subr.bf16.mxu0 0
      %853 = vmatpush1.bf16.msra.mxu0 %v699
      %854 = vmatprep.subr.bf16.mxu0 0
      %855 = vmatpush1.bf16.msra.mxu0 %v698
      %856 = vmatprep.subr.bf16.mxu0 0
      %857 = vmatpush1.bf16.msra.mxu0 %v697
      %858 = vmatprep.subr.bf16.mxu0 0
      %859 = vmatpush1.bf16.msra.mxu0 %v696
      %860 = vmatprep.subr.bf16.mxu0 0
      %861 = vmatpush1.bf16.msra.mxu0 %v695
      %862 = vmatprep.subr.bf16.mxu0 0
      %863 = vmatpush1.bf16.msra.mxu0 %v694
      %864 = vmatprep.subr.bf16.mxu0 0
      %865 = vmatpush2.bf16.msra.mxu0 %v709
      %866 = vmatprep.subr.bf16.mxu0 0
      %867 = vmatpush2.bf16.msra.mxu0 %v708
      %868 = vmatprep.subr.bf16.mxu0 0
      %869 = vmatpush2.bf16.msra.mxu0 %v707
      %870 = vmatprep.subr.bf16.mxu0 0
      %871 = vmatpush2.bf16.msra.mxu0 %v706
      %872 = vmatprep.subr.bf16.mxu0 0
      %873 = vmatpush2.bf16.msra.mxu0 %v705
      %874 = vmatprep.subr.bf16.mxu0 0
      %875 = vmatpush2.bf16.msra.mxu0 %v704
      %876 = vmatprep.subr.bf16.mxu0 0
      %877 = vmatpush2.bf16.msra.mxu0 %v703
      %878 = vmatprep.subr.bf16.mxu0 0
      %879 = vmatpush2.bf16.msra.mxu0 %v702
      %880 = vmatprep.mubr.bf16.mxu0 %v376
      %881 = vmatmul.mubr.bf16.gmra.mxu0 %v375
      %v882 = vpop.f32.mrf.mxu0
      %v883 = vadd.f32 %v343, %v882
      %v884 = vpop.f32.mrf.mxu0
      %v885 = vpop.f32.mrf.mxu0
      %v886 = vadd.f32 %v343, %v885
      %v887 = vpop.f32.mrf.mxu0
      %888 = vdwg.mxu0
      %889 = vmatprep.subr.bf16.mxu0 0
      %890 = vmatpush1.bf16.msra.mxu0 %v717
      %891 = vmatprep.subr.bf16.mxu0 0
      %892 = vmatpush1.bf16.msra.mxu0 %v716
      %893 = vmatprep.subr.bf16.mxu0 0
      %894 = vmatpush1.bf16.msra.mxu0 %v715
      %895 = vmatprep.subr.bf16.mxu0 0
      %896 = vmatpush1.bf16.msra.mxu0 %v714
      %897 = vmatprep.subr.bf16.mxu0 0
      %898 = vmatpush1.bf16.msra.mxu0 %v713
      %899 = vmatprep.subr.bf16.mxu0 0
      %900 = vmatpush1.bf16.msra.mxu0 %v712
      %901 = vmatprep.subr.bf16.mxu0 0
      %902 = vmatpush1.bf16.msra.mxu0 %v711
      %903 = vmatprep.subr.bf16.mxu0 0
      %904 = vmatpush1.bf16.msra.mxu0 %v710
      %905 = vmatprep.subr.bf16.mxu0 0
      %906 = vmatpush2.bf16.msra.mxu0 %v725
      %907 = vmatprep.subr.bf16.mxu0 0
      %908 = vmatpush2.bf16.msra.mxu0 %v724
      %909 = vmatprep.subr.bf16.mxu0 0
      %910 = vmatpush2.bf16.msra.mxu0 %v723
      %911 = vmatprep.subr.bf16.mxu0 0
      %912 = vmatpush2.bf16.msra.mxu0 %v722
      %913 = vmatprep.subr.bf16.mxu0 0
      %914 = vmatpush2.bf16.msra.mxu0 %v721
      %915 = vmatprep.subr.bf16.mxu0 0
      %916 = vmatpush2.bf16.msra.mxu0 %v720
      %917 = vmatprep.subr.bf16.mxu0 0
      %918 = vmatpush2.bf16.msra.mxu0 %v719
      %919 = vmatprep.subr.bf16.mxu0 0
      %920 = vmatpush2.bf16.msra.mxu0 %v718
      %921 = vmatprep.mubr.bf16.mxu0 %v378
      %922 = vmatmul.mubr.bf16.gmra.mxu0 %v377
      %v923 = vpop.f32.mrf.mxu0
      %v924 = vadd.f32 %v883, %v923
      %v925 = vpop.f32.mrf.mxu0
      %v926 = vpop.f32.mrf.mxu0
      %v927 = vadd.f32 %v886, %v926
      %v928 = vpop.f32.mrf.mxu0
      %929 = vdwg.mxu0
      %930 = vmatprep.subr.bf16.mxu0 0
      %931 = vmatpush1.bf16.msra.mxu0 %v733
      %932 = vmatprep.subr.bf16.mxu0 0
      %933 = vmatpush1.bf16.msra.mxu0 %v732
      %934 = vmatprep.subr.bf16.mxu0 0
      %935 = vmatpush1.bf16.msra.mxu0 %v731
      %936 = vmatprep.subr.bf16.mxu0 0
      %937 = vmatpush1.bf16.msra.mxu0 %v730
      %938 = vmatprep.subr.bf16.mxu0 0
      %939 = vmatpush1.bf16.msra.mxu0 %v729
      %940 = vmatprep.subr.bf16.mxu0 0
      %941 = vmatpush1.bf16.msra.mxu0 %v728
      %942 = vmatprep.subr.bf16.mxu0 0
      %943 = vmatpush1.bf16.msra.mxu0 %v727
      %944 = vmatprep.subr.bf16.mxu0 0
      %945 = vmatpush1.bf16.msra.mxu0 %v726
      %946 = vmatprep.subr.bf16.mxu0 0
      %947 = vmatpush2.bf16.msra.mxu0 %v741
      %948 = vmatprep.subr.bf16.mxu0 0
      %949 = vmatpush2.bf16.msra.mxu0 %v740
      %950 = vmatprep.subr.bf16.mxu0 0
      %951 = vmatpush2.bf16.msra.mxu0 %v739
      %952 = vmatprep.subr.bf16.mxu0 0
      %953 = vmatpush2.bf16.msra.mxu0 %v738
      %954 = vmatprep.subr.bf16.mxu0 0
      %955 = vmatpush2.bf16.msra.mxu0 %v737
      %956 = vmatprep.subr.bf16.mxu0 0
      %957 = vmatpush2.bf16.msra.mxu0 %v736
      %958 = vmatprep.subr.bf16.mxu0 0
      %959 = vmatpush2.bf16.msra.mxu0 %v735
      %960 = vmatprep.subr.bf16.mxu0 0
      %961 = vmatpush2.bf16.msra.mxu0 %v734
      %962 = vmatprep.mubr.bf16.mxu0 %v380
      %963 = vmatmul.mubr.bf16.gmra.mxu0 %v379
      %v964 = vpop.f32.mrf.mxu0
      %v965 = vadd.f32 %v924, %v964
      %v966 = vpop.f32.mrf.mxu0
      %v967 = vpop.f32.mrf.mxu0
      %v968 = vadd.f32 %v927, %v967
      %v969 = vpop.f32.mrf.mxu0
      %970 = vdwg.mxu0
      %971 = vmatprep.subr.bf16.mxu0 0
      %972 = vmatpush1.bf16.msra.mxu0 %v749
      %973 = vmatprep.subr.bf16.mxu0 0
      %974 = vmatpush1.bf16.msra.mxu0 %v748
      %975 = vmatprep.subr.bf16.mxu0 0
      %976 = vmatpush1.bf16.msra.mxu0 %v747
      %977 = vmatprep.subr.bf16.mxu0 0
      %978 = vmatpush1.bf16.msra.mxu0 %v746
      %979 = vmatprep.subr.bf16.mxu0 0
      %980 = vmatpush1.bf16.msra.mxu0 %v745
      %981 = vmatprep.subr.bf16.mxu0 0
      %982 = vmatpush1.bf16.msra.mxu0 %v744
      %983 = vmatprep.subr.bf16.mxu0 0
      %984 = vmatpush1.bf16.msra.mxu0 %v743
      %985 = vmatprep.subr.bf16.mxu0 0
      %986 = vmatpush1.bf16.msra.mxu0 %v742
      %987 = vmatprep.subr.bf16.mxu0 0
      %988 = vmatpush2.bf16.msra.mxu0 %v757
      %989 = vmatprep.subr.bf16.mxu0 0
      %990 = vmatpush2.bf16.msra.mxu0 %v756
      %991 = vmatprep.subr.bf16.mxu0 0
      %992 = vmatpush2.bf16.msra.mxu0 %v755
      %993 = vmatprep.subr.bf16.mxu0 0
      %994 = vmatpush2.bf16.msra.mxu0 %v754
      %995 = vmatprep.subr.bf16.mxu0 0
      %996 = vmatpush2.bf16.msra.mxu0 %v753
      %997 = vmatprep.subr.bf16.mxu0 0
      %998 = vmatpush2.bf16.msra.mxu0 %v752
      %999 = vmatprep.subr.bf16.mxu0 0
      %1000 = vmatpush2.bf16.msra.mxu0 %v751
      %1001 = vmatprep.subr.bf16.mxu0 0
      %1002 = vmatpush2.bf16.msra.mxu0 %v750
      %1003 = vmatprep.mubr.bf16.mxu0 %v382
      %1004 = vmatmul.mubr.bf16.gmra.mxu0 %v381
      %v1005 = vpop.f32.mrf.mxu0
      %v1006 = vadd.f32 %v965, %v1005
      %v1007 = vpop.f32.mrf.mxu0
      %v1008 = vpop.f32.mrf.mxu0
      %v1009 = vadd.f32 %v968, %v1008
      %v1010 = vpop.f32.mrf.mxu0
      %1011 = vdwg.mxu0
      %1012 = vmatprep.subr.bf16.mxu0 0
      %1013 = vmatpush1.bf16.msra.mxu0 %v765
      %1014 = vmatprep.subr.bf16.mxu0 0
      %1015 = vmatpush1.bf16.msra.mxu0 %v764
      %1016 = vmatprep.subr.bf16.mxu0 0
      %1017 = vmatpush1.bf16.msra.mxu0 %v763
      %1018 = vmatprep.subr.bf16.mxu0 0
      %1019 = vmatpush1.bf16.msra.mxu0 %v762
      %1020 = vmatprep.subr.bf16.mxu0 0
      %1021 = vmatpush1.bf16.msra.mxu0 %v761
      %1022 = vmatprep.subr.bf16.mxu0 0
      %1023 = vmatpush1.bf16.msra.mxu0 %v760
      %1024 = vmatprep.subr.bf16.mxu0 0
      %1025 = vmatpush1.bf16.msra.mxu0 %v759
      %1026 = vmatprep.subr.bf16.mxu0 0
      %1027 = vmatpush1.bf16.msra.mxu0 %v758
      %1028 = vmatprep.subr.bf16.mxu0 0
      %1029 = vmatpush2.bf16.msra.mxu0 0
      %1030 = vmatprep.subr.bf16.mxu0 0
      %1031 = vmatpush2.bf16.msra.mxu0 0
      %1032 = vmatprep.subr.bf16.mxu0 0
      %1033 = vmatpush2.bf16.msra.mxu0 0
      %1034 = vmatprep.subr.bf16.mxu0 0
      %1035 = vmatpush2.bf16.msra.mxu0 0
      %1036 = vmatprep.subr.bf16.mxu0 0
      %1037 = vmatpush2.bf16.msra.mxu0 0
      %1038 = vmatprep.subr.bf16.mxu0 0
      %1039 = vmatpush2.bf16.msra.mxu0 %v768
      %1040 = vmatprep.subr.bf16.mxu0 0
      %1041 = vmatpush2.bf16.msra.mxu0 %v767
      %1042 = vmatprep.subr.bf16.mxu0 0
      %1043 = vmatpush2.bf16.msra.mxu0 %v766
      %1044 = vmatprep.mubr.bf16.mxu0 %v846
      %1045 = vmatmul.mubr.bf16.gmra.mxu0 %v383
      %v1046 = vpop.f32.mrf.mxu0
      %v1047 = vadd.f32 %v1006, %v1046
      %v1048 = vpop.f32.mrf.mxu0
      %v1049 = vpop.f32.mrf.mxu0
      %v1050 = vadd.f32 %v1009, %v1049
      %v1051 = vpop.f32.mrf.mxu0
      %1052 = vdwg.mxu0
      %vm1053 = vcmp.ge.f32.partialorder %v1047, 0.0
      %vm1054 = vcmp.ge.f32.partialorder %v1050, 0.0
      %v1055 = vmul.f32 %v1047, 0.2
      %v1056 = vmul.f32 %v1050, 0.2
      %v1057 = vsel %vm1053, %v1047, %v1055
      %v1058 = vsel %vm1054, %v1050, %v1056
      %v1059 = vpack.c.bf16 %v1058, %v1057
      %v1061 = vunpack.c.l.b16 %v1059
      %v1062 = vunpack.c.h.b16 %v1059
      %v1063 = vpack.c.b16 %v1061, %v1061
      %v1064 = vpack.c.b16 %v1062, %v1062
      %1067 = vst [vmem:[%s175] sm:$0xf] %v1063
      %1068 = vst [vmem:[%s175 + $0x4] sm:$0xf] %v1064
      %s1069 = smul.u32 2, %s14
      %p1070 = scmp.lt.s32.totalorder %s1069, 3
      %s1071 = scalar_select %p1070, %s1069, 3
      %s1072 = smul.addr %s1071, 4
      %s1073 = scalar_lea.vmem %s3, %s1072
      // Predicated region
      $region33: #{_lambda_.7} parent=31 // pred_check
        %p1074 = pneg %p100
      $region34: #{_lambda_.7} parent=31 // pred_check_branch
        %1076 = sbr.rel (%p1074) target = $region36
      $region35: #{_lambda_.7} parent=31 // pred_region
        %s1077 = smul.u32 2, %s14
      $region36: #{_lambda_.7} parent=31 // pred_fallthru
        _
    $region32: #{_lambda_.7} parent=5 // pred_fallthru
      _
    %p1078 = scmp.le.s32.totalorder 2, %s9
    // Predicated region
    $region37: #{_lambda_.7} parent=5 // pred_check
      %p1079 = pneg %p1078
    $region38: #{_lambda_.7} parent=5 // pred_check_branch
      %1081 = sbr.rel (%p1079) target = $region40
    $region39: #{_lambda_.7} parent=5 // pred_region
      %s1082 = ssub.s32 %s9, 2
      // Predicated region
      $region41: #{_lambda_.7} parent=39 // pred_check
        %p1083 = pneg %p106
      $region42: #{_lambda_.7} parent=39 // pred_check_branch
        %1085 = sbr.rel (%p1083) target = $region44
      $region43: #{_lambda_.7} parent=39 // pred_region
        %s1086 = smul.u32 2, %s15
        %p1087 = scmp.lt.s32.totalorder %s1086, 3
        %s1088 = scalar_select %p1087, %s1086, 3
        %s1089 = smul.addr %s1088, 4
        %s1090 = scalar_lea.vmem %s3, %s1089
      $region44: #{_lambda_.7} parent=39 // pred_fallthru
        _
    $region40: #{_lambda_.7} parent=5 // pred_fallthru
      _
  $region6: #{_lambda_.7} parent=0 // loop_footer
    %s13 = sadd.s32 1, %s9
  $region7: #{_lambda_.7} parent=0 // loop_footer_branch
    %8 = sbr.rel target = $region3
  $region8: #{_lambda_.7} parent=0 // loop_exit
    _

// kernel: _lambda_.8
$region0: #{_lambda_.8}
  #allocation0 [shape = 'u32[]', space=smem, size = 0x4, offset = 0x4, fixed_abs, tag = 'smem constant byte address 0x4 - core index']
  #allocation1 [shape = 'u32[144,128]{1,0:T(1,128)}', space=vmem, size = 0x12000, scoped, tag = 'internal scratch']
  %s0 = inlined_call_operand.vmem [shape: bf16[128,1200], index: 0, kind: input, shape index: {}]
  %s1 = inlined_call_operand.vmem [shape: bf16[1200,128], index: 1, kind: input, shape index: {}]
  %s2 = inlined_call_operand.vmem [shape: f32[1,128], index: 2, kind: input, shape index: {}]
  %s3 = inlined_call_operand.vmem [shape: bf16[128,128], index: 3, kind: output, shape index: {}]
  %s4 = sld [smem:[#allocation0]]
  $region45: #{_lambda_.8} parent=0
    _
  %s6 = ssub.s32 1, %s4
  %s7 = scalar_select 0, %s6, %s4
  loop: start=0, step=1, limit=6
  $region2: #{_lambda_.8} parent=0 // loop_pre_header
    _
  $region3: #{_lambda_.8} parent=0 // loop_header
    %s9 = sphi 0, %s13
    %p10 = scmp.ge.s32.totalorder %s9, 6
    %s19 = sphi 0, %s21
    %s22 = sphi 0, %s19
    %s23 = sphi 0, %s22
    %s39 = sphi 0, %s23
    %s43 = sphi 0, %s43
    %s45 = sphi 0, %s43
    %s46 = sphi 0, %s45
    %s60 = sphi 0, %s46
    %s64 = sphi 0, %s64
    %s66 = sphi 0, %s64
    %s67 = sphi 0, %s66
    %s81 = sphi 0, %s67
    %s87 = sphi 0, %s89
    %s90 = sphi 0, %s87
    %s91 = sphi 0, %s90
    %s107 = sphi 0, %s91
  $region4: #{_lambda_.8} parent=0 // loop_header_branch
    %12 = sbr.rel (%p10) target = $region8
  $region5: #{_lambda_.8} parent=0 // loop_body
    %s14 = ssub.s32 %s9, 1
    %s15 = ssub.s32 %s9, 2
    %s16 = sadd.s32 %s9, 1
    %s17 = ssub.s32 %s9, %s16
    %p18 = scmp.eq.s32.totalorder %s17, 0
    %s20 = sadd.s32 %s19, 1
    %s21 = scalar_select %p18, %s19, %s20
    %p24 = pneg %p18
    %p25 = scmp.eq.s32.totalorder %s9, 3
    %p26 = por %p24, %p25
    %p27 = scmp.ne.s32.totalorder %s19, %s22
    %p28 = scmp.eq.s32.totalorder %s9, 0
    %p29 = por %p27, %p28
    %p30 = scmp.ne.s32.totalorder %s19, %s22
    %p31 = scmp.eq.s32.totalorder %s14, 3
    %p32 = por %p30, %p31
    %p33 = scmp.ne.s32.totalorder %s22, %s23
    %p34 = scmp.eq.s32.totalorder %s14, 0
    %p35 = por %p33, %p34
    %p36 = scmp.ne.s32.totalorder %s22, %s23
    %p37 = scmp.eq.s32.totalorder %s15, 3
    %p38 = por %p36, %p37
    %p40 = scmp.ne.s32.totalorder %s23, %s39
    %p41 = scmp.eq.s32.totalorder %s15, 0
    %p42 = por %p40, %p41
    %s44 = sadd.s32 %s43, 1
    %p47 = scmp.eq.s32.totalorder %s9, 3
    %p48 = scmp.ne.s32.totalorder %s43, %s45
    %p49 = scmp.eq.s32.totalorder %s9, 0
    %p50 = por %p48, %p49
    %p51 = scmp.ne.s32.totalorder %s43, %s45
    %p52 = scmp.eq.s32.totalorder %s14, 3
    %p53 = por %p51, %p52
    %p54 = scmp.ne.s32.totalorder %s45, %s46
    %p55 = scmp.eq.s32.totalorder %s14, 0
    %p56 = por %p54, %p55
    %p57 = scmp.ne.s32.totalorder %s45, %s46
    %p58 = scmp.eq.s32.totalorder %s15, 3
    %p59 = por %p57, %p58
    %p61 = scmp.ne.s32.totalorder %s46, %s60
    %p62 = scmp.eq.s32.totalorder %s15, 0
    %p63 = por %p61, %p62
    %s65 = sadd.s32 %s64, 1
    %p68 = scmp.eq.s32.totalorder %s9, 3
    %p69 = scmp.ne.s32.totalorder %s64, %s66
    %p70 = scmp.eq.s32.totalorder %s9, 0
    %p71 = por %p69, %p70
    %p72 = scmp.ne.s32.totalorder %s64, %s66
    %p73 = scmp.eq.s32.totalorder %s14, 3
    %p74 = por %p72, %p73
    %p75 = scmp.ne.s32.totalorder %s66, %s67
    %p76 = scmp.eq.s32.totalorder %s14, 0
    %p77 = por %p75, %p76
    %p78 = scmp.ne.s32.totalorder %s66, %s67
    %p79 = scmp.eq.s32.totalorder %s15, 3
    %p80 = por %p78, %p79
    %p82 = scmp.ne.s32.totalorder %s67, %s81
    %p83 = scmp.eq.s32.totalorder %s15, 0
    %p84 = por %p82, %p83
    %s85 = ssub.s32 %s9, %s16
    %p86 = scmp.eq.s32.totalorder %s85, 0
    %s88 = sadd.s32 %s87, 1
    %s89 = scalar_select %p86, %s87, %s88
    %p92 = pneg %p86
    %p93 = scmp.eq.s32.totalorder %s9, 3
    %p94 = por %p92, %p93
    %p95 = scmp.ne.s32.totalorder %s87, %s90
    %p96 = scmp.eq.s32.totalorder %s9, 0
    %p97 = por %p95, %p96
    %p98 = scmp.ne.s32.totalorder %s87, %s90
    %p99 = scmp.eq.s32.totalorder %s14, 3
    %p100 = por %p98, %p99
    %p101 = scmp.ne.s32.totalorder %s90, %s91
    %p102 = scmp.eq.s32.totalorder %s14, 0
    %p103 = por %p101, %p102
    %p104 = scmp.ne.s32.totalorder %s90, %s91
    %p105 = scmp.eq.s32.totalorder %s15, 3
    %p106 = por %p104, %p105
    %p108 = scmp.ne.s32.totalorder %s91, %s107
    %p109 = scmp.eq.s32.totalorder %s15, 0
    %p110 = por %p108, %p109
    %p111 = scmp.le.s32.totalorder 1, %s9
    %p112 = scmp.lt.s32.totalorder %s9, 5
    %p113 = pnand %p111, %p112
    %p114 = pneg %p113
    // Predicated region
    $region9: #{_lambda_.8} parent=5 // pred_check
      _
    $region10: #{_lambda_.8} parent=5 // pred_check_branch
      %116 = sbr.rel (%p113) target = $region12
    $region11: #{_lambda_.8} parent=5 // pred_region
      %s117 = ssub.s32 %s9, 1
      // Predicated region
      $region13: #{_lambda_.8} parent=11 // pred_check
        %p118 = pneg %p56
      $region14: #{_lambda_.8} parent=11 // pred_check_branch
        %120 = sbr.rel (%p118) target = $region16
      $region15: #{_lambda_.8} parent=11 // pred_region
        _
      $region16: #{_lambda_.8} parent=11 // pred_fallthru
        _
      // Predicated region
      $region17: #{_lambda_.8} parent=11 // pred_check
        %p121 = pneg %p77
      $region18: #{_lambda_.8} parent=11 // pred_check_branch
        %123 = sbr.rel (%p121) target = $region20
      $region19: #{_lambda_.8} parent=11 // pred_region
        _
      $region20: #{_lambda_.8} parent=11 // pred_fallthru
        _
    $region12: #{_lambda_.8} parent=5 // pred_fallthru
      _
    %p124 = scmp.lt.s32.totalorder %s9, 4
    // Predicated region
    $region21: #{_lambda_.8} parent=5 // pred_check
      %p125 = pneg %p124
    $region22: #{_lambda_.8} parent=5 // pred_check_branch
      %127 = sbr.rel (%p125) target = $region24
    $region23: #{_lambda_.8} parent=5 // pred_region
      // Predicated region
      $region25: #{_lambda_.8} parent=23 // pred_check
        %p128 = pneg %p29
      $region26: #{_lambda_.8} parent=23 // pred_check_branch
        %130 = sbr.rel (%p128) target = $region28
      $region27: #{_lambda_.8} parent=23 // pred_region
        %s131 = smul.u32 4, %s9
        %p132 = scmp.lt.s32.totalorder %s131, 15
        %s133 = scalar_select %p132, %s131, 15
        %s134 = smul.addr %s133, 10
        %s135 = smul.addr %s134, 4
        %s136 = scalar_lea.vmem %s0, %s135
        %s137 = smul.u32 4, %s9
      $region28: #{_lambda_.8} parent=23 // pred_fallthru
        _
    $region24: #{_lambda_.8} parent=5 // pred_fallthru
      _
    %p138 = scmp.le.s32.totalorder 1, %s9
    %p139 = scmp.lt.s32.totalorder %s9, 5
    %p140 = pnand %p138, %p139
    %p141 = pneg %p140
    // Predicated region
    $region29: #{_lambda_.8} parent=5 // pred_check
      _
    $region30: #{_lambda_.8} parent=5 // pred_check_branch
      %143 = sbr.rel (%p140) target = $region32
    $region31: #{_lambda_.8} parent=5 // pred_region
      %s144 = ssub.s32 %s9, 1
      %s145 = smul.u32 4, %s14
      %p146 = scmp.lt.s32.totalorder %s145, 15
      %s147 = scalar_select %p146, %s145, 15
      %s148 = smul.addr %s147, 10
      %s149 = smul.addr %s148, 4
      %s150 = scalar_lea.vmem %s0, %s149
      %p151 = pneg %p35
      %p152 = pneg %p32
      %p153 = pneg %p56
      %p154 = pneg %p53
      %p155 = pneg %p77
      %p156 = pneg %p74
      %p157 = pneg %p103
      %p158 = pneg %p100
      %s159 = smul.u32 4, %s14
      %p160 = scmp.lt.s32.totalorder %s159, 15
      %s161 = scalar_select %p160, %s159, 15
      %s162 = smul.addr %s161, 4
      %s163 = scalar_lea.vmem %s3, %s162
      %s164 = smul.u32 4, %s14
      %p165 = scmp.lt.s32.totalorder %s164, 15
      %s166 = scalar_select %p165, %s164, 15
      %s167 = smul.addr %s166, 10
      %s168 = smul.addr %s167, 4
      %s169 = scalar_lea.vmem %s0, %s168
      %s170 = smul.u32 4, %s14
      %s171 = smul.u32 4, %s14
      %p172 = scmp.lt.s32.totalorder %s171, 15
      %s173 = scalar_select %p172, %s171, 15
      %s174 = smul.addr %s173, 4
      %s175 = scalar_lea.vmem %s3, %s174
      %s176 = smul.u32 4, %s14
      %v178 = vld [vmem:[%s169] sm:$0xff]
      %v179 = vld [vmem:[%s169 + $0x8] sm:$0xff]
      %v180 = vld [vmem:[%s169 + $0x10] sm:$0xff]
      %v181 = vld [vmem:[%s169 + $0x18] sm:$0xff]
      %v182 = vld [vmem:[%s169 + $0x20] sm:$0xff]
      %v183 = vld [vmem:[%s169 + $0x28] sm:$0xff]
      %v184 = vld [vmem:[%s169 + $0x30] sm:$0xff]
      %v185 = vld [vmem:[%s169 + $0x38] sm:$0xff]
      %v186 = vld [vmem:[%s169 + $0x40] sm:$0xff]
      %v187 = vld [vmem:[%s169 + $0x48] sm:$0xff]
      %v188 = vld [vmem:[%s169 + $0x50] sm:$0xff]
      %v189 = vld [vmem:[%s169 + $0x58] sm:$0xff]
      %v190 = vld [vmem:[%s169 + $0x60] sm:$0xff]
      %v191 = vld [vmem:[%s169 + $0x68] sm:$0xff]
      %v192 = vld [vmem:[%s169 + $0x70] sm:$0xff]
      %v193 = vld [vmem:[%s169 + $0x78] sm:$0xff]
      %v194 = vld [vmem:[%s169 + $0x80] sm:$0xff]
      %v195 = vld [vmem:[%s169 + $0x88] sm:$0xff]
      %v196 = vld [vmem:[%s169 + $0x90] sm:$0xff]
      %v197 = vld [vmem:[%s169 + $0x98] sm:$0xff]
      %v198 = vld [vmem:[%s1] sm:$0xf]
      %v199 = vld [vmem:[%s1 + $0x4] sm:$0xf]
      %v200 = vld [vmem:[%s1 + $0x8] sm:$0xf]
      %v201 = vld [vmem:[%s1 + $0xc] sm:$0xf]
      %v202 = vld [vmem:[%s1 + $0x10] sm:$0xf]
      %v203 = vld [vmem:[%s1 + $0x14] sm:$0xf]
      %v204 = vld [vmem:[%s1 + $0x18] sm:$0xf]
      %v205 = vld [vmem:[%s1 + $0x1c] sm:$0xf]
      %v206 = vld [vmem:[%s1 + $0x20] sm:$0xf]
      %v207 = vld [vmem:[%s1 + $0x24] sm:$0xf]
      %v208 = vld [vmem:[%s1 + $0x28] sm:$0xf]
      %v209 = vld [vmem:[%s1 + $0x2c] sm:$0xf]
      %v210 = vld [vmem:[%s1 + $0x30] sm:$0xf]
      %v211 = vld [vmem:[%s1 + $0x34] sm:$0xf]
      %v212 = vld [vmem:[%s1 + $0x38] sm:$0xf]
      %v213 = vld [vmem:[%s1 + $0x3c] sm:$0xf]
      %v214 = vld [vmem:[%s1 + $0x40] sm:$0xf]
      %v215 = vld [vmem:[%s1 + $0x44] sm:$0xf]
      %v216 = vld [vmem:[%s1 + $0x48] sm:$0xf]
      %v217 = vld [vmem:[%s1 + $0x4c] sm:$0xf]
      %v218 = vld [vmem:[%s1 + $0x50] sm:$0xf]
      %v219 = vld [vmem:[%s1 + $0x54] sm:$0xf]
      %v220 = vld [vmem:[%s1 + $0x58] sm:$0xf]
      %v221 = vld [vmem:[%s1 + $0x5c] sm:$0xf]
      %v222 = vld [vmem:[%s1 + $0x60] sm:$0xf]
      %v223 = vld [vmem:[%s1 + $0x64] sm:$0xf]
      %v224 = vld [vmem:[%s1 + $0x68] sm:$0xf]
      %v225 = vld [vmem:[%s1 + $0x6c] sm:$0xf]
      %v226 = vld [vmem:[%s1 + $0x70] sm:$0xf]
      %v227 = vld [vmem:[%s1 + $0x74] sm:$0xf]
      %v228 = vld [vmem:[%s1 + $0x78] sm:$0xf]
      %v229 = vld [vmem:[%s1 + $0x7c] sm:$0xf]
      %v230 = vld [vmem:[%s1 + $0x80] sm:$0xf]
      %v231 = vld [vmem:[%s1 + $0x84] sm:$0xf]
      %v232 = vld [vmem:[%s1 + $0x88] sm:$0xf]
      %v233 = vld [vmem:[%s1 + $0x8c] sm:$0xf]
      %v234 = vld [vmem:[%s1 + $0x90] sm:$0xf]
      %v235 = vld [vmem:[%s1 + $0x94] sm:$0xf]
      %v236 = vld [vmem:[%s1 + $0x98] sm:$0xf]
      %v237 = vld [vmem:[%s1 + $0x9c] sm:$0xf]
      %v238 = vld [vmem:[%s1 + $0xa0] sm:$0xf]
      %v239 = vld [vmem:[%s1 + $0xa4] sm:$0xf]
      %v240 = vld [vmem:[%s1 + $0xa8] sm:$0xf]
      %v241 = vld [vmem:[%s1 + $0xac] sm:$0xf]
      %v242 = vld [vmem:[%s1 + $0xb0] sm:$0xf]
      %v243 = vld [vmem:[%s1 + $0xb4] sm:$0xf]
      %v244 = vld [vmem:[%s1 + $0xb8] sm:$0xf]
      %v245 = vld [vmem:[%s1 + $0xbc] sm:$0xf]
      %v246 = vld [vmem:[%s1 + $0xc0] sm:$0xf]
      %v247 = vld [vmem:[%s1 + $0xc4] sm:$0xf]
      %v248 = vld [vmem:[%s1 + $0xc8] sm:$0xf]
      %v249 = vld [vmem:[%s1 + $0xcc] sm:$0xf]
      %v250 = vld [vmem:[%s1 + $0xd0] sm:$0xf]
      %v251 = vld [vmem:[%s1 + $0xd4] sm:$0xf]
      %v252 = vld [vmem:[%s1 + $0xd8] sm:$0xf]
      %v253 = vld [vmem:[%s1 + $0xdc] sm:$0xf]
      %v254 = vld [vmem:[%s1 + $0xe0] sm:$0xf]
      %v255 = vld [vmem:[%s1 + $0xe4] sm:$0xf]
      %v256 = vld [vmem:[%s1 + $0xe8] sm:$0xf]
      %v257 = vld [vmem:[%s1 + $0xec] sm:$0xf]
      %v258 = vld [vmem:[%s1 + $0xf0] sm:$0xf]
      %v259 = vld [vmem:[%s1 + $0xf4] sm:$0xf]
      %v260 = vld [vmem:[%s1 + $0xf8] sm:$0xf]
      %v261 = vld [vmem:[%s1 + $0xfc] sm:$0xf]
      %v262 = vld [vmem:[%s1 + $0x100] sm:$0xf]
      %v263 = vld [vmem:[%s1 + $0x104] sm:$0xf]
      %v264 = vld [vmem:[%s1 + $0x108] sm:$0xf]
      %v265 = vld [vmem:[%s1 + $0x10c] sm:$0xf]
      %v266 = vld [vmem:[%s1 + $0x110] sm:$0xf]
      %v267 = vld [vmem:[%s1 + $0x114] sm:$0xf]
      %v268 = vld [vmem:[%s1 + $0x118] sm:$0xf]
      %v269 = vld [vmem:[%s1 + $0x11c] sm:$0xf]
      %v270 = vld [vmem:[%s1 + $0x120] sm:$0xf]
      %v271 = vld [vmem:[%s1 + $0x124] sm:$0xf]
      %v272 = vld [vmem:[%s1 + $0x128] sm:$0xf]
      %v273 = vld [vmem:[%s1 + $0x12c] sm:$0xf]
      %v274 = vld [vmem:[%s1 + $0x130] sm:$0xf]
      %v275 = vld [vmem:[%s1 + $0x134] sm:$0xf]
      %v276 = vld [vmem:[%s1 + $0x138] sm:$0xf]
      %v277 = vld [vmem:[%s1 + $0x13c] sm:$0xf]
      %v278 = vld [vmem:[%s1 + $0x140] sm:$0xf]
      %v279 = vld [vmem:[%s1 + $0x144] sm:$0xf]
      %v280 = vld [vmem:[%s1 + $0x148] sm:$0xf]
      %v281 = vld [vmem:[%s1 + $0x14c] sm:$0xf]
      %v282 = vld [vmem:[%s1 + $0x150] sm:$0xf]
      %v283 = vld [vmem:[%s1 + $0x154] sm:$0xf]
      %v284 = vld [vmem:[%s1 + $0x158] sm:$0xf]
      %v285 = vld [vmem:[%s1 + $0x15c] sm:$0xf]
      %v286 = vld [vmem:[%s1 + $0x160] sm:$0xf]
      %v287 = vld [vmem:[%s1 + $0x164] sm:$0xf]
      %v288 = vld [vmem:[%s1 + $0x168] sm:$0xf]
      %v289 = vld [vmem:[%s1 + $0x16c] sm:$0xf]
      %v290 = vld [vmem:[%s1 + $0x170] sm:$0xf]
      %v291 = vld [vmem:[%s1 + $0x174] sm:$0xf]
      %v292 = vld [vmem:[%s1 + $0x178] sm:$0xf]
      %v293 = vld [vmem:[%s1 + $0x17c] sm:$0xf]
      %v294 = vld [vmem:[%s1 + $0x180] sm:$0xf]
      %v295 = vld [vmem:[%s1 + $0x184] sm:$0xf]
      %v296 = vld [vmem:[%s1 + $0x188] sm:$0xf]
      %v297 = vld [vmem:[%s1 + $0x18c] sm:$0xf]
      %v298 = vld [vmem:[%s1 + $0x190] sm:$0xf]
      %v299 = vld [vmem:[%s1 + $0x194] sm:$0xf]
      %v300 = vld [vmem:[%s1 + $0x198] sm:$0xf]
      %v301 = vld [vmem:[%s1 + $0x19c] sm:$0xf]
      %v302 = vld [vmem:[%s1 + $0x1a0] sm:$0xf]
      %v303 = vld [vmem:[%s1 + $0x1a4] sm:$0xf]
      %v304 = vld [vmem:[%s1 + $0x1a8] sm:$0xf]
      %v305 = vld [vmem:[%s1 + $0x1ac] sm:$0xf]
      %v306 = vld [vmem:[%s1 + $0x1b0] sm:$0xf]
      %v307 = vld [vmem:[%s1 + $0x1b4] sm:$0xf]
      %v308 = vld [vmem:[%s1 + $0x1b8] sm:$0xf]
      %v309 = vld [vmem:[%s1 + $0x1bc] sm:$0xf]
      %v310 = vld [vmem:[%s1 + $0x1c0] sm:$0xf]
      %v311 = vld [vmem:[%s1 + $0x1c4] sm:$0xf]
      %v312 = vld [vmem:[%s1 + $0x1c8] sm:$0xf]
      %v313 = vld [vmem:[%s1 + $0x1cc] sm:$0xf]
      %v314 = vld [vmem:[%s1 + $0x1d0] sm:$0xf]
      %v315 = vld [vmem:[%s1 + $0x1d4] sm:$0xf]
      %v316 = vld [vmem:[%s1 + $0x1d8] sm:$0xf]
      %v317 = vld [vmem:[%s1 + $0x1dc] sm:$0xf]
      %v318 = vld [vmem:[%s1 + $0x1e0] sm:$0xf]
      %v319 = vld [vmem:[%s1 + $0x1e4] sm:$0xf]
      %v320 = vld [vmem:[%s1 + $0x1e8] sm:$0xf]
      %v321 = vld [vmem:[%s1 + $0x1ec] sm:$0xf]
      %v322 = vld [vmem:[%s1 + $0x1f0] sm:$0xf]
      %v323 = vld [vmem:[%s1 + $0x1f4] sm:$0xf]
      %v324 = vld [vmem:[%s1 + $0x1f8] sm:$0xf]
      %v325 = vld [vmem:[%s1 + $0x1fc] sm:$0xf]
      %v326 = vld [vmem:[%s1 + $0x200] sm:$0xf]
      %v327 = vld [vmem:[%s1 + $0x204] sm:$0xf]
      %v328 = vld [vmem:[%s1 + $0x208] sm:$0xf]
      %v329 = vld [vmem:[%s1 + $0x20c] sm:$0xf]
      %v330 = vld [vmem:[%s1 + $0x210] sm:$0xf]
      %v331 = vld [vmem:[%s1 + $0x214] sm:$0xf]
      %v332 = vld [vmem:[%s1 + $0x218] sm:$0xf]
      %v333 = vld [vmem:[%s1 + $0x21c] sm:$0xf]
      %v334 = vld [vmem:[%s1 + $0x220] sm:$0xf]
      %v335 = vld [vmem:[%s1 + $0x224] sm:$0xf]
      %v336 = vld [vmem:[%s1 + $0x228] sm:$0xf]
      %v337 = vld [vmem:[%s1 + $0x22c] sm:$0xf]
      %v338 = vld [vmem:[%s1 + $0x230] sm:$0xf]
      %v339 = vld [vmem:[%s1 + $0x234] sm:$0xf]
      %v340 = vld [vmem:[%s1 + $0x238] sm:$0xf]
      %v341 = vld [vmem:[%s1 + $0x23c] sm:$0xf]
      %v342 = vld [vmem:[%s1 + $0x240] sm:$0xf]
      %v343 = vld [vmem:[%s1 + $0x244] sm:$0xf]
      %v344 = vld [vmem:[%s1 + $0x248] sm:$0xf]
      %v345 = vld [vmem:[%s1 + $0x24c] sm:$0xf]
      %v346 = vld [vmem:[%s1 + $0x250] sm:$0xf]
      %v347 = vld [vmem:[%s1 + $0x254] sm:$0xf]
      %v348 = vld [vmem:[%s2] sm:$0x1]
      %v350 = vlaneseq
      %v351 = vshrl.u32 %v350, 7
      %v352 = vsub.s32 0, %v351
      %v353 = vrot.slane %v348, %v352
      %v375 = vunpack.c.l.b16 %v178
      %v376 = vunpack.c.h.b16 %v178
      %v377 = vunpack.c.l.b16 %v179
      %v378 = vunpack.c.h.b16 %v179
      %v379 = vunpack.c.l.b16 %v180
      %v380 = vunpack.c.h.b16 %v180
      %v381 = vunpack.c.l.b16 %v181
      %v382 = vunpack.c.h.b16 %v181
      %v383 = vunpack.c.l.b16 %v182
      %v384 = vunpack.c.h.b16 %v182
      %v385 = vunpack.c.l.b16 %v183
      %v386 = vunpack.c.h.b16 %v183
      %v387 = vunpack.c.l.b16 %v184
      %v388 = vunpack.c.h.b16 %v184
      %v389 = vunpack.c.l.b16 %v185
      %v390 = vunpack.c.h.b16 %v185
      %v391 = vunpack.c.l.b16 %v186
      %v392 = vunpack.c.h.b16 %v186
      %v393 = vunpack.c.l.b16 %v187
      %v394 = vunpack.c.h.b16 %v187
      %v395 = vunpack.c.l.b16 %v188
      %v396 = vunpack.c.h.b16 %v188
      %v397 = vunpack.c.l.b16 %v189
      %v398 = vunpack.c.h.b16 %v189
      %v399 = vunpack.c.l.b16 %v190
      %v400 = vunpack.c.h.b16 %v190
      %v401 = vunpack.c.l.b16 %v191
      %v402 = vunpack.c.h.b16 %v191
      %v403 = vunpack.c.l.b16 %v192
      %v404 = vunpack.c.h.b16 %v192
      %v405 = vunpack.c.l.b16 %v193
      %v406 = vunpack.c.h.b16 %v193
      %v407 = vunpack.c.l.b16 %v194
      %v408 = vunpack.c.h.b16 %v194
      %v409 = vunpack.c.l.b16 %v195
      %v410 = vunpack.c.h.b16 %v195
      %v411 = vunpack.c.l.b16 %v196
      %v412 = vunpack.c.h.b16 %v196
      %v413 = vunpack.c.l.b16 %v197
      %v414 = vunpack.c.h.b16 %v197
      %v415 = vpack.c.b16 %v385, %v375
      %v416 = vpack.c.b16 %v386, %v376
      %v417 = vpack.c.b16 %v387, %v377
      %v418 = vpack.c.b16 %v388, %v378
      %v419 = vpack.c.b16 %v389, %v379
      %v420 = vpack.c.b16 %v390, %v380
      %v421 = vpack.c.b16 %v391, %v381
      %v422 = vpack.c.b16 %v392, %v382
      %v423 = vpack.c.b16 %v393, %v383
      %v424 = vpack.c.b16 %v394, %v384
      %v425 = vpack.c.b16 %v405, %v395
      %v426 = vpack.c.b16 %v406, %v396
      %v427 = vpack.c.b16 %v407, %v397
      %v428 = vpack.c.b16 %v408, %v398
      %v429 = vpack.c.b16 %v409, %v399
      %v430 = vpack.c.b16 %v410, %v400
      %v431 = vpack.c.b16 %v411, %v401
      %v432 = vpack.c.b16 %v412, %v402
      %v433 = vpack.c.b16 %v413, %v403
      %v434 = vpack.c.b16 %v414, %v404
      %v603 = vunpack.c.l.b16 %v198
      %v604 = vunpack.c.l.b16 %v199
      %v605 = vunpack.c.l.b16 %v200
      %v606 = vunpack.c.l.b16 %v201
      %v607 = vunpack.c.l.b16 %v202
      %v608 = vunpack.c.l.b16 %v203
      %v609 = vunpack.c.l.b16 %v204
      %v610 = vunpack.c.l.b16 %v205
      %v611 = vunpack.c.l.b16 %v206
      %v612 = vunpack.c.l.b16 %v207
      %v613 = vunpack.c.l.b16 %v208
      %v614 = vunpack.c.l.b16 %v209
      %v615 = vunpack.c.l.b16 %v210
      %v616 = vunpack.c.l.b16 %v211
      %v617 = vunpack.c.l.b16 %v212
      %v618 = vunpack.c.l.b16 %v213
      %v619 = vunpack.c.l.b16 %v214
      %v620 = vunpack.c.l.b16 %v215
      %v621 = vunpack.c.l.b16 %v216
      %v622 = vunpack.c.l.b16 %v217
      %v623 = vunpack.c.l.b16 %v218
      %v624 = vunpack.c.l.b16 %v219
      %v625 = vunpack.c.l.b16 %v220
      %v626 = vunpack.c.l.b16 %v221
      %v627 = vunpack.c.l.b16 %v222
      %v628 = vunpack.c.l.b16 %v223
      %v629 = vunpack.c.l.b16 %v224
      %v630 = vunpack.c.l.b16 %v225
      %v631 = vunpack.c.l.b16 %v226
      %v632 = vunpack.c.l.b16 %v227
      %v633 = vunpack.c.l.b16 %v228
      %v634 = vunpack.c.l.b16 %v229
      %v635 = vunpack.c.l.b16 %v230
      %v636 = vunpack.c.l.b16 %v231
      %v637 = vunpack.c.l.b16 %v232
      %v638 = vunpack.c.l.b16 %v233
      %v639 = vunpack.c.l.b16 %v234
      %v640 = vunpack.c.l.b16 %v235
      %v641 = vunpack.c.l.b16 %v236
      %v642 = vunpack.c.l.b16 %v237
      %v643 = vunpack.c.l.b16 %v238
      %v644 = vunpack.c.l.b16 %v239
      %v645 = vunpack.c.l.b16 %v240
      %v646 = vunpack.c.l.b16 %v241
      %v647 = vunpack.c.l.b16 %v242
      %v648 = vunpack.c.l.b16 %v243
      %v649 = vunpack.c.l.b16 %v244
      %v650 = vunpack.c.l.b16 %v245
      %v651 = vunpack.c.l.b16 %v246
      %v652 = vunpack.c.l.b16 %v247
      %v653 = vunpack.c.l.b16 %v248
      %v654 = vunpack.c.l.b16 %v249
      %v655 = vunpack.c.l.b16 %v250
      %v656 = vunpack.c.l.b16 %v251
      %v657 = vunpack.c.l.b16 %v252
      %v658 = vunpack.c.l.b16 %v253
      %v659 = vunpack.c.l.b16 %v254
      %v660 = vunpack.c.l.b16 %v255
      %v661 = vunpack.c.l.b16 %v256
      %v662 = vunpack.c.l.b16 %v257
      %v663 = vunpack.c.l.b16 %v258
      %v664 = vunpack.c.l.b16 %v259
      %v665 = vunpack.c.l.b16 %v260
      %v666 = vunpack.c.l.b16 %v261
      %v667 = vunpack.c.l.b16 %v262
      %v668 = vunpack.c.l.b16 %v263
      %v669 = vunpack.c.l.b16 %v264
      %v670 = vunpack.c.l.b16 %v265
      %v671 = vunpack.c.l.b16 %v266
      %v672 = vunpack.c.l.b16 %v267
      %v673 = vunpack.c.l.b16 %v268
      %v674 = vunpack.c.l.b16 %v269
      %v675 = vunpack.c.l.b16 %v270
      %v676 = vunpack.c.l.b16 %v271
      %v677 = vunpack.c.l.b16 %v272
      %v678 = vunpack.c.l.b16 %v273
      %v679 = vunpack.c.l.b16 %v274
      %v680 = vunpack.c.l.b16 %v275
      %v681 = vunpack.c.l.b16 %v276
      %v682 = vunpack.c.l.b16 %v277
      %v683 = vunpack.c.l.b16 %v278
      %v684 = vunpack.c.l.b16 %v279
      %v685 = vunpack.c.l.b16 %v280
      %v686 = vunpack.c.l.b16 %v281
      %v687 = vunpack.c.l.b16 %v282
      %v688 = vunpack.c.l.b16 %v283
      %v689 = vunpack.c.l.b16 %v284
      %v690 = vunpack.c.l.b16 %v285
      %v691 = vunpack.c.l.b16 %v286
      %v692 = vunpack.c.l.b16 %v287
      %v693 = vunpack.c.l.b16 %v288
      %v694 = vunpack.c.l.b16 %v289
      %v695 = vunpack.c.l.b16 %v290
      %v696 = vunpack.c.l.b16 %v291
      %v697 = vunpack.c.l.b16 %v292
      %v698 = vunpack.c.l.b16 %v293
      %v699 = vunpack.c.l.b16 %v294
      %v700 = vunpack.c.l.b16 %v295
      %v701 = vunpack.c.l.b16 %v296
      %v702 = vunpack.c.l.b16 %v297
      %v703 = vunpack.c.l.b16 %v298
      %v704 = vunpack.c.l.b16 %v299
      %v705 = vunpack.c.l.b16 %v300
      %v706 = vunpack.c.l.b16 %v301
      %v707 = vunpack.c.l.b16 %v302
      %v708 = vunpack.c.l.b16 %v303
      %v709 = vunpack.c.l.b16 %v304
      %v710 = vunpack.c.l.b16 %v305
      %v711 = vunpack.c.l.b16 %v306
      %v712 = vunpack.c.l.b16 %v307
      %v713 = vunpack.c.l.b16 %v308
      %v714 = vunpack.c.l.b16 %v309
      %v715 = vunpack.c.l.b16 %v310
      %v716 = vunpack.c.l.b16 %v311
      %v717 = vunpack.c.l.b16 %v312
      %v718 = vunpack.c.l.b16 %v313
      %v719 = vunpack.c.l.b16 %v314
      %v720 = vunpack.c.l.b16 %v315
      %v721 = vunpack.c.l.b16 %v316
      %v722 = vunpack.c.l.b16 %v317
      %v723 = vunpack.c.l.b16 %v318
      %v724 = vunpack.c.l.b16 %v319
      %v725 = vunpack.c.l.b16 %v320
      %v726 = vunpack.c.l.b16 %v321
      %v727 = vunpack.c.l.b16 %v322
      %v728 = vunpack.c.l.b16 %v323
      %v729 = vunpack.c.l.b16 %v324
      %v730 = vunpack.c.l.b16 %v325
      %v731 = vunpack.c.l.b16 %v326
      %v732 = vunpack.c.l.b16 %v327
      %v733 = vunpack.c.l.b16 %v328
      %v734 = vunpack.c.l.b16 %v329
      %v735 = vunpack.c.l.b16 %v330
      %v736 = vunpack.c.l.b16 %v331
      %v737 = vunpack.c.l.b16 %v332
      %v738 = vunpack.c.l.b16 %v333
      %v739 = vunpack.c.l.b16 %v334
      %v740 = vunpack.c.l.b16 %v335
      %v741 = vunpack.c.l.b16 %v336
      %v742 = vunpack.c.l.b16 %v337
      %v743 = vunpack.c.l.b16 %v338
      %v744 = vunpack.c.l.b16 %v339
      %v745 = vunpack.c.l.b16 %v340
      %v746 = vunpack.c.l.b16 %v341
      %v747 = vunpack.c.l.b16 %v342
      %v748 = vunpack.c.l.b16 %v343
      %v749 = vunpack.c.l.b16 %v344
      %v750 = vunpack.c.l.b16 %v345
      %v751 = vunpack.c.l.b16 %v346
      %v752 = vunpack.c.l.b16 %v347
      %v753 = vpack.c.b16 %v604, %v603
      %v754 = vpack.c.b16 %v606, %v605
      %v755 = vpack.c.b16 %v608, %v607
      %v756 = vpack.c.b16 %v610, %v609
      %v757 = vpack.c.b16 %v612, %v611
      %v758 = vpack.c.b16 %v614, %v613
      %v759 = vpack.c.b16 %v616, %v615
      %v760 = vpack.c.b16 %v618, %v617
      %v761 = vpack.c.b16 %v620, %v619
      %v762 = vpack.c.b16 %v622, %v621
      %v763 = vpack.c.b16 %v624, %v623
      %v764 = vpack.c.b16 %v626, %v625
      %v765 = vpack.c.b16 %v628, %v627
      %v766 = vpack.c.b16 %v630, %v629
      %v767 = vpack.c.b16 %v632, %v631
      %v768 = vpack.c.b16 %v634, %v633
      %v769 = vpack.c.b16 %v636, %v635
      %v770 = vpack.c.b16 %v638, %v637
      %v771 = vpack.c.b16 %v640, %v639
      %v772 = vpack.c.b16 %v642, %v641
      %v773 = vpack.c.b16 %v644, %v643
      %v774 = vpack.c.b16 %v646, %v645
      %v775 = vpack.c.b16 %v648, %v647
      %v776 = vpack.c.b16 %v650, %v649
      %v777 = vpack.c.b16 %v652, %v651
      %v778 = vpack.c.b16 %v654, %v653
      %v779 = vpack.c.b16 %v656, %v655
      %v780 = vpack.c.b16 %v658, %v657
      %v781 = vpack.c.b16 %v660, %v659
      %v782 = vpack.c.b16 %v662, %v661
      %v783 = vpack.c.b16 %v664, %v663
      %v784 = vpack.c.b16 %v666, %v665
      %v785 = vpack.c.b16 %v668, %v667
      %v786 = vpack.c.b16 %v670, %v669
      %v787 = vpack.c.b16 %v672, %v671
      %v788 = vpack.c.b16 %v674, %v673
      %v789 = vpack.c.b16 %v676, %v675
      %v790 = vpack.c.b16 %v678, %v677
      %v791 = vpack.c.b16 %v680, %v679
      %v792 = vpack.c.b16 %v682, %v681
      %v793 = vpack.c.b16 %v684, %v683
      %v794 = vpack.c.b16 %v686, %v685
      %v795 = vpack.c.b16 %v688, %v687
      %v796 = vpack.c.b16 %v690, %v689
      %v797 = vpack.c.b16 %v692, %v691
      %v798 = vpack.c.b16 %v694, %v693
      %v799 = vpack.c.b16 %v696, %v695
      %v800 = vpack.c.b16 %v698, %v697
      %v801 = vpack.c.b16 %v700, %v699
      %v802 = vpack.c.b16 %v702, %v701
      %v803 = vpack.c.b16 %v704, %v703
      %v804 = vpack.c.b16 %v706, %v705
      %v805 = vpack.c.b16 %v708, %v707
      %v806 = vpack.c.b16 %v710, %v709
      %v807 = vpack.c.b16 %v712, %v711
      %v808 = vpack.c.b16 %v714, %v713
      %v809 = vpack.c.b16 %v716, %v715
      %v810 = vpack.c.b16 %v718, %v717
      %v811 = vpack.c.b16 %v720, %v719
      %v812 = vpack.c.b16 %v722, %v721
      %v813 = vpack.c.b16 %v724, %v723
      %v814 = vpack.c.b16 %v726, %v725
      %v815 = vpack.c.b16 %v728, %v727
      %v816 = vpack.c.b16 %v730, %v729
      %v817 = vpack.c.b16 %v732, %v731
      %v818 = vpack.c.b16 %v734, %v733
      %v819 = vpack.c.b16 %v736, %v735
      %v820 = vpack.c.b16 %v738, %v737
      %v821 = vpack.c.b16 %v740, %v739
      %v822 = vpack.c.b16 %v742, %v741
      %v823 = vpack.c.b16 %v744, %v743
      %v824 = vpack.c.b16 %v746, %v745
      %v825 = vpack.c.b16 %v748, %v747
      %v826 = vpack.c.b16 %v750, %v749
      %v827 = vpack.c.b16 %v752, %v751
      %vm903 = vcmask 392192
      %v905 = vsel %vm903, %v424, 0
      %v908 = vsel %vm903, %v434, 0
      %910 = vmatprep.subr.bf16.mxu0 0
      %911 = vmatpush1.bf16.msra.mxu0 %v760
      %912 = vmatprep.subr.bf16.mxu0 0
      %913 = vmatpush1.bf16.msra.mxu0 %v759
      %914 = vmatprep.subr.bf16.mxu0 0
      %915 = vmatpush1.bf16.msra.mxu0 %v758
      %916 = vmatprep.subr.bf16.mxu0 0
      %917 = vmatpush1.bf16.msra.mxu0 %v757
      %918 = vmatprep.subr.bf16.mxu0 0
      %919 = vmatpush1.bf16.msra.mxu0 %v756
      %920 = vmatprep.subr.bf16.mxu0 0
      %921 = vmatpush1.bf16.msra.mxu0 %v755
      %922 = vmatprep.subr.bf16.mxu0 0
      %923 = vmatpush1.bf16.msra.mxu0 %v754
      %924 = vmatprep.subr.bf16.mxu0 0
      %925 = vmatpush1.bf16.msra.mxu0 %v753
      %926 = vmatprep.subr.bf16.mxu0 0
      %927 = vmatpush2.bf16.msra.mxu0 %v768
      %928 = vmatprep.subr.bf16.mxu0 0
      %929 = vmatpush2.bf16.msra.mxu0 %v767
      %930 = vmatprep.subr.bf16.mxu0 0
      %931 = vmatpush2.bf16.msra.mxu0 %v766
      %932 = vmatprep.subr.bf16.mxu0 0
      %933 = vmatpush2.bf16.msra.mxu0 %v765
      %934 = vmatprep.subr.bf16.mxu0 0
      %935 = vmatpush2.bf16.msra.mxu0 %v764
      %936 = vmatprep.subr.bf16.mxu0 0
      %937 = vmatpush2.bf16.msra.mxu0 %v763
      %938 = vmatprep.subr.bf16.mxu0 0
      %939 = vmatpush2.bf16.msra.mxu0 %v762
      %940 = vmatprep.subr.bf16.mxu0 0
      %941 = vmatpush2.bf16.msra.mxu0 %v761
      %942 = vmatprep.mubr.bf16.mxu0 %v416
      %943 = vmatmul.mubr.bf16.gmra.mxu0 %v415
      %v944 = vpop.f32.mrf.mxu0
      %v945 = vadd.f32 %v353, %v944
      %v946 = vpop.f32.mrf.mxu0
      %v947 = vpop.f32.mrf.mxu0
      %v948 = vadd.f32 %v353, %v947
      %v949 = vpop.f32.mrf.mxu0
      %950 = vmatprep.mubr.bf16.mxu0 %v426
      %951 = vmatmul.mubr.bf16.gmra.mxu0 %v425
      %v952 = vpop.f32.mrf.mxu0
      %v953 = vadd.f32 %v353, %v952
      %v954 = vpop.f32.mrf.mxu0
      %v955 = vpop.f32.mrf.mxu0
      %v956 = vadd.f32 %v353, %v955
      %v957 = vpop.f32.mrf.mxu0
      %958 = vdwg.mxu0
      %959 = vmatprep.subr.bf16.mxu0 0
      %960 = vmatpush1.bf16.msra.mxu0 %v776
      %961 = vmatprep.subr.bf16.mxu0 0
      %962 = vmatpush1.bf16.msra.mxu0 %v775
      %963 = vmatprep.subr.bf16.mxu0 0
      %964 = vmatpush1.bf16.msra.mxu0 %v774
      %965 = vmatprep.subr.bf16.mxu0 0
      %966 = vmatpush1.bf16.msra.mxu0 %v773
      %967 = vmatprep.subr.bf16.mxu0 0
      %968 = vmatpush1.bf16.msra.mxu0 %v772
      %969 = vmatprep.subr.bf16.mxu0 0
      %970 = vmatpush1.bf16.msra.mxu0 %v771
      %971 = vmatprep.subr.bf16.mxu0 0
      %972 = vmatpush1.bf16.msra.mxu0 %v770
      %973 = vmatprep.subr.bf16.mxu0 0
      %974 = vmatpush1.bf16.msra.mxu0 %v769
      %975 = vmatprep.subr.bf16.mxu0 0
      %976 = vmatpush2.bf16.msra.mxu0 %v784
      %977 = vmatprep.subr.bf16.mxu0 0
      %978 = vmatpush2.bf16.msra.mxu0 %v783
      %979 = vmatprep.subr.bf16.mxu0 0
      %980 = vmatpush2.bf16.msra.mxu0 %v782
      %981 = vmatprep.subr.bf16.mxu0 0
      %982 = vmatpush2.bf16.msra.mxu0 %v781
      %983 = vmatprep.subr.bf16.mxu0 0
      %984 = vmatpush2.bf16.msra.mxu0 %v780
      %985 = vmatprep.subr.bf16.mxu0 0
      %986 = vmatpush2.bf16.msra.mxu0 %v779
      %987 = vmatprep.subr.bf16.mxu0 0
      %988 = vmatpush2.bf16.msra.mxu0 %v778
      %989 = vmatprep.subr.bf16.mxu0 0
      %990 = vmatpush2.bf16.msra.mxu0 %v777
      %991 = vmatprep.mubr.bf16.mxu0 %v418
      %992 = vmatmul.mubr.bf16.gmra.mxu0 %v417
      %v993 = vpop.f32.mrf.mxu0
      %v994 = vadd.f32 %v945, %v993
      %v995 = vpop.f32.mrf.mxu0
      %v996 = vpop.f32.mrf.mxu0
      %v997 = vadd.f32 %v948, %v996
      %v998 = vpop.f32.mrf.mxu0
      %999 = vmatprep.mubr.bf16.mxu0 %v428
      %1000 = vmatmul.mubr.bf16.gmra.mxu0 %v427
      %v1001 = vpop.f32.mrf.mxu0
      %v1002 = vadd.f32 %v953, %v1001
      %v1003 = vpop.f32.mrf.mxu0
      %v1004 = vpop.f32.mrf.mxu0
      %v1005 = vadd.f32 %v956, %v1004
      %v1006 = vpop.f32.mrf.mxu0
      %1007 = vdwg.mxu0
      %1008 = vmatprep.subr.bf16.mxu0 0
      %1009 = vmatpush1.bf16.msra.mxu0 %v792
      %1010 = vmatprep.subr.bf16.mxu0 0
      %1011 = vmatpush1.bf16.msra.mxu0 %v791
      %1012 = vmatprep.subr.bf16.mxu0 0
      %1013 = vmatpush1.bf16.msra.mxu0 %v790
      %1014 = vmatprep.subr.bf16.mxu0 0
      %1015 = vmatpush1.bf16.msra.mxu0 %v789
      %1016 = vmatprep.subr.bf16.mxu0 0
      %1017 = vmatpush1.bf16.msra.mxu0 %v788
      %1018 = vmatprep.subr.bf16.mxu0 0
      %1019 = vmatpush1.bf16.msra.mxu0 %v787
      %1020 = vmatprep.subr.bf16.mxu0 0
      %1021 = vmatpush1.bf16.msra.mxu0 %v786
      %1022 = vmatprep.subr.bf16.mxu0 0
      %1023 = vmatpush1.bf16.msra.mxu0 %v785
      %1024 = vmatprep.subr.bf16.mxu0 0
      %1025 = vmatpush2.bf16.msra.mxu0 %v800
      %1026 = vmatprep.subr.bf16.mxu0 0
      %1027 = vmatpush2.bf16.msra.mxu0 %v799
      %1028 = vmatprep.subr.bf16.mxu0 0
      %1029 = vmatpush2.bf16.msra.mxu0 %v798
      %1030 = vmatprep.subr.bf16.mxu0 0
      %1031 = vmatpush2.bf16.msra.mxu0 %v797
      %1032 = vmatprep.subr.bf16.mxu0 0
      %1033 = vmatpush2.bf16.msra.mxu0 %v796
      %1034 = vmatprep.subr.bf16.mxu0 0
      %1035 = vmatpush2.bf16.msra.mxu0 %v795
      %1036 = vmatprep.subr.bf16.mxu0 0
      %1037 = vmatpush2.bf16.msra.mxu0 %v794
      %1038 = vmatprep.subr.bf16.mxu0 0
      %1039 = vmatpush2.bf16.msra.mxu0 %v793
      %1040 = vmatprep.mubr.bf16.mxu0 %v420
      %1041 = vmatmul.mubr.bf16.gmra.mxu0 %v419
      %v1042 = vpop.f32.mrf.mxu0
      %v1043 = vadd.f32 %v994, %v1042
      %v1044 = vpop.f32.mrf.mxu0
      %v1045 = vpop.f32.mrf.mxu0
      %v1046 = vadd.f32 %v997, %v1045
      %v1047 = vpop.f32.mrf.mxu0
      %1048 = vmatprep.mubr.bf16.mxu0 %v430
      %1049 = vmatmul.mubr.bf16.gmra.mxu0 %v429
      %v1050 = vpop.f32.mrf.mxu0
      %v1051 = vadd.f32 %v1002, %v1050
      %v1052 = vpop.f32.mrf.mxu0
      %v1053 = vpop.f32.mrf.mxu0
      %v1054 = vadd.f32 %v1005, %v1053
      %v1055 = vpop.f32.mrf.mxu0
      %1056 = vdwg.mxu0
      %1057 = vmatprep.subr.bf16.mxu0 0
      %1058 = vmatpush1.bf16.msra.mxu0 %v808
      %1059 = vmatprep.subr.bf16.mxu0 0
      %1060 = vmatpush1.bf16.msra.mxu0 %v807
      %1061 = vmatprep.subr.bf16.mxu0 0
      %1062 = vmatpush1.bf16.msra.mxu0 %v806
      %1063 = vmatprep.subr.bf16.mxu0 0
      %1064 = vmatpush1.bf16.msra.mxu0 %v805
      %1065 = vmatprep.subr.bf16.mxu0 0
      %1066 = vmatpush1.bf16.msra.mxu0 %v804
      %1067 = vmatprep.subr.bf16.mxu0 0
      %1068 = vmatpush1.bf16.msra.mxu0 %v803
      %1069 = vmatprep.subr.bf16.mxu0 0
      %1070 = vmatpush1.bf16.msra.mxu0 %v802
      %1071 = vmatprep.subr.bf16.mxu0 0
      %1072 = vmatpush1.bf16.msra.mxu0 %v801
      %1073 = vmatprep.subr.bf16.mxu0 0
      %1074 = vmatpush2.bf16.msra.mxu0 %v816
      %1075 = vmatprep.subr.bf16.mxu0 0
      %1076 = vmatpush2.bf16.msra.mxu0 %v815
      %1077 = vmatprep.subr.bf16.mxu0 0
      %1078 = vmatpush2.bf16.msra.mxu0 %v814
      %1079 = vmatprep.subr.bf16.mxu0 0
      %1080 = vmatpush2.bf16.msra.mxu0 %v813
      %1081 = vmatprep.subr.bf16.mxu0 0
      %1082 = vmatpush2.bf16.msra.mxu0 %v812
      %1083 = vmatprep.subr.bf16.mxu0 0
      %1084 = vmatpush2.bf16.msra.mxu0 %v811
      %1085 = vmatprep.subr.bf16.mxu0 0
      %1086 = vmatpush2.bf16.msra.mxu0 %v810
      %1087 = vmatprep.subr.bf16.mxu0 0
      %1088 = vmatpush2.bf16.msra.mxu0 %v809
      %1089 = vmatprep.mubr.bf16.mxu0 %v422
      %1090 = vmatmul.mubr.bf16.gmra.mxu0 %v421
      %v1091 = vpop.f32.mrf.mxu0
      %v1092 = vadd.f32 %v1043, %v1091
      %v1093 = vpop.f32.mrf.mxu0
      %v1094 = vpop.f32.mrf.mxu0
      %v1095 = vadd.f32 %v1046, %v1094
      %v1096 = vpop.f32.mrf.mxu0
      %1097 = vmatprep.mubr.bf16.mxu0 %v432
      %1098 = vmatmul.mubr.bf16.gmra.mxu0 %v431
      %v1099 = vpop.f32.mrf.mxu0
      %v1100 = vadd.f32 %v1051, %v1099
      %v1101 = vpop.f32.mrf.mxu0
      %v1102 = vpop.f32.mrf.mxu0
      %v1103 = vadd.f32 %v1054, %v1102
      %v1104 = vpop.f32.mrf.mxu0
      %1105 = vdwg.mxu0
      %1106 = vmatprep.subr.bf16.mxu0 0
      %1107 = vmatpush1.bf16.msra.mxu0 %v824
      %1108 = vmatprep.subr.bf16.mxu0 0
      %1109 = vmatpush1.bf16.msra.mxu0 %v823
      %1110 = vmatprep.subr.bf16.mxu0 0
      %1111 = vmatpush1.bf16.msra.mxu0 %v822
      %1112 = vmatprep.subr.bf16.mxu0 0
      %1113 = vmatpush1.bf16.msra.mxu0 %v821
      %1114 = vmatprep.subr.bf16.mxu0 0
      %1115 = vmatpush1.bf16.msra.mxu0 %v820
      %1116 = vmatprep.subr.bf16.mxu0 0
      %1117 = vmatpush1.bf16.msra.mxu0 %v819
      %1118 = vmatprep.subr.bf16.mxu0 0
      %1119 = vmatpush1.bf16.msra.mxu0 %v818
      %1120 = vmatprep.subr.bf16.mxu0 0
      %1121 = vmatpush1.bf16.msra.mxu0 %v817
      %1122 = vmatprep.subr.bf16.mxu0 0
      %1123 = vmatpush2.bf16.msra.mxu0 0
      %1124 = vmatprep.subr.bf16.mxu0 0
      %1125 = vmatpush2.bf16.msra.mxu0 0
      %1126 = vmatprep.subr.bf16.mxu0 0
      %1127 = vmatpush2.bf16.msra.mxu0 0
      %1128 = vmatprep.subr.bf16.mxu0 0
      %1129 = vmatpush2.bf16.msra.mxu0 0
      %1130 = vmatprep.subr.bf16.mxu0 0
      %1131 = vmatpush2.bf16.msra.mxu0 0
      %1132 = vmatprep.subr.bf16.mxu0 0
      %1133 = vmatpush2.bf16.msra.mxu0 %v827
      %1134 = vmatprep.subr.bf16.mxu0 0
      %1135 = vmatpush2.bf16.msra.mxu0 %v826
      %1136 = vmatprep.subr.bf16.mxu0 0
      %1137 = vmatpush2.bf16.msra.mxu0 %v825
      %1138 = vmatprep.mubr.bf16.mxu0 %v905
      %1139 = vmatmul.mubr.bf16.gmra.mxu0 %v423
      %v1140 = vpop.f32.mrf.mxu0
      %v1141 = vadd.f32 %v1092, %v1140
      %v1142 = vpop.f32.mrf.mxu0
      %v1143 = vpop.f32.mrf.mxu0
      %v1144 = vadd.f32 %v1095, %v1143
      %v1145 = vpop.f32.mrf.mxu0
      %1146 = vmatprep.mubr.bf16.mxu0 %v908
      %1147 = vmatmul.mubr.bf16.gmra.mxu0 %v433
      %v1148 = vpop.f32.mrf.mxu0
      %v1149 = vadd.f32 %v1100, %v1148
      %v1150 = vpop.f32.mrf.mxu0
      %v1151 = vpop.f32.mrf.mxu0
      %v1152 = vadd.f32 %v1103, %v1151
      %v1153 = vpop.f32.mrf.mxu0
      %1154 = vdwg.mxu0
      %vm1155 = vcmp.ge.f32.partialorder %v1141, 0.0
      %vm1156 = vcmp.ge.f32.partialorder %v1144, 0.0
      %vm1157 = vcmp.ge.f32.partialorder %v1149, 0.0
      %vm1158 = vcmp.ge.f32.partialorder %v1152, 0.0
      %v1159 = vmul.f32 %v1141, 0.2
      %v1160 = vmul.f32 %v1144, 0.2
      %v1161 = vmul.f32 %v1149, 0.2
      %v1162 = vmul.f32 %v1152, 0.2
      %v1163 = vsel %vm1155, %v1141, %v1159
      %v1164 = vsel %vm1156, %v1144, %v1160
      %v1165 = vsel %vm1157, %v1149, %v1161
      %v1166 = vsel %vm1158, %v1152, %v1162
      %v1167 = vpack.c.bf16 %v1164, %v1163
      %v1168 = vpack.c.bf16 %v1166, %v1165
      %v1171 = vunpack.c.l.b16 %v1167
      %v1172 = vunpack.c.h.b16 %v1167
      %v1173 = vunpack.c.l.b16 %v1168
      %v1174 = vunpack.c.h.b16 %v1168
      %v1175 = vpack.c.b16 %v1171, %v1171
      %v1176 = vpack.c.b16 %v1172, %v1172
      %v1177 = vpack.c.b16 %v1173, %v1173
      %v1178 = vpack.c.b16 %v1174, %v1174
      %1183 = vst [vmem:[%s175] sm:$0xf] %v1175
      %1184 = vst [vmem:[%s175 + $0x4] sm:$0xf] %v1176
      %1185 = vst [vmem:[%s175 + $0x8] sm:$0xf] %v1177
      %1186 = vst [vmem:[%s175 + $0xc] sm:$0xf] %v1178
      %s1187 = smul.u32 4, %s14
      %p1188 = scmp.lt.s32.totalorder %s1187, 15
      %s1189 = scalar_select %p1188, %s1187, 15
      %s1190 = smul.addr %s1189, 4
      %s1191 = scalar_lea.vmem %s3, %s1190
      // Predicated region
      $region33: #{_lambda_.8} parent=31 // pred_check
        %p1192 = pneg %p100
      $region34: #{_lambda_.8} parent=31 // pred_check_branch
        %1194 = sbr.rel (%p1192) target = $region36
      $region35: #{_lambda_.8} parent=31 // pred_region
        %s1195 = smul.u32 4, %s14
      $region36: #{_lambda_.8} parent=31 // pred_fallthru
        _
    $region32: #{_lambda_.8} parent=5 // pred_fallthru
      _
    %p1196 = scmp.le.s32.totalorder 2, %s9
    // Predicated region
    $region37: #{_lambda_.8} parent=5 // pred_check
      %p1197 = pneg %p1196
    $region38: #{_lambda_.8} parent=5 // pred_check_branch
      %1199 = sbr.rel (%p1197) target = $region40
    $region39: #{_lambda_.8} parent=5 // pred_region
      %s1200 = ssub.s32 %s9, 2
      // Predicated region
      $region41: #{_lambda_.8} parent=39 // pred_check
        %p1201 = pneg %p106
      $region42: #{_lambda_.8} parent=39 // pred_check_branch
        %1203 = sbr.rel (%p1201) target = $region44
      $region43: #{_lambda_.8} parent=39 // pred_region
        %s1204 = smul.u32 4, %s15
        %p1205 = scmp.lt.s32.totalorder %s1204, 15
        %s1206 = scalar_select %p1205, %s1204, 15
        %s1207 = smul.addr %s1206, 4
        %s1208 = scalar_lea.vmem %s3, %s1207
      $region44: #{_lambda_.8} parent=39 // pred_fallthru
        _
    $region40: #{_lambda_.8} parent=5 // pred_fallthru
      _
  $region6: #{_lambda_.8} parent=0 // loop_footer
    %s13 = sadd.s32 1, %s9
  $region7: #{_lambda_.8} parent=0 // loop_footer_branch
    %8 = sbr.rel target = $region3
  $region8: #{_lambda_.8} parent=0 // loop_exit
    _

// kernel: _lambda_.9
$region0: #{_lambda_.9}
  #allocation0 [shape = 'u32[]', space=smem, size = 0x4, offset = 0x4, fixed_abs, tag = 'smem constant byte address 0x4 - core index']
  #allocation1 [shape = 'u32[144,128]{1,0:T(1,128)}', space=vmem, size = 0x12000, scoped, tag = 'internal scratch']
  %s0 = inlined_call_operand.vmem [shape: bf16[512,800], index: 0, kind: input, shape index: {}]
  %s1 = inlined_call_operand.vmem [shape: bf16[800,128], index: 1, kind: input, shape index: {}]
  %s2 = inlined_call_operand.vmem [shape: f32[1,128], index: 2, kind: input, shape index: {}]
  %s3 = inlined_call_operand.vmem [shape: bf16[512,128], index: 3, kind: output, shape index: {}]
  %s4 = sld [smem:[#allocation0]]
  $region45: #{_lambda_.9} parent=0
    _
  %s6 = ssub.s32 1, %s4
  %s7 = scalar_select 0, %s6, %s4
  loop: start=0, step=1, limit=6
  $region2: #{_lambda_.9} parent=0 // loop_pre_header
    _
  $region3: #{_lambda_.9} parent=0 // loop_header
    %s9 = sphi 0, %s13
    %p10 = scmp.ge.s32.totalorder %s9, 6
    %s19 = sphi 0, %s21
    %s22 = sphi 0, %s19
    %s23 = sphi 0, %s22
    %s39 = sphi 0, %s23
    %s43 = sphi 0, %s43
    %s45 = sphi 0, %s43
    %s46 = sphi 0, %s45
    %s60 = sphi 0, %s46
    %s64 = sphi 0, %s64
    %s66 = sphi 0, %s64
    %s67 = sphi 0, %s66
    %s81 = sphi 0, %s67
    %s87 = sphi 0, %s89
    %s90 = sphi 0, %s87
    %s91 = sphi 0, %s90
    %s107 = sphi 0, %s91
  $region4: #{_lambda_.9} parent=0 // loop_header_branch
    %12 = sbr.rel (%p10) target = $region8
  $region5: #{_lambda_.9} parent=0 // loop_body
    %s14 = ssub.s32 %s9, 1
    %s15 = ssub.s32 %s9, 2
    %s16 = sadd.s32 %s9, 1
    %s17 = ssub.s32 %s9, %s16
    %p18 = scmp.eq.s32.totalorder %s17, 0
    %s20 = sadd.s32 %s19, 1
    %s21 = scalar_select %p18, %s19, %s20
    %p24 = pneg %p18
    %p25 = scmp.eq.s32.totalorder %s9, 3
    %p26 = por %p24, %p25
    %p27 = scmp.ne.s32.totalorder %s19, %s22
    %p28 = scmp.eq.s32.totalorder %s9, 0
    %p29 = por %p27, %p28
    %p30 = scmp.ne.s32.totalorder %s19, %s22
    %p31 = scmp.eq.s32.totalorder %s14, 3
    %p32 = por %p30, %p31
    %p33 = scmp.ne.s32.totalorder %s22, %s23
    %p34 = scmp.eq.s32.totalorder %s14, 0
    %p35 = por %p33, %p34
    %p36 = scmp.ne.s32.totalorder %s22, %s23
    %p37 = scmp.eq.s32.totalorder %s15, 3
    %p38 = por %p36, %p37
    %p40 = scmp.ne.s32.totalorder %s23, %s39
    %p41 = scmp.eq.s32.totalorder %s15, 0
    %p42 = por %p40, %p41
    %s44 = sadd.s32 %s43, 1
    %p47 = scmp.eq.s32.totalorder %s9, 3
    %p48 = scmp.ne.s32.totalorder %s43, %s45
    %p49 = scmp.eq.s32.totalorder %s9, 0
    %p50 = por %p48, %p49
    %p51 = scmp.ne.s32.totalorder %s43, %s45
    %p52 = scmp.eq.s32.totalorder %s14, 3
    %p53 = por %p51, %p52
    %p54 = scmp.ne.s32.totalorder %s45, %s46
    %p55 = scmp.eq.s32.totalorder %s14, 0
    %p56 = por %p54, %p55
    %p57 = scmp.ne.s32.totalorder %s45, %s46
    %p58 = scmp.eq.s32.totalorder %s15, 3
    %p59 = por %p57, %p58
    %p61 = scmp.ne.s32.totalorder %s46, %s60
    %p62 = scmp.eq.s32.totalorder %s15, 0
    %p63 = por %p61, %p62
    %s65 = sadd.s32 %s64, 1
    %p68 = scmp.eq.s32.totalorder %s9, 3
    %p69 = scmp.ne.s32.totalorder %s64, %s66
    %p70 = scmp.eq.s32.totalorder %s9, 0
    %p71 = por %p69, %p70
    %p72 = scmp.ne.s32.totalorder %s64, %s66
    %p73 = scmp.eq.s32.totalorder %s14, 3
    %p74 = por %p72, %p73
    %p75 = scmp.ne.s32.totalorder %s66, %s67
    %p76 = scmp.eq.s32.totalorder %s14, 0
    %p77 = por %p75, %p76
    %p78 = scmp.ne.s32.totalorder %s66, %s67
    %p79 = scmp.eq.s32.totalorder %s15, 3
    %p80 = por %p78, %p79
    %p82 = scmp.ne.s32.totalorder %s67, %s81
    %p83 = scmp.eq.s32.totalorder %s15, 0
    %p84 = por %p82, %p83
    %s85 = ssub.s32 %s9, %s16
    %p86 = scmp.eq.s32.totalorder %s85, 0
    %s88 = sadd.s32 %s87, 1
    %s89 = scalar_select %p86, %s87, %s88
    %p92 = pneg %p86
    %p93 = scmp.eq.s32.totalorder %s9, 3
    %p94 = por %p92, %p93
    %p95 = scmp.ne.s32.totalorder %s87, %s90
    %p96 = scmp.eq.s32.totalorder %s9, 0
    %p97 = por %p95, %p96
    %p98 = scmp.ne.s32.totalorder %s87, %s90
    %p99 = scmp.eq.s32.totalorder %s14, 3
    %p100 = por %p98, %p99
    %p101 = scmp.ne.s32.totalorder %s90, %s91
    %p102 = scmp.eq.s32.totalorder %s14, 0
    %p103 = por %p101, %p102
    %p104 = scmp.ne.s32.totalorder %s90, %s91
    %p105 = scmp.eq.s32.totalorder %s15, 3
    %p106 = por %p104, %p105
    %p108 = scmp.ne.s32.totalorder %s91, %s107
    %p109 = scmp.eq.s32.totalorder %s15, 0
    %p110 = por %p108, %p109
    %p111 = scmp.le.s32.totalorder 1, %s9
    %p112 = scmp.lt.s32.totalorder %s9, 5
    %p113 = pnand %p111, %p112
    %p114 = pneg %p113
    // Predicated region
    $region9: #{_lambda_.9} parent=5 // pred_check
      _
    $region10: #{_lambda_.9} parent=5 // pred_check_branch
      %116 = sbr.rel (%p113) target = $region12
    $region11: #{_lambda_.9} parent=5 // pred_region
      %s117 = ssub.s32 %s9, 1
      // Predicated region
      $region13: #{_lambda_.9} parent=11 // pred_check
        %p118 = pneg %p56
      $region14: #{_lambda_.9} parent=11 // pred_check_branch
        %120 = sbr.rel (%p118) target = $region16
      $region15: #{_lambda_.9} parent=11 // pred_region
        _
      $region16: #{_lambda_.9} parent=11 // pred_fallthru
        _
      // Predicated region
      $region17: #{_lambda_.9} parent=11 // pred_check
        %p121 = pneg %p77
      $region18: #{_lambda_.9} parent=11 // pred_check_branch
        %123 = sbr.rel (%p121) target = $region20
      $region19: #{_lambda_.9} parent=11 // pred_region
        _
      $region20: #{_lambda_.9} parent=11 // pred_fallthru
        _
    $region12: #{_lambda_.9} parent=5 // pred_fallthru
      _
    %p124 = scmp.lt.s32.totalorder %s9, 4
    // Predicated region
    $region21: #{_lambda_.9} parent=5 // pred_check
      %p125 = pneg %p124
    $region22: #{_lambda_.9} parent=5 // pred_check_branch
      %127 = sbr.rel (%p125) target = $region24
    $region23: #{_lambda_.9} parent=5 // pred_region
      // Predicated region
      $region25: #{_lambda_.9} parent=23 // pred_check
        %p128 = pneg %p29
      $region26: #{_lambda_.9} parent=23 // pred_check_branch
        %130 = sbr.rel (%p128) target = $region28
      $region27: #{_lambda_.9} parent=23 // pred_region
        %s131 = smul.u32 16, %s9
        %p132 = scmp.lt.s32.totalorder %s131, 63
        %s133 = scalar_select %p132, %s131, 63
        %s134 = smul.addr %s133, 7
        %s135 = smul.addr %s134, 4
        %s136 = scalar_lea.vmem %s0, %s135
        %s137 = smul.u32 16, %s9
      $region28: #{_lambda_.9} parent=23 // pred_fallthru
        _
    $region24: #{_lambda_.9} parent=5 // pred_fallthru
      _
    %p138 = scmp.le.s32.totalorder 1, %s9
    %p139 = scmp.lt.s32.totalorder %s9, 5
    %p140 = pnand %p138, %p139
    %p141 = pneg %p140
    // Predicated region
    $region29: #{_lambda_.9} parent=5 // pred_check
      _
    $region30: #{_lambda_.9} parent=5 // pred_check_branch
      %143 = sbr.rel (%p140) target = $region32
    $region31: #{_lambda_.9} parent=5 // pred_region
      %s144 = ssub.s32 %s9, 1
      %s145 = smul.u32 16, %s14
      %p146 = scmp.lt.s32.totalorder %s145, 63
      %s147 = scalar_select %p146, %s145, 63
      %s148 = smul.addr %s147, 7
      %s149 = smul.addr %s148, 4
      %s150 = scalar_lea.vmem %s0, %s149
      %p151 = pneg %p35
      %p152 = pneg %p32
      %p153 = pneg %p56
      %p154 = pneg %p53
      %p155 = pneg %p77
      %p156 = pneg %p74
      %p157 = pneg %p103
      %p158 = pneg %p100
      %s159 = smul.u32 16, %s14
      %p160 = scmp.lt.s32.totalorder %s159, 63
      %s161 = scalar_select %p160, %s159, 63
      %s162 = smul.addr %s161, 4
      %s163 = scalar_lea.vmem %s3, %s162
      %s164 = smul.u32 16, %s14
      %p165 = scmp.lt.s32.totalorder %s164, 63
      %s166 = scalar_select %p165, %s164, 63
      %s167 = smul.addr %s166, 7
      %s168 = smul.addr %s167, 4
      %s169 = scalar_lea.vmem %s0, %s168
      %s170 = smul.u32 16, %s14
      %s171 = smul.u32 16, %s14
      %p172 = scmp.lt.s32.totalorder %s171, 63
      %s173 = scalar_select %p172, %s171, 63
      %s174 = smul.addr %s173, 4
      %s175 = scalar_lea.vmem %s3, %s174
      %s176 = smul.u32 16, %s14
      %v178 = vld [vmem:[%s169] sm:$0xff]
      %v179 = vld [vmem:[%s169 + $0x8] sm:$0xff]
      %v180 = vld [vmem:[%s169 + $0x10] sm:$0xff]
      %v181 = vld [vmem:[%s169 + $0x18] sm:$0xf]
      %v182 = vld [vmem:[%s169 + $0x1c] sm:$0xff]
      %v183 = vld [vmem:[%s169 + $0x24] sm:$0xff]
      %v184 = vld [vmem:[%s169 + $0x2c] sm:$0xff]
      %v185 = vld [vmem:[%s169 + $0x34] sm:$0xf]
      %v186 = vld [vmem:[%s169 + $0x38] sm:$0xff]
      %v187 = vld [vmem:[%s169 + $0x40] sm:$0xff]
      %v188 = vld [vmem:[%s169 + $0x48] sm:$0xff]
      %v189 = vld [vmem:[%s169 + $0x50] sm:$0xf]
      %v190 = vld [vmem:[%s169 + $0x54] sm:$0xff]
      %v191 = vld [vmem:[%s169 + $0x5c] sm:$0xff]
      %v192 = vld [vmem:[%s169 + $0x64] sm:$0xff]
      %v193 = vld [vmem:[%s169 + $0x6c] sm:$0xf]
      %v194 = vld [vmem:[%s169 + $0x70] sm:$0xff]
      %v195 = vld [vmem:[%s169 + $0x78] sm:$0xff]
      %v196 = vld [vmem:[%s169 + $0x80] sm:$0xff]
      %v197 = vld [vmem:[%s169 + $0x88] sm:$0xf]
      %v198 = vld [vmem:[%s169 + $0x8c] sm:$0xff]
      %v199 = vld [vmem:[%s169 + $0x94] sm:$0xff]
      %v200 = vld [vmem:[%s169 + $0x9c] sm:$0xff]
      %v201 = vld [vmem:[%s169 + $0xa4] sm:$0xf]
      %v202 = vld [vmem:[%s169 + $0xa8] sm:$0xff]
      %v203 = vld [vmem:[%s169 + $0xb0] sm:$0xff]
      %v204 = vld [vmem:[%s169 + $0xb8] sm:$0xff]
      %v205 = vld [vmem:[%s169 + $0xc0] sm:$0xf]
      %v206 = vld [vmem:[%s169 + $0xc4] sm:$0xff]
      %v207 = vld [vmem:[%s169 + $0xcc] sm:$0xff]
      %v208 = vld [vmem:[%s169 + $0xd4] sm:$0xff]
      %v209 = vld [vmem:[%s169 + $0xdc] sm:$0xf]
      %v210 = vld [vmem:[%s169 + $0xe0] sm:$0xff]
      %v211 = vld [vmem:[%s169 + $0xe8] sm:$0xff]
      %v212 = vld [vmem:[%s169 + $0xf0] sm:$0xff]
      %v213 = vld [vmem:[%s169 + $0xf8] sm:$0xf]
      %v214 = vld [vmem:[%s169 + $0xfc] sm:$0xff]
      %v215 = vld [vmem:[%s169 + $0x104] sm:$0xff]
      %v216 = vld [vmem:[%s169 + $0x10c] sm:$0xff]
      %v217 = vld [vmem:[%s169 + $0x114] sm:$0xf]
      %v218 = vld [vmem:[%s169 + $0x118] sm:$0xff]
      %v219 = vld [vmem:[%s169 + $0x120] sm:$0xff]
      %v220 = vld [vmem:[%s169 + $0x128] sm:$0xff]
      %v221 = vld [vmem:[%s169 + $0x130] sm:$0xf]
      %v222 = vld [vmem:[%s169 + $0x134] sm:$0xff]
      %v223 = vld [vmem:[%s169 + $0x13c] sm:$0xff]
      %v224 = vld [vmem:[%s169 + $0x144] sm:$0xff]
      %v225 = vld [vmem:[%s169 + $0x14c] sm:$0xf]
      %v226 = vld [vmem:[%s169 + $0x150] sm:$0xff]
      %v227 = vld [vmem:[%s169 + $0x158] sm:$0xff]
      %v228 = vld [vmem:[%s169 + $0x160] sm:$0xff]
      %v229 = vld [vmem:[%s169 + $0x168] sm:$0xf]
      %v230 = vld [vmem:[%s169 + $0x16c] sm:$0xff]
      %v231 = vld [vmem:[%s169 + $0x174] sm:$0xff]
      %v232 = vld [vmem:[%s169 + $0x17c] sm:$0xff]
      %v233 = vld [vmem:[%s169 + $0x184] sm:$0xf]
      %v234 = vld [vmem:[%s169 + $0x188] sm:$0xff]
      %v235 = vld [vmem:[%s169 + $0x190] sm:$0xff]
      %v236 = vld [vmem:[%s169 + $0x198] sm:$0xff]
      %v237 = vld [vmem:[%s169 + $0x1a0] sm:$0xf]
      %v238 = vld [vmem:[%s169 + $0x1a4] sm:$0xff]
      %v239 = vld [vmem:[%s169 + $0x1ac] sm:$0xff]
      %v240 = vld [vmem:[%s169 + $0x1b4] sm:$0xff]
      %v241 = vld [vmem:[%s169 + $0x1bc] sm:$0xf]
      %v242 = vld [vmem:[%s1] sm:$0xf]
      %v243 = vld [vmem:[%s1 + $0x4] sm:$0xf]
      %v244 = vld [vmem:[%s1 + $0x8] sm:$0xf]
      %v245 = vld [vmem:[%s1 + $0xc] sm:$0xf]
      %v246 = vld [vmem:[%s1 + $0x10] sm:$0xf]
      %v247 = vld [vmem:[%s1 + $0x14] sm:$0xf]
      %v248 = vld [vmem:[%s1 + $0x18] sm:$0xf]
      %v249 = vld [vmem:[%s1 + $0x1c] sm:$0xf]
      %v250 = vld [vmem:[%s1 + $0x20] sm:$0xf]
      %v251 = vld [vmem:[%s1 + $0x24] sm:$0xf]
      %v252 = vld [vmem:[%s1 + $0x28] sm:$0xf]
      %v253 = vld [vmem:[%s1 + $0x2c] sm:$0xf]
      %v254 = vld [vmem:[%s1 + $0x30] sm:$0xf]
      %v255 = vld [vmem:[%s1 + $0x34] sm:$0xf]
      %v256 = vld [vmem:[%s1 + $0x38] sm:$0xf]
      %v257 = vld [vmem:[%s1 + $0x3c] sm:$0xf]
      %v258 = vld [vmem:[%s1 + $0x40] sm:$0xf]
      %v259 = vld [vmem:[%s1 + $0x44] sm:$0xf]
      %v260 = vld [vmem:[%s1 + $0x48] sm:$0xf]
      %v261 = vld [vmem:[%s1 + $0x4c] sm:$0xf]
      %v262 = vld [vmem:[%s1 + $0x50] sm:$0xf]
      %v263 = vld [vmem:[%s1 + $0x54] sm:$0xf]
      %v264 = vld [vmem:[%s1 + $0x58] sm:$0xf]
      %v265 = vld [vmem:[%s1 + $0x5c] sm:$0xf]
      %v266 = vld [vmem:[%s1 + $0x60] sm:$0xf]
      %v267 = vld [vmem:[%s1 + $0x64] sm:$0xf]
      %v268 = vld [vmem:[%s1 + $0x68] sm:$0xf]
      %v269 = vld [vmem:[%s1 + $0x6c] sm:$0xf]
      %v270 = vld [vmem:[%s1 + $0x70] sm:$0xf]
      %v271 = vld [vmem:[%s1 + $0x74] sm:$0xf]
      %v272 = vld [vmem:[%s1 + $0x78] sm:$0xf]
      %v273 = vld [vmem:[%s1 + $0x7c] sm:$0xf]
      %v274 = vld [vmem:[%s1 + $0x80] sm:$0xf]
      %v275 = vld [vmem:[%s1 + $0x84] sm:$0xf]
      %v276 = vld [vmem:[%s1 + $0x88] sm:$0xf]
      %v277 = vld [vmem:[%s1 + $0x8c] sm:$0xf]
      %v278 = vld [vmem:[%s1 + $0x90] sm:$0xf]
      %v279 = vld [vmem:[%s1 + $0x94] sm:$0xf]
      %v280 = vld [vmem:[%s1 + $0x98] sm:$0xf]
      %v281 = vld [vmem:[%s1 + $0x9c] sm:$0xf]
      %v282 = vld [vmem:[%s1 + $0xa0] sm:$0xf]
      %v283 = vld [vmem:[%s1 + $0xa4] sm:$0xf]
      %v284 = vld [vmem:[%s1 + $0xa8] sm:$0xf]
      %v285 = vld [vmem:[%s1 + $0xac] sm:$0xf]
      %v286 = vld [vmem:[%s1 + $0xb0] sm:$0xf]
      %v287 = vld [vmem:[%s1 + $0xb4] sm:$0xf]
      %v288 = vld [vmem:[%s1 + $0xb8] sm:$0xf]
      %v289 = vld [vmem:[%s1 + $0xbc] sm:$0xf]
      %v290 = vld [vmem:[%s1 + $0xc0] sm:$0xf]
      %v291 = vld [vmem:[%s1 + $0xc4] sm:$0xf]
      %v292 = vld [vmem:[%s1 + $0xc8] sm:$0xf]
      %v293 = vld [vmem:[%s1 + $0xcc] sm:$0xf]
      %v294 = vld [vmem:[%s1 + $0xd0] sm:$0xf]
      %v295 = vld [vmem:[%s1 + $0xd4] sm:$0xf]
      %v296 = vld [vmem:[%s1 + $0xd8] sm:$0xf]
      %v297 = vld [vmem:[%s1 + $0xdc] sm:$0xf]
      %v298 = vld [vmem:[%s1 + $0xe0] sm:$0xf]
      %v299 = vld [vmem:[%s1 + $0xe4] sm:$0xf]
      %v300 = vld [vmem:[%s1 + $0xe8] sm:$0xf]
      %v301 = vld [vmem:[%s1 + $0xec] sm:$0xf]
      %v302 = vld [vmem:[%s1 + $0xf0] sm:$0xf]
      %v303 = vld [vmem:[%s1 + $0xf4] sm:$0xf]
      %v304 = vld [vmem:[%s1 + $0xf8] sm:$0xf]
      %v305 = vld [vmem:[%s1 + $0xfc] sm:$0xf]
      %v306 = vld [vmem:[%s1 + $0x100] sm:$0xf]
      %v307 = vld [vmem:[%s1 + $0x104] sm:$0xf]
      %v308 = vld [vmem:[%s1 + $0x108] sm:$0xf]
      %v309 = vld [vmem:[%s1 + $0x10c] sm:$0xf]
      %v310 = vld [vmem:[%s1 + $0x110] sm:$0xf]
      %v311 = vld [vmem:[%s1 + $0x114] sm:$0xf]
      %v312 = vld [vmem:[%s1 + $0x118] sm:$0xf]
      %v313 = vld [vmem:[%s1 + $0x11c] sm:$0xf]
      %v314 = vld [vmem:[%s1 + $0x120] sm:$0xf]
      %v315 = vld [vmem:[%s1 + $0x124] sm:$0xf]
      %v316 = vld [vmem:[%s1 + $0x128] sm:$0xf]
      %v317 = vld [vmem:[%s1 + $0x12c] sm:$0xf]
      %v318 = vld [vmem:[%s1 + $0x130] sm:$0xf]
      %v319 = vld [vmem:[%s1 + $0x134] sm:$0xf]
      %v320 = vld [vmem:[%s1 + $0x138] sm:$0xf]
      %v321 = vld [vmem:[%s1 + $0x13c] sm:$0xf]
      %v322 = vld [vmem:[%s1 + $0x140] sm:$0xf]
      %v323 = vld [vmem:[%s1 + $0x144] sm:$0xf]
      %v324 = vld [vmem:[%s1 + $0x148] sm:$0xf]
      %v325 = vld [vmem:[%s1 + $0x14c] sm:$0xf]
      %v326 = vld [vmem:[%s1 + $0x150] sm:$0xf]
      %v327 = vld [vmem:[%s1 + $0x154] sm:$0xf]
      %v328 = vld [vmem:[%s1 + $0x158] sm:$0xf]
      %v329 = vld [vmem:[%s1 + $0x15c] sm:$0xf]
      %v330 = vld [vmem:[%s1 + $0x160] sm:$0xf]
      %v331 = vld [vmem:[%s1 + $0x164] sm:$0xf]
      %v332 = vld [vmem:[%s1 + $0x168] sm:$0xf]
      %v333 = vld [vmem:[%s1 + $0x16c] sm:$0xf]
      %v334 = vld [vmem:[%s1 + $0x170] sm:$0xf]
      %v335 = vld [vmem:[%s1 + $0x174] sm:$0xf]
      %v336 = vld [vmem:[%s1 + $0x178] sm:$0xf]
      %v337 = vld [vmem:[%s1 + $0x17c] sm:$0xf]
      %v338 = vld [vmem:[%s1 + $0x180] sm:$0xf]
      %v339 = vld [vmem:[%s1 + $0x184] sm:$0xf]
      %v340 = vld [vmem:[%s1 + $0x188] sm:$0xf]
      %v341 = vld [vmem:[%s1 + $0x18c] sm:$0xf]
      %v342 = vld [vmem:[%s2] sm:$0x1]
      %v344 = vlaneseq
      %v345 = vshrl.u32 %v344, 7
      %v346 = vsub.s32 0, %v345
      %v347 = vrot.slane %v342, %v346
      %v413 = vunpack.c.l.b16 %v178
      %v414 = vunpack.c.h.b16 %v178
      %v415 = vunpack.c.l.b16 %v179
      %v416 = vunpack.c.h.b16 %v179
      %v417 = vunpack.c.l.b16 %v180
      %v418 = vunpack.c.h.b16 %v180
      %v419 = vunpack.c.l.b16 %v181
      %v420 = vunpack.c.l.b16 %v182
      %v421 = vunpack.c.h.b16 %v182
      %v422 = vunpack.c.l.b16 %v183
      %v423 = vunpack.c.h.b16 %v183
      %v424 = vunpack.c.l.b16 %v184
      %v425 = vunpack.c.h.b16 %v184
      %v426 = vunpack.c.l.b16 %v185
      %v427 = vunpack.c.l.b16 %v186
      %v428 = vunpack.c.h.b16 %v186
      %v429 = vunpack.c.l.b16 %v187
      %v430 = vunpack.c.h.b16 %v187
      %v431 = vunpack.c.l.b16 %v188
      %v432 = vunpack.c.h.b16 %v188
      %v433 = vunpack.c.l.b16 %v189
      %v434 = vunpack.c.l.b16 %v190
      %v435 = vunpack.c.h.b16 %v190
      %v436 = vunpack.c.l.b16 %v191
      %v437 = vunpack.c.h.b16 %v191
      %v438 = vunpack.c.l.b16 %v192
      %v439 = vunpack.c.h.b16 %v192
      %v440 = vunpack.c.l.b16 %v193
      %v441 = vunpack.c.l.b16 %v194
      %v442 = vunpack.c.h.b16 %v194
      %v443 = vunpack.c.l.b16 %v195
      %v444 = vunpack.c.h.b16 %v195
      %v445 = vunpack.c.l.b16 %v196
      %v446 = vunpack.c.h.b16 %v196
      %v447 = vunpack.c.l.b16 %v197
      %v448 = vunpack.c.l.b16 %v198
      %v449 = vunpack.c.h.b16 %v198
      %v450 = vunpack.c.l.b16 %v199
      %v451 = vunpack.c.h.b16 %v199
      %v452 = vunpack.c.l.b16 %v200
      %v453 = vunpack.c.h.b16 %v200
      %v454 = vunpack.c.l.b16 %v201
      %v455 = vunpack.c.l.b16 %v202
      %v456 = vunpack.c.h.b16 %v202
      %v457 = vunpack.c.l.b16 %v203
      %v458 = vunpack.c.h.b16 %v203
      %v459 = vunpack.c.l.b16 %v204
      %v460 = vunpack.c.h.b16 %v204
      %v461 = vunpack.c.l.b16 %v205
      %v462 = vunpack.c.l.b16 %v206
      %v463 = vunpack.c.h.b16 %v206
      %v464 = vunpack.c.l.b16 %v207
      %v465 = vunpack.c.h.b16 %v207
      %v466 = vunpack.c.l.b16 %v208
      %v467 = vunpack.c.h.b16 %v208
      %v468 = vunpack.c.l.b16 %v209
      %v469 = vunpack.c.l.b16 %v210
      %v470 = vunpack.c.h.b16 %v210
      %v471 = vunpack.c.l.b16 %v211
      %v472 = vunpack.c.h.b16 %v211
      %v473 = vunpack.c.l.b16 %v212
      %v474 = vunpack.c.h.b16 %v212
      %v475 = vunpack.c.l.b16 %v213
      %v476 = vunpack.c.l.b16 %v214
      %v477 = vunpack.c.h.b16 %v214
      %v478 = vunpack.c.l.b16 %v215
      %v479 = vunpack.c.h.b16 %v215
      %v480 = vunpack.c.l.b16 %v216
      %v481 = vunpack.c.h.b16 %v216
      %v482 = vunpack.c.l.b16 %v217
      %v483 = vunpack.c.l.b16 %v218
      %v484 = vunpack.c.h.b16 %v218
      %v485 = vunpack.c.l.b16 %v219
      %v486 = vunpack.c.h.b16 %v219
      %v487 = vunpack.c.l.b16 %v220
      %v488 = vunpack.c.h.b16 %v220
      %v489 = vunpack.c.l.b16 %v221
      %v490 = vunpack.c.l.b16 %v222
      %v491 = vunpack.c.h.b16 %v222
      %v492 = vunpack.c.l.b16 %v223
      %v493 = vunpack.c.h.b16 %v223
      %v494 = vunpack.c.l.b16 %v224
      %v495 = vunpack.c.h.b16 %v224
      %v496 = vunpack.c.l.b16 %v225
      %v497 = vunpack.c.l.b16 %v226
      %v498 = vunpack.c.h.b16 %v226
      %v499 = vunpack.c.l.b16 %v227
      %v500 = vunpack.c.h.b16 %v227
      %v501 = vunpack.c.l.b16 %v228
      %v502 = vunpack.c.h.b16 %v228
      %v503 = vunpack.c.l.b16 %v229
      %v504 = vunpack.c.l.b16 %v230
      %v505 = vunpack.c.h.b16 %v230
      %v506 = vunpack.c.l.b16 %v231
      %v507 = vunpack.c.h.b16 %v231
      %v508 = vunpack.c.l.b16 %v232
      %v509 = vunpack.c.h.b16 %v232
      %v510 = vunpack.c.l.b16 %v233
      %v511 = vunpack.c.l.b16 %v234
      %v512 = vunpack.c.h.b16 %v234
      %v513 = vunpack.c.l.b16 %v235
      %v514 = vunpack.c.h.b16 %v235
      %v515 = vunpack.c.l.b16 %v236
      %v516 = vunpack.c.h.b16 %v236
      %v517 = vunpack.c.l.b16 %v237
      %v518 = vunpack.c.l.b16 %v238
      %v519 = vunpack.c.h.b16 %v238
      %v520 = vunpack.c.l.b16 %v239
      %v521 = vunpack.c.h.b16 %v239
      %v522 = vunpack.c.l.b16 %v240
      %v523 = vunpack.c.h.b16 %v240
      %v524 = vunpack.c.l.b16 %v241
      %v525 = vpack.c.b16 %v420, %v413
      %v526 = vpack.c.b16 %v421, %v414
      %v527 = vpack.c.b16 %v422, %v415
      %v528 = vpack.c.b16 %v423, %v416
      %v529 = vpack.c.b16 %v424, %v417
      %v530 = vpack.c.b16 %v425, %v418
      %v531 = vpack.c.b16 %v426, %v419
      %v532 = vpack.c.b16 %v434, %v427
      %v533 = vpack.c.b16 %v435, %v428
      %v534 = vpack.c.b16 %v436, %v429
      %v535 = vpack.c.b16 %v437, %v430
      %v536 = vpack.c.b16 %v438, %v431
      %v537 = vpack.c.b16 %v439, %v432
      %v538 = vpack.c.b16 %v440, %v433
      %v539 = vpack.c.b16 %v448, %v441
      %v540 = vpack.c.b16 %v449, %v442
      %v541 = vpack.c.b16 %v450, %v443
      %v542 = vpack.c.b16 %v451, %v444
      %v543 = vpack.c.b16 %v452, %v445
      %v544 = vpack.c.b16 %v453, %v446
      %v545 = vpack.c.b16 %v454, %v447
      %v546 = vpack.c.b16 %v462, %v455
      %v547 = vpack.c.b16 %v463, %v456
      %v548 = vpack.c.b16 %v464, %v457
      %v549 = vpack.c.b16 %v465, %v458
      %v550 = vpack.c.b16 %v466, %v459
      %v551 = vpack.c.b16 %v467, %v460
      %v552 = vpack.c.b16 %v468, %v461
      %v553 = vpack.c.b16 %v476, %v469
      %v554 = vpack.c.b16 %v477, %v470
      %v555 = vpack.c.b16 %v478, %v471
      %v556 = vpack.c.b16 %v479, %v472
      %v557 = vpack.c.b16 %v480, %v473
      %v558 = vpack.c.b16 %v481, %v474
      %v559 = vpack.c.b16 %v482, %v475
      %v560 = vpack.c.b16 %v490, %v483
      %v561 = vpack.c.b16 %v491, %v484
      %v562 = vpack.c.b16 %v492, %v485
      %v563 = vpack.c.b16 %v493, %v486
      %v564 = vpack.c.b16 %v494, %v487
      %v565 = vpack.c.b16 %v495, %v488
      %v566 = vpack.c.b16 %v496, %v489
      %v567 = vpack.c.b16 %v504, %v497
      %v568 = vpack.c.b16 %v505, %v498
      %v569 = vpack.c.b16 %v506, %v499
      %v570 = vpack.c.b16 %v507, %v500
      %v571 = vpack.c.b16 %v508, %v501
      %v572 = vpack.c.b16 %v509, %v502
      %v573 = vpack.c.b16 %v510, %v503
      %v574 = vpack.c.b16 %v518, %v511
      %v575 = vpack.c.b16 %v519, %v512
      %v576 = vpack.c.b16 %v520, %v513
      %v577 = vpack.c.b16 %v521, %v514
      %v578 = vpack.c.b16 %v522, %v515
      %v579 = vpack.c.b16 %v523, %v516
      %v580 = vpack.c.b16 %v524, %v517
      %v729 = vunpack.c.l.b16 %v242
      %v730 = vunpack.c.l.b16 %v243
      %v731 = vunpack.c.l.b16 %v244
      %v732 = vunpack.c.l.b16 %v245
      %v733 = vunpack.c.l.b16 %v246
      %v734 = vunpack.c.l.b16 %v247
      %v735 = vunpack.c.l.b16 %v248
      %v736 = vunpack.c.l.b16 %v249
      %v737 = vunpack.c.l.b16 %v250
      %v738 = vunpack.c.l.b16 %v251
      %v739 = vunpack.c.l.b16 %v252
      %v740 = vunpack.c.l.b16 %v253
      %v741 = vunpack.c.l.b16 %v254
      %v742 = vunpack.c.l.b16 %v255
      %v743 = vunpack.c.l.b16 %v256
      %v744 = vunpack.c.l.b16 %v257
      %v745 = vunpack.c.l.b16 %v258
      %v746 = vunpack.c.l.b16 %v259
      %v747 = vunpack.c.l.b16 %v260
      %v748 = vunpack.c.l.b16 %v261
      %v749 = vunpack.c.l.b16 %v262
      %v750 = vunpack.c.l.b16 %v263
      %v751 = vunpack.c.l.b16 %v264
      %v752 = vunpack.c.l.b16 %v265
      %v753 = vunpack.c.l.b16 %v266
      %v754 = vunpack.c.l.b16 %v267
      %v755 = vunpack.c.l.b16 %v268
      %v756 = vunpack.c.l.b16 %v269
      %v757 = vunpack.c.l.b16 %v270
      %v758 = vunpack.c.l.b16 %v271
      %v759 = vunpack.c.l.b16 %v272
      %v760 = vunpack.c.l.b16 %v273
      %v761 = vunpack.c.l.b16 %v274
      %v762 = vunpack.c.l.b16 %v275
      %v763 = vunpack.c.l.b16 %v276
      %v764 = vunpack.c.l.b16 %v277
      %v765 = vunpack.c.l.b16 %v278
      %v766 = vunpack.c.l.b16 %v279
      %v767 = vunpack.c.l.b16 %v280
      %v768 = vunpack.c.l.b16 %v281
      %v769 = vunpack.c.l.b16 %v282
      %v770 = vunpack.c.l.b16 %v283
      %v771 = vunpack.c.l.b16 %v284
      %v772 = vunpack.c.l.b16 %v285
      %v773 = vunpack.c.l.b16 %v286
      %v774 = vunpack.c.l.b16 %v287
      %v775 = vunpack.c.l.b16 %v288
      %v776 = vunpack.c.l.b16 %v289
      %v777 = vunpack.c.l.b16 %v290
      %v778 = vunpack.c.l.b16 %v291
      %v779 = vunpack.c.l.b16 %v292
      %v780 = vunpack.c.l.b16 %v293
      %v781 = vunpack.c.l.b16 %v294
      %v782 = vunpack.c.l.b16 %v295
      %v783 = vunpack.c.l.b16 %v296
      %v784 = vunpack.c.l.b16 %v297
      %v785 = vunpack.c.l.b16 %v298
      %v786 = vunpack.c.l.b16 %v299
      %v787 = vunpack.c.l.b16 %v300
      %v788 = vunpack.c.l.b16 %v301
      %v789 = vunpack.c.l.b16 %v302
      %v790 = vunpack.c.l.b16 %v303
      %v791 = vunpack.c.l.b16 %v304
      %v792 = vunpack.c.l.b16 %v305
      %v793 = vunpack.c.l.b16 %v306
      %v794 = vunpack.c.l.b16 %v307
      %v795 = vunpack.c.l.b16 %v308
      %v796 = vunpack.c.l.b16 %v309
      %v797 = vunpack.c.l.b16 %v310
      %v798 = vunpack.c.l.b16 %v311
      %v799 = vunpack.c.l.b16 %v312
      %v800 = vunpack.c.l.b16 %v313
      %v801 = vunpack.c.l.b16 %v314
      %v802 = vunpack.c.l.b16 %v315
      %v803 = vunpack.c.l.b16 %v316
      %v804 = vunpack.c.l.b16 %v317
      %v805 = vunpack.c.l.b16 %v318
      %v806 = vunpack.c.l.b16 %v319
      %v807 = vunpack.c.l.b16 %v320
      %v808 = vunpack.c.l.b16 %v321
      %v809 = vunpack.c.l.b16 %v322
      %v810 = vunpack.c.l.b16 %v323
      %v811 = vunpack.c.l.b16 %v324
      %v812 = vunpack.c.l.b16 %v325
      %v813 = vunpack.c.l.b16 %v326
      %v814 = vunpack.c.l.b16 %v327
      %v815 = vunpack.c.l.b16 %v328
      %v816 = vunpack.c.l.b16 %v329
      %v817 = vunpack.c.l.b16 %v330
      %v818 = vunpack.c.l.b16 %v331
      %v819 = vunpack.c.l.b16 %v332
      %v820 = vunpack.c.l.b16 %v333
      %v821 = vunpack.c.l.b16 %v334
      %v822 = vunpack.c.l.b16 %v335
      %v823 = vunpack.c.l.b16 %v336
      %v824 = vunpack.c.l.b16 %v337
      %v825 = vunpack.c.l.b16 %v338
      %v826 = vunpack.c.l.b16 %v339
      %v827 = vunpack.c.l.b16 %v340
      %v828 = vunpack.c.l.b16 %v341
      %v829 = vpack.c.b16 %v730, %v729
      %v830 = vpack.c.b16 %v732, %v731
      %v831 = vpack.c.b16 %v734, %v733
      %v832 = vpack.c.b16 %v736, %v735
      %v833 = vpack.c.b16 %v738, %v737
      %v834 = vpack.c.b16 %v740, %v739
      %v835 = vpack.c.b16 %v742, %v741
      %v836 = vpack.c.b16 %v744, %v743
      %v837 = vpack.c.b16 %v746, %v745
      %v838 = vpack.c.b16 %v748, %v747
      %v839 = vpack.c.b16 %v750, %v749
      %v840 = vpack.c.b16 %v752, %v751
      %v841 = vpack.c.b16 %v754, %v753
      %v842 = vpack.c.b16 %v756, %v755
      %v843 = vpack.c.b16 %v758, %v757
      %v844 = vpack.c.b16 %v760, %v759
      %v845 = vpack.c.b16 %v762, %v761
      %v846 = vpack.c.b16 %v764, %v763
      %v847 = vpack.c.b16 %v766, %v765
      %v848 = vpack.c.b16 %v768, %v767
      %v849 = vpack.c.b16 %v770, %v769
      %v850 = vpack.c.b16 %v772, %v771
      %v851 = vpack.c.b16 %v774, %v773
      %v852 = vpack.c.b16 %v776, %v775
      %v853 = vpack.c.b16 %v778, %v777
      %v854 = vpack.c.b16 %v780, %v779
      %v855 = vpack.c.b16 %v782, %v781
      %v856 = vpack.c.b16 %v784, %v783
      %v857 = vpack.c.b16 %v786, %v785
      %v858 = vpack.c.b16 %v788, %v787
      %v859 = vpack.c.b16 %v790, %v789
      %v860 = vpack.c.b16 %v792, %v791
      %v861 = vpack.c.b16 %v794, %v793
      %v862 = vpack.c.b16 %v796, %v795
      %v863 = vpack.c.b16 %v798, %v797
      %v864 = vpack.c.b16 %v800, %v799
      %v865 = vpack.c.b16 %v802, %v801
      %v866 = vpack.c.b16 %v804, %v803
      %v867 = vpack.c.b16 %v806, %v805
      %v868 = vpack.c.b16 %v808, %v807
      %v869 = vpack.c.b16 %v810, %v809
      %v870 = vpack.c.b16 %v812, %v811
      %v871 = vpack.c.b16 %v814, %v813
      %v872 = vpack.c.b16 %v816, %v815
      %v873 = vpack.c.b16 %v818, %v817
      %v874 = vpack.c.b16 %v820, %v819
      %v875 = vpack.c.b16 %v822, %v821
      %v876 = vpack.c.b16 %v824, %v823
      %v877 = vpack.c.b16 %v826, %v825
      %v878 = vpack.c.b16 %v828, %v827
      %vm929 = vcmask 261120
      %v931 = vsel %vm929, %v531, 0
      %v934 = vsel %vm929, %v538, 0
      %v937 = vsel %vm929, %v545, 0
      %v940 = vsel %vm929, %v552, 0
      %v943 = vsel %vm929, %v559, 0
      %v946 = vsel %vm929, %v566, 0
      %v949 = vsel %vm929, %v573, 0
      %v952 = vsel %vm929, %v580, 0
      %954 = vmatprep.subr.bf16.mxu0 0
      %955 = vmatpush1.bf16.msra.mxu0 %v836
      %956 = vmatprep.subr.bf16.mxu0 0
      %957 = vmatpush1.bf16.msra.mxu0 %v835
      %958 = vmatprep.subr.bf16.mxu0 0
      %959 = vmatpush1.bf16.msra.mxu0 %v834
      %960 = vmatprep.subr.bf16.mxu0 0
      %961 = vmatpush1.bf16.msra.mxu0 %v833
      %962 = vmatprep.subr.bf16.mxu0 0
      %963 = vmatpush1.bf16.msra.mxu0 %v832
      %964 = vmatprep.subr.bf16.mxu0 0
      %965 = vmatpush1.bf16.msra.mxu0 %v831
      %966 = vmatprep.subr.bf16.mxu0 0
      %967 = vmatpush1.bf16.msra.mxu0 %v830
      %968 = vmatprep.subr.bf16.mxu0 0
      %969 = vmatpush1.bf16.msra.mxu0 %v829
      %970 = vmatprep.subr.bf16.mxu0 0
      %971 = vmatpush2.bf16.msra.mxu0 %v844
      %972 = vmatprep.subr.bf16.mxu0 0
      %973 = vmatpush2.bf16.msra.mxu0 %v843
      %974 = vmatprep.subr.bf16.mxu0 0
      %975 = vmatpush2.bf16.msra.mxu0 %v842
      %976 = vmatprep.subr.bf16.mxu0 0
      %977 = vmatpush2.bf16.msra.mxu0 %v841
      %978 = vmatprep.subr.bf16.mxu0 0
      %979 = vmatpush2.bf16.msra.mxu0 %v840
      %980 = vmatprep.subr.bf16.mxu0 0
      %981 = vmatpush2.bf16.msra.mxu0 %v839
      %982 = vmatprep.subr.bf16.mxu0 0
      %983 = vmatpush2.bf16.msra.mxu0 %v838
      %984 = vmatprep.subr.bf16.mxu0 0
      %985 = vmatpush2.bf16.msra.mxu0 %v837
      %986 = vmatprep.mubr.bf16.mxu0 %v526
      %987 = vmatmul.mubr.bf16.gmra.mxu0 %v525
      %v988 = vpop.f32.mrf.mxu0
      %v989 = vadd.f32 %v347, %v988
      %v990 = vpop.f32.mrf.mxu0
      %v991 = vpop.f32.mrf.mxu0
      %v992 = vadd.f32 %v347, %v991
      %v993 = vpop.f32.mrf.mxu0
      %994 = vmatprep.mubr.bf16.mxu0 %v533
      %995 = vmatmul.mubr.bf16.gmra.mxu0 %v532
      %v996 = vpop.f32.mrf.mxu0
      %v997 = vadd.f32 %v347, %v996
      %v998 = vpop.f32.mrf.mxu0
      %v999 = vpop.f32.mrf.mxu0
      %v1000 = vadd.f32 %v347, %v999
      %v1001 = vpop.f32.mrf.mxu0
      %1002 = vmatprep.mubr.bf16.mxu0 %v540
      %1003 = vmatmul.mubr.bf16.gmra.mxu0 %v539
      %v1004 = vpop.f32.mrf.mxu0
      %v1005 = vadd.f32 %v347, %v1004
      %v1006 = vpop.f32.mrf.mxu0
      %v1007 = vpop.f32.mrf.mxu0
      %v1008 = vadd.f32 %v347, %v1007
      %v1009 = vpop.f32.mrf.mxu0
      %1010 = vmatprep.mubr.bf16.mxu0 %v547
      %1011 = vmatmul.mubr.bf16.gmra.mxu0 %v546
      %v1012 = vpop.f32.mrf.mxu0
      %v1013 = vadd.f32 %v347, %v1012
      %v1014 = vpop.f32.mrf.mxu0
      %v1015 = vpop.f32.mrf.mxu0
      %v1016 = vadd.f32 %v347, %v1015
      %v1017 = vpop.f32.mrf.mxu0
      %1018 = vmatprep.mubr.bf16.mxu0 %v554
      %1019 = vmatmul.mubr.bf16.gmra.mxu0 %v553
      %v1020 = vpop.f32.mrf.mxu0
      %v1021 = vadd.f32 %v347, %v1020
      %v1022 = vpop.f32.mrf.mxu0
      %v1023 = vpop.f32.mrf.mxu0
      %v1024 = vadd.f32 %v347, %v1023
      %v1025 = vpop.f32.mrf.mxu0
      %1026 = vmatprep.mubr.bf16.mxu0 %v561
      %1027 = vmatmul.mubr.bf16.gmra.mxu0 %v560
      %v1028 = vpop.f32.mrf.mxu0
      %v1029 = vadd.f32 %v347, %v1028
      %v1030 = vpop.f32.mrf.mxu0
      %v1031 = vpop.f32.mrf.mxu0
      %v1032 = vadd.f32 %v347, %v1031
      %v1033 = vpop.f32.mrf.mxu0
      %1034 = vmatprep.mubr.bf16.mxu0 %v568
      %1035 = vmatmul.mubr.bf16.gmra.mxu0 %v567
      %v1036 = vpop.f32.mrf.mxu0
      %v1037 = vadd.f32 %v347, %v1036
      %v1038 = vpop.f32.mrf.mxu0
      %v1039 = vpop.f32.mrf.mxu0
      %v1040 = vadd.f32 %v347, %v1039
      %v1041 = vpop.f32.mrf.mxu0
      %1042 = vmatprep.mubr.bf16.mxu0 %v575
      %1043 = vmatmul.mubr.bf16.gmra.mxu0 %v574
      %v1044 = vpop.f32.mrf.mxu0
      %v1045 = vadd.f32 %v347, %v1044
      %v1046 = vpop.f32.mrf.mxu0
      %v1047 = vpop.f32.mrf.mxu0
      %v1048 = vadd.f32 %v347, %v1047
      %v1049 = vpop.f32.mrf.mxu0
      %1050 = vdwg.mxu0
      %1051 = vmatprep.subr.bf16.mxu0 0
      %1052 = vmatpush1.bf16.msra.mxu0 %v852
      %1053 = vmatprep.subr.bf16.mxu0 0
      %1054 = vmatpush1.bf16.msra.mxu0 %v851
      %1055 = vmatprep.subr.bf16.mxu0 0
      %1056 = vmatpush1.bf16.msra.mxu0 %v850
      %1057 = vmatprep.subr.bf16.mxu0 0
      %1058 = vmatpush1.bf16.msra.mxu0 %v849
      %1059 = vmatprep.subr.bf16.mxu0 0
      %1060 = vmatpush1.bf16.msra.mxu0 %v848
      %1061 = vmatprep.subr.bf16.mxu0 0
      %1062 = vmatpush1.bf16.msra.mxu0 %v847
      %1063 = vmatprep.subr.bf16.mxu0 0
      %1064 = vmatpush1.bf16.msra.mxu0 %v846
      %1065 = vmatprep.subr.bf16.mxu0 0
      %1066 = vmatpush1.bf16.msra.mxu0 %v845
      %1067 = vmatprep.subr.bf16.mxu0 0
      %1068 = vmatpush2.bf16.msra.mxu0 %v860
      %1069 = vmatprep.subr.bf16.mxu0 0
      %1070 = vmatpush2.bf16.msra.mxu0 %v859
      %1071 = vmatprep.subr.bf16.mxu0 0
      %1072 = vmatpush2.bf16.msra.mxu0 %v858
      %1073 = vmatprep.subr.bf16.mxu0 0
      %1074 = vmatpush2.bf16.msra.mxu0 %v857
      %1075 = vmatprep.subr.bf16.mxu0 0
      %1076 = vmatpush2.bf16.msra.mxu0 %v856
      %1077 = vmatprep.subr.bf16.mxu0 0
      %1078 = vmatpush2.bf16.msra.mxu0 %v855
      %1079 = vmatprep.subr.bf16.mxu0 0
      %1080 = vmatpush2.bf16.msra.mxu0 %v854
      %1081 = vmatprep.subr.bf16.mxu0 0
      %1082 = vmatpush2.bf16.msra.mxu0 %v853
      %1083 = vmatprep.mubr.bf16.mxu0 %v528
      %1084 = vmatmul.mubr.bf16.gmra.mxu0 %v527
      %v1085 = vpop.f32.mrf.mxu0
      %v1086 = vadd.f32 %v989, %v1085
      %v1087 = vpop.f32.mrf.mxu0
      %v1088 = vpop.f32.mrf.mxu0
      %v1089 = vadd.f32 %v992, %v1088
      %v1090 = vpop.f32.mrf.mxu0
      %1091 = vmatprep.mubr.bf16.mxu0 %v535
      %1092 = vmatmul.mubr.bf16.gmra.mxu0 %v534
      %v1093 = vpop.f32.mrf.mxu0
      %v1094 = vadd.f32 %v997, %v1093
      %v1095 = vpop.f32.mrf.mxu0
      %v1096 = vpop.f32.mrf.mxu0
      %v1097 = vadd.f32 %v1000, %v1096
      %v1098 = vpop.f32.mrf.mxu0
      %1099 = vmatprep.mubr.bf16.mxu0 %v542
      %1100 = vmatmul.mubr.bf16.gmra.mxu0 %v541
      %v1101 = vpop.f32.mrf.mxu0
      %v1102 = vadd.f32 %v1005, %v1101
      %v1103 = vpop.f32.mrf.mxu0
      %v1104 = vpop.f32.mrf.mxu0
      %v1105 = vadd.f32 %v1008, %v1104
      %v1106 = vpop.f32.mrf.mxu0
      %1107 = vmatprep.mubr.bf16.mxu0 %v549
      %1108 = vmatmul.mubr.bf16.gmra.mxu0 %v548
      %v1109 = vpop.f32.mrf.mxu0
      %v1110 = vadd.f32 %v1013, %v1109
      %v1111 = vpop.f32.mrf.mxu0
      %v1112 = vpop.f32.mrf.mxu0
      %v1113 = vadd.f32 %v1016, %v1112
      %v1114 = vpop.f32.mrf.mxu0
      %1115 = vmatprep.mubr.bf16.mxu0 %v556
      %1116 = vmatmul.mubr.bf16.gmra.mxu0 %v555
      %v1117 = vpop.f32.mrf.mxu0
      %v1118 = vadd.f32 %v1021, %v1117
      %v1119 = vpop.f32.mrf.mxu0
      %v1120 = vpop.f32.mrf.mxu0
      %v1121 = vadd.f32 %v1024, %v1120
      %v1122 = vpop.f32.mrf.mxu0
      %1123 = vmatprep.mubr.bf16.mxu0 %v563
      %1124 = vmatmul.mubr.bf16.gmra.mxu0 %v562
      %v1125 = vpop.f32.mrf.mxu0
      %v1126 = vadd.f32 %v1029, %v1125
      %v1127 = vpop.f32.mrf.mxu0
      %v1128 = vpop.f32.mrf.mxu0
      %v1129 = vadd.f32 %v1032, %v1128
      %v1130 = vpop.f32.mrf.mxu0
      %1131 = vmatprep.mubr.bf16.mxu0 %v570
      %1132 = vmatmul.mubr.bf16.gmra.mxu0 %v569
      %v1133 = vpop.f32.mrf.mxu0
      %v1134 = vadd.f32 %v1037, %v1133
      %v1135 = vpop.f32.mrf.mxu0
      %v1136 = vpop.f32.mrf.mxu0
      %v1137 = vadd.f32 %v1040, %v1136
      %v1138 = vpop.f32.mrf.mxu0
      %1139 = vmatprep.mubr.bf16.mxu0 %v577
      %1140 = vmatmul.mubr.bf16.gmra.mxu0 %v576
      %v1141 = vpop.f32.mrf.mxu0
      %v1142 = vadd.f32 %v1045, %v1141
      %v1143 = vpop.f32.mrf.mxu0
      %v1144 = vpop.f32.mrf.mxu0
      %v1145 = vadd.f32 %v1048, %v1144
      %v1146 = vpop.f32.mrf.mxu0
      %1147 = vdwg.mxu0
      %1148 = vmatprep.subr.bf16.mxu0 0
      %1149 = vmatpush1.bf16.msra.mxu0 %v868
      %1150 = vmatprep.subr.bf16.mxu0 0
      %1151 = vmatpush1.bf16.msra.mxu0 %v867
      %1152 = vmatprep.subr.bf16.mxu0 0
      %1153 = vmatpush1.bf16.msra.mxu0 %v866
      %1154 = vmatprep.subr.bf16.mxu0 0
      %1155 = vmatpush1.bf16.msra.mxu0 %v865
      %1156 = vmatprep.subr.bf16.mxu0 0
      %1157 = vmatpush1.bf16.msra.mxu0 %v864
      %1158 = vmatprep.subr.bf16.mxu0 0
      %1159 = vmatpush1.bf16.msra.mxu0 %v863
      %1160 = vmatprep.subr.bf16.mxu0 0
      %1161 = vmatpush1.bf16.msra.mxu0 %v862
      %1162 = vmatprep.subr.bf16.mxu0 0
      %1163 = vmatpush1.bf16.msra.mxu0 %v861
      %1164 = vmatprep.subr.bf16.mxu0 0
      %1165 = vmatpush2.bf16.msra.mxu0 %v876
      %1166 = vmatprep.subr.bf16.mxu0 0
      %1167 = vmatpush2.bf16.msra.mxu0 %v875
      %1168 = vmatprep.subr.bf16.mxu0 0
      %1169 = vmatpush2.bf16.msra.mxu0 %v874
      %1170 = vmatprep.subr.bf16.mxu0 0
      %1171 = vmatpush2.bf16.msra.mxu0 %v873
      %1172 = vmatprep.subr.bf16.mxu0 0
      %1173 = vmatpush2.bf16.msra.mxu0 %v872
      %1174 = vmatprep.subr.bf16.mxu0 0
      %1175 = vmatpush2.bf16.msra.mxu0 %v871
      %1176 = vmatprep.subr.bf16.mxu0 0
      %1177 = vmatpush2.bf16.msra.mxu0 %v870
      %1178 = vmatprep.subr.bf16.mxu0 0
      %1179 = vmatpush2.bf16.msra.mxu0 %v869
      %1180 = vmatprep.mubr.bf16.mxu0 %v530
      %1181 = vmatmul.mubr.bf16.gmra.mxu0 %v529
      %v1182 = vpop.f32.mrf.mxu0
      %v1183 = vadd.f32 %v1086, %v1182
      %v1184 = vpop.f32.mrf.mxu0
      %v1185 = vpop.f32.mrf.mxu0
      %v1186 = vadd.f32 %v1089, %v1185
      %v1187 = vpop.f32.mrf.mxu0
      %1188 = vmatprep.mubr.bf16.mxu0 %v537
      %1189 = vmatmul.mubr.bf16.gmra.mxu0 %v536
      %v1190 = vpop.f32.mrf.mxu0
      %v1191 = vadd.f32 %v1094, %v1190
      %v1192 = vpop.f32.mrf.mxu0
      %v1193 = vpop.f32.mrf.mxu0
      %v1194 = vadd.f32 %v1097, %v1193
      %v1195 = vpop.f32.mrf.mxu0
      %1196 = vmatprep.mubr.bf16.mxu0 %v544
      %1197 = vmatmul.mubr.bf16.gmra.mxu0 %v543
      %v1198 = vpop.f32.mrf.mxu0
      %v1199 = vadd.f32 %v1102, %v1198
      %v1200 = vpop.f32.mrf.mxu0
      %v1201 = vpop.f32.mrf.mxu0
      %v1202 = vadd.f32 %v1105, %v1201
      %v1203 = vpop.f32.mrf.mxu0
      %1204 = vmatprep.mubr.bf16.mxu0 %v551
      %1205 = vmatmul.mubr.bf16.gmra.mxu0 %v550
      %v1206 = vpop.f32.mrf.mxu0
      %v1207 = vadd.f32 %v1110, %v1206
      %v1208 = vpop.f32.mrf.mxu0
      %v1209 = vpop.f32.mrf.mxu0
      %v1210 = vadd.f32 %v1113, %v1209
      %v1211 = vpop.f32.mrf.mxu0
      %1212 = vmatprep.mubr.bf16.mxu0 %v558
      %1213 = vmatmul.mubr.bf16.gmra.mxu0 %v557
      %v1214 = vpop.f32.mrf.mxu0
      %v1215 = vadd.f32 %v1118, %v1214
      %v1216 = vpop.f32.mrf.mxu0
      %v1217 = vpop.f32.mrf.mxu0
      %v1218 = vadd.f32 %v1121, %v1217
      %v1219 = vpop.f32.mrf.mxu0
      %1220 = vmatprep.mubr.bf16.mxu0 %v565
      %1221 = vmatmul.mubr.bf16.gmra.mxu0 %v564
      %v1222 = vpop.f32.mrf.mxu0
      %v1223 = vadd.f32 %v1126, %v1222
      %v1224 = vpop.f32.mrf.mxu0
      %v1225 = vpop.f32.mrf.mxu0
      %v1226 = vadd.f32 %v1129, %v1225
      %v1227 = vpop.f32.mrf.mxu0
      %1228 = vmatprep.mubr.bf16.mxu0 %v572
      %1229 = vmatmul.mubr.bf16.gmra.mxu0 %v571
      %v1230 = vpop.f32.mrf.mxu0
      %v1231 = vadd.f32 %v1134, %v1230
      %v1232 = vpop.f32.mrf.mxu0
      %v1233 = vpop.f32.mrf.mxu0
      %v1234 = vadd.f32 %v1137, %v1233
      %v1235 = vpop.f32.mrf.mxu0
      %1236 = vmatprep.mubr.bf16.mxu0 %v579
      %1237 = vmatmul.mubr.bf16.gmra.mxu0 %v578
      %v1238 = vpop.f32.mrf.mxu0
      %v1239 = vadd.f32 %v1142, %v1238
      %v1240 = vpop.f32.mrf.mxu0
      %v1241 = vpop.f32.mrf.mxu0
      %v1242 = vadd.f32 %v1145, %v1241
      %v1243 = vpop.f32.mrf.mxu0
      %1244 = vdwg.mxu0
      %1245 = vmatprep.subr.bf16.mxu0 0
      %1246 = vmatpush1.bf16.msra.mxu0 0
      %1247 = vmatprep.subr.bf16.mxu0 0
      %1248 = vmatpush1.bf16.msra.mxu0 0
      %1249 = vmatprep.subr.bf16.mxu0 0
      %1250 = vmatpush1.bf16.msra.mxu0 0
      %1251 = vmatprep.subr.bf16.mxu0 0
      %1252 = vmatpush1.bf16.msra.mxu0 0
      %1253 = vmatprep.subr.bf16.mxu0 0
      %1254 = vmatpush1.bf16.msra.mxu0 0
      %1255 = vmatprep.subr.bf16.mxu0 0
      %1256 = vmatpush1.bf16.msra.mxu0 0
      %1257 = vmatprep.subr.bf16.mxu0 0
      %1258 = vmatpush1.bf16.msra.mxu0 %v878
      %1259 = vmatprep.subr.bf16.mxu0 0
      %1260 = vmatpush1.bf16.msra.mxu0 %v877
      %1261 = vmatprep.subr.bf16.mxu0 0
      %1262 = vmatpush2.bf16.msra.mxu0 0
      %1263 = vmatprep.subr.bf16.mxu0 0
      %1264 = vmatpush2.bf16.msra.mxu0 0
      %1265 = vmatprep.subr.bf16.mxu0 0
      %1266 = vmatpush2.bf16.msra.mxu0 0
      %1267 = vmatprep.subr.bf16.mxu0 0
      %1268 = vmatpush2.bf16.msra.mxu0 0
      %1269 = vmatprep.subr.bf16.mxu0 0
      %1270 = vmatpush2.bf16.msra.mxu0 0
      %1271 = vmatprep.subr.bf16.mxu0 0
      %1272 = vmatpush2.bf16.msra.mxu0 0
      %1273 = vmatprep.subr.bf16.mxu0 0
      %1274 = vmatpush2.bf16.msra.mxu0 0
      %1275 = vmatprep.subr.bf16.mxu0 0
      %1276 = vmatpush2.bf16.msra.mxu0 0
      %1277 = vmatprep.mubr.bf16.mxu0 0
      %1278 = vmatmul.mubr.bf16.gmra.mxu0 %v931
      %v1279 = vpop.f32.mrf.mxu0
      %v1280 = vadd.f32 %v1183, %v1279
      %v1281 = vpop.f32.mrf.mxu0
      %v1282 = vpop.f32.mrf.mxu0
      %v1283 = vadd.f32 %v1186, %v1282
      %v1284 = vpop.f32.mrf.mxu0
      %1285 = vmatprep.mubr.bf16.mxu0 0
      %1286 = vmatmul.mubr.bf16.gmra.mxu0 %v934
      %v1287 = vpop.f32.mrf.mxu0
      %v1288 = vadd.f32 %v1191, %v1287
      %v1289 = vpop.f32.mrf.mxu0
      %v1290 = vpop.f32.mrf.mxu0
      %v1291 = vadd.f32 %v1194, %v1290
      %v1292 = vpop.f32.mrf.mxu0
      %1293 = vmatprep.mubr.bf16.mxu0 0
      %1294 = vmatmul.mubr.bf16.gmra.mxu0 %v937
      %v1295 = vpop.f32.mrf.mxu0
      %v1296 = vadd.f32 %v1199, %v1295
      %v1297 = vpop.f32.mrf.mxu0
      %v1298 = vpop.f32.mrf.mxu0
      %v1299 = vadd.f32 %v1202, %v1298
      %v1300 = vpop.f32.mrf.mxu0
      %1301 = vmatprep.mubr.bf16.mxu0 0
      %1302 = vmatmul.mubr.bf16.gmra.mxu0 %v940
      %v1303 = vpop.f32.mrf.mxu0
      %v1304 = vadd.f32 %v1207, %v1303
      %v1305 = vpop.f32.mrf.mxu0
      %v1306 = vpop.f32.mrf.mxu0
      %v1307 = vadd.f32 %v1210, %v1306
      %v1308 = vpop.f32.mrf.mxu0
      %1309 = vmatprep.mubr.bf16.mxu0 0
      %1310 = vmatmul.mubr.bf16.gmra.mxu0 %v943
      %v1311 = vpop.f32.mrf.mxu0
      %v1312 = vadd.f32 %v1215, %v1311
      %v1313 = vpop.f32.mrf.mxu0
      %v1314 = vpop.f32.mrf.mxu0
      %v1315 = vadd.f32 %v1218, %v1314
      %v1316 = vpop.f32.mrf.mxu0
      %1317 = vmatprep.mubr.bf16.mxu0 0
      %1318 = vmatmul.mubr.bf16.gmra.mxu0 %v946
      %v1319 = vpop.f32.mrf.mxu0
      %v1320 = vadd.f32 %v1223, %v1319
      %v1321 = vpop.f32.mrf.mxu0
      %v1322 = vpop.f32.mrf.mxu0
      %v1323 = vadd.f32 %v1226, %v1322
      %v1324 = vpop.f32.mrf.mxu0
      %1325 = vmatprep.mubr.bf16.mxu0 0
      %1326 = vmatmul.mubr.bf16.gmra.mxu0 %v949
      %v1327 = vpop.f32.mrf.mxu0
      %v1328 = vadd.f32 %v1231, %v1327
      %v1329 = vpop.f32.mrf.mxu0
      %v1330 = vpop.f32.mrf.mxu0
      %v1331 = vadd.f32 %v1234, %v1330
      %v1332 = vpop.f32.mrf.mxu0
      %1333 = vmatprep.mubr.bf16.mxu0 0
      %1334 = vmatmul.mubr.bf16.gmra.mxu0 %v952
      %v1335 = vpop.f32.mrf.mxu0
      %v1336 = vadd.f32 %v1239, %v1335
      %v1337 = vpop.f32.mrf.mxu0
      %v1338 = vpop.f32.mrf.mxu0
      %v1339 = vadd.f32 %v1242, %v1338
      %v1340 = vpop.f32.mrf.mxu0
      %1341 = vdwg.mxu0
      %vm1342 = vcmp.ge.f32.partialorder %v1280, 0.0
      %vm1343 = vcmp.ge.f32.partialorder %v1283, 0.0
      %vm1344 = vcmp.ge.f32.partialorder %v1288, 0.0
      %vm1345 = vcmp.ge.f32.partialorder %v1291, 0.0
      %vm1346 = vcmp.ge.f32.partialorder %v1296, 0.0
      %vm1347 = vcmp.ge.f32.partialorder %v1299, 0.0
      %vm1348 = vcmp.ge.f32.partialorder %v1304, 0.0
      %vm1349 = vcmp.ge.f32.partialorder %v1307, 0.0
      %vm1350 = vcmp.ge.f32.partialorder %v1312, 0.0
      %vm1351 = vcmp.ge.f32.partialorder %v1315, 0.0
      %vm1352 = vcmp.ge.f32.partialorder %v1320, 0.0
      %vm1353 = vcmp.ge.f32.partialorder %v1323, 0.0
      %vm1354 = vcmp.ge.f32.partialorder %v1328, 0.0
      %vm1355 = vcmp.ge.f32.partialorder %v1331, 0.0
      %vm1356 = vcmp.ge.f32.partialorder %v1336, 0.0
      %vm1357 = vcmp.ge.f32.partialorder %v1339, 0.0
      %v1358 = vmul.f32 %v1280, 0.2
      %v1359 = vmul.f32 %v1283, 0.2
      %v1360 = vmul.f32 %v1288, 0.2
      %v1361 = vmul.f32 %v1291, 0.2
      %v1362 = vmul.f32 %v1296, 0.2
      %v1363 = vmul.f32 %v1299, 0.2
      %v1364 = vmul.f32 %v1304, 0.2
      %v1365 = vmul.f32 %v1307, 0.2
      %v1366 = vmul.f32 %v1312, 0.2
      %v1367 = vmul.f32 %v1315, 0.2
      %v1368 = vmul.f32 %v1320, 0.2
      %v1369 = vmul.f32 %v1323, 0.2
      %v1370 = vmul.f32 %v1328, 0.2
      %v1371 = vmul.f32 %v1331, 0.2
      %v1372 = vmul.f32 %v1336, 0.2
      %v1373 = vmul.f32 %v1339, 0.2
      %v1374 = vsel %vm1342, %v1280, %v1358
      %v1375 = vsel %vm1343, %v1283, %v1359
      %v1376 = vsel %vm1344, %v1288, %v1360
      %v1377 = vsel %vm1345, %v1291, %v1361
      %v1378 = vsel %vm1346, %v1296, %v1362
      %v1379 = vsel %vm1347, %v1299, %v1363
      %v1380 = vsel %vm1348, %v1304, %v1364
      %v1381 = vsel %vm1349, %v1307, %v1365
      %v1382 = vsel %vm1350, %v1312, %v1366
      %v1383 = vsel %vm1351, %v1315, %v1367
      %v1384 = vsel %vm1352, %v1320, %v1368
      %v1385 = vsel %vm1353, %v1323, %v1369
      %v1386 = vsel %vm1354, %v1328, %v1370
      %v1387 = vsel %vm1355, %v1331, %v1371
      %v1388 = vsel %vm1356, %v1336, %v1372
      %v1389 = vsel %vm1357, %v1339, %v1373
      %v1390 = vpack.c.bf16 %v1375, %v1374
      %v1391 = vpack.c.bf16 %v1377, %v1376
      %v1392 = vpack.c.bf16 %v1379, %v1378
      %v1393 = vpack.c.bf16 %v1381, %v1380
      %v1394 = vpack.c.bf16 %v1383, %v1382
      %v1395 = vpack.c.bf16 %v1385, %v1384
      %v1396 = vpack.c.bf16 %v1387, %v1386
      %v1397 = vpack.c.bf16 %v1389, %v1388
      %v1406 = vunpack.c.l.b16 %v1390
      %v1407 = vunpack.c.h.b16 %v1390
      %v1408 = vunpack.c.l.b16 %v1391
      %v1409 = vunpack.c.h.b16 %v1391
      %v1410 = vunpack.c.l.b16 %v1392
      %v1411 = vunpack.c.h.b16 %v1392
      %v1412 = vunpack.c.l.b16 %v1393
      %v1413 = vunpack.c.h.b16 %v1393
      %v1414 = vunpack.c.l.b16 %v1394
      %v1415 = vunpack.c.h.b16 %v1394
      %v1416 = vunpack.c.l.b16 %v1395
      %v1417 = vunpack.c.h.b16 %v1395
      %v1418 = vunpack.c.l.b16 %v1396
      %v1419 = vunpack.c.h.b16 %v1396
      %v1420 = vunpack.c.l.b16 %v1397
      %v1421 = vunpack.c.h.b16 %v1397
      %v1422 = vpack.c.b16 %v1406, %v1406
      %v1423 = vpack.c.b16 %v1407, %v1407
      %v1424 = vpack.c.b16 %v1408, %v1408
      %v1425 = vpack.c.b16 %v1409, %v1409
      %v1426 = vpack.c.b16 %v1410, %v1410
      %v1427 = vpack.c.b16 %v1411, %v1411
      %v1428 = vpack.c.b16 %v1412, %v1412
      %v1429 = vpack.c.b16 %v1413, %v1413
      %v1430 = vpack.c.b16 %v1414, %v1414
      %v1431 = vpack.c.b16 %v1415, %v1415
      %v1432 = vpack.c.b16 %v1416, %v1416
      %v1433 = vpack.c.b16 %v1417, %v1417
      %v1434 = vpack.c.b16 %v1418, %v1418
      %v1435 = vpack.c.b16 %v1419, %v1419
      %v1436 = vpack.c.b16 %v1420, %v1420
      %v1437 = vpack.c.b16 %v1421, %v1421
      %1454 = vst [vmem:[%s175] sm:$0xf] %v1422
      %1455 = vst [vmem:[%s175 + $0x4] sm:$0xf] %v1423
      %1456 = vst [vmem:[%s175 + $0x8] sm:$0xf] %v1424
      %1457 = vst [vmem:[%s175 + $0xc] sm:$0xf] %v1425
      %1458 = vst [vmem:[%s175 + $0x10] sm:$0xf] %v1426
      %1459 = vst [vmem:[%s175 + $0x14] sm:$0xf] %v1427
      %1460 = vst [vmem:[%s175 + $0x18] sm:$0xf] %v1428
      %1461 = vst [vmem:[%s175 + $0x1c] sm:$0xf] %v1429
      %1462 = vst [vmem:[%s175 + $0x20] sm:$0xf] %v1430
      %1463 = vst [vmem:[%s175 + $0x24] sm:$0xf] %v1431
      %1464 = vst [vmem:[%s175 + $0x28] sm:$0xf] %v1432
      %1465 = vst [vmem:[%s175 + $0x2c] sm:$0xf] %v1433
      %1466 = vst [vmem:[%s175 + $0x30] sm:$0xf] %v1434
      %1467 = vst [vmem:[%s175 + $0x34] sm:$0xf] %v1435
      %1468 = vst [vmem:[%s175 + $0x38] sm:$0xf] %v1436
      %1469 = vst [vmem:[%s175 + $0x3c] sm:$0xf] %v1437
      %s1470 = smul.u32 16, %s14
      %p1471 = scmp.lt.s32.totalorder %s1470, 63
      %s1472 = scalar_select %p1471, %s1470, 63
      %s1473 = smul.addr %s1472, 4
      %s1474 = scalar_lea.vmem %s3, %s1473
      // Predicated region
      $region33: #{_lambda_.9} parent=31 // pred_check
        %p1475 = pneg %p100
      $region34: #{_lambda_.9} parent=31 // pred_check_branch
        %1477 = sbr.rel (%p1475) target = $region36
      $region35: #{_lambda_.9} parent=31 // pred_region
        %s1478 = smul.u32 16, %s14
      $region36: #{_lambda_.9} parent=31 // pred_fallthru
        _
    $region32: #{_lambda_.9} parent=5 // pred_fallthru
      _
    %p1479 = scmp.le.s32.totalorder 2, %s9
    // Predicated region
    $region37: #{_lambda_.9} parent=5 // pred_check
      %p1480 = pneg %p1479
    $region38: #{_lambda_.9} parent=5 // pred_check_branch
      %1482 = sbr.rel (%p1480) target = $region40
    $region39: #{_lambda_.9} parent=5 // pred_region
      %s1483 = ssub.s32 %s9, 2
      // Predicated region
      $region41: #{_lambda_.9} parent=39 // pred_check
        %p1484 = pneg %p106
      $region42: #{_lambda_.9} parent=39 // pred_check_branch
        %1486 = sbr.rel (%p1484) target = $region44
      $region43: #{_lambda_.9} parent=39 // pred_region
        %s1487 = smul.u32 16, %s15
        %p1488 = scmp.lt.s32.totalorder %s1487, 63
        %s1489 = scalar_select %p1488, %s1487, 63
        %s1490 = smul.addr %s1489, 4
        %s1491 = scalar_lea.vmem %s3, %s1490
      $region44: #{_lambda_.9} parent=39 // pred_fallthru
        _
    $region40: #{_lambda_.9} parent=5 // pred_fallthru
      _
  $region6: #{_lambda_.9} parent=0 // loop_footer
    %s13 = sadd.s32 1, %s9
  $region7: #{_lambda_.9} parent=0 // loop_footer_branch
    %8 = sbr.rel target = $region3
  $region8: #{_lambda_.9} parent=0 // loop_exit
    _

</llo_original>
